<compile_context>
chip_gen: v5e
topology: v5e:2x2
jax: 0.10.0
libtpu: 0.0.40
codegen_flags: <defaults>
</compile_context>

<pallas_src>
import jax
import jax.numpy as jnp
from jax.experimental import pallas as pl
from jax.experimental.pallas import tpu as pltpu


# ----------------------------------------------------------------------------
# helpers
# ----------------------------------------------------------------------------
def _bcast(shape):
    """Whole-array block whose index is the same for every grid step."""
    nd = len(shape)
    return pl.BlockSpec(shape, lambda b: (0,) * nd)


# ----------------------------------------------------------------------------
# Kernel 1: fused image backbone (one grid step per image)
#   padded NHWC image -> in-VMEM im2col -> one conv matmul -> 2x2 maxpool
#   -> +bias, ReLU -> image fc -> tanh -> vI rows (S, d)
# ----------------------------------------------------------------------------
def _make_backbone_kernel(H, W, Cin, Cf):
    Ho, Wo = H // 2, W // 2
    S = Ho * Wo

    def kernel(x_ref, cw_ref, cb_ref, fw_ref, fb_ref, o_ref):
        xp = x_ref[...]                                     # (H+2, W+2, Cin)
        # In-VMEM im2col: 9 shifted views, concatenated along channels.
        cols = [xp[kh:kh + H, kw:kw + W, :].reshape(H * W, Cin)
                for kh in range(3) for kw in range(3)]
        patches = jnp.concatenate(cols, axis=-1)            # (H*W, 9*Cin)
        # Single fused conv matmul (one MXU stream).
        conv = jnp.dot(patches, cw_ref[...],
                       preferred_element_type=jnp.float32)  # (H*W, Cf)
        # 2x2 max-pool via leading/sublane reshapes only (lane dim stays Cf).
        c4 = conv.reshape(H, Wo, 2, Cf)
        wmax = jnp.maximum(c4[:, :, 0, :], c4[:, :, 1, :])  # (H, Wo, Cf)
        h4 = wmax.reshape(Ho, 2, Wo, Cf)
        pooled = jnp.maximum(h4[:, 0], h4[:, 1]).reshape(S, Cf)
        # bias + ReLU once after the max: max(ReLU(x+b)) == ReLU(max(x)+b).
        pooled = jnp.maximum(pooled + cb_ref[...], 0.0)
        vI = jnp.tanh(jnp.dot(pooled, fw_ref[...],
                              preferred_element_type=jnp.float32) + fb_ref[...])
        o_ref[...] = vI.astype(o_ref.dtype)

    return kernel


def image_backbone(images_nchw, conv_w, conv_b, fc_w, fc_b):
    x = jnp.transpose(images_nchw, (0, 2, 3, 1))            # NCHW -> NHWC
    B, H, W, Cin = x.shape
    Cf = conv_w.shape[1]
    d = fc_w.shape[1]
    S = (H // 2) * (W // 2)
    xp = jnp.pad(x, ((0, 0), (1, 1), (1, 1), (0, 0)))       # conv padding=1
    # TODO(synk): at real VGG dims tile spatially as well (rows of pooled
    #             positions) and cast taps/weights to bf16 for v6e/v7x.
    return pl.pallas_call(
        _make_backbone_kernel(H, W, Cin, Cf),
        out_shape=jax.ShapeDtypeStruct((B, S, d), jnp.float32),
        grid=(B,),
        in_specs=[
            pl.BlockSpec((None, H + 2, W + 2, Cin), lambda b: (b, 0, 0, 0)),
            _bcast(conv_w.shape), _bcast(conv_b.shape),
            _bcast(fc_w.shape), _bcast(fc_b.shape),
        ],
        out_specs=pl.BlockSpec((None, S, d), lambda b: (b, 0, 0)),
        compiler_params=pltpu.CompilerParams(
            dimension_semantics=("parallel",)),
    )(xp, conv_w, conv_b, fc_w, fc_b)


# ----------------------------------------------------------------------------
# Kernel 2: fused head — question LSTM (fused gates) + weight-tied attention
#           stack + classifier.  Grid is tiled over batch.
# ----------------------------------------------------------------------------
def _make_head_kernel(num_layers, T, hdim):
    def kernel(q_ref, wih_ref, whh_ref, lb_ref, h0_ref, c0_ref, vI_ref,
               wI_ref, bI_ref, wQ_ref, bQ_ref, wA_ref, bA_ref,
               mw_ref, mb_ref, o_ref):
        # ------------------ question LSTM ------------------
        q = q_ref[...]                                      # (T, TB, I)
        TB, idim = q.shape[1], q.shape[2]
        # Batched input projection (one matmul), hoisted out of the recurrence.
        xproj = (jnp.dot(q.reshape(T * TB, idim), wih_ref[...],
                         preferred_element_type=jnp.float32)
                 + lb_ref[...]).reshape(T, TB, 4 * hdim)
        whh = whh_ref[...]
        h = h0_ref[...]
        c = c0_ref[...]
        for t in range(T):                                  # fully unrolled
            gates = xproj[t] + jnp.dot(h, whh,
                                       preferred_element_type=jnp.float32)
            # TODO(synk): at real dims hdim%128==0 so these slices are
            #             lane-tile aligned.
            i_g = jax.nn.sigmoid(gates[:, 0 * hdim:1 * hdim])
            f_g = jax.nn.sigmoid(gates[:, 1 * hdim:2 * hdim])
            g_g = jnp.tanh(gates[:, 2 * hdim:3 * hdim])
            o_g = jax.nn.sigmoid(gates[:, 3 * hdim:4 * hdim])
            c = f_g * c + i_g * g_g
            h = o_g * jnp.tanh(c)
        vQ = h                                              # (TB, hdim == d)

        # ------------------ stacked attention ------------------
        vI = vI_ref[...]                                    # (TB, S, d)
        S, d = vI.shape[1], vI.shape[2]
        k = wI_ref.shape[1]
        # image_ff shared by the weight-tied layers -> one big matmul, hoisted.
        hI = (jnp.dot(vI.reshape(TB * S, d), wI_ref[...],
                      preferred_element_type=jnp.float32)
              + bI_ref[...]).reshape(TB, S, k)
        # broadcasts hoisted out of the layer loop (JAX does not CSE them).
        wA_b = jnp.broadcast_to(wA_ref[...].reshape(1, 1, k), (TB, S, k))
        bA = bA_ref[...]                                    # (1, 1)
        wQ = wQ_ref[...]
        bQ = bQ_ref[...]
        for _ in range(num_layers):                         # weight-tied stack
            hQ = jnp.dot(vQ, wQ, preferred_element_type=jnp.float32) + bQ
            hA = jnp.tanh(hI + hQ[:, None, :])              # (TB, S, k)
            # attention_ff as VPU multiply + lane reduce -> lane-dense (TB, S)
            logits = jnp.sum(hA * wA_b, axis=-1) + bA       # (TB, S)
            m = jnp.max(logits, axis=-1, keepdims=True)
            e = jnp.exp(logits - m)
            p = e * pl.reciprocal(jnp.sum(e, axis=-1, keepdims=True),
                                  approx=True)              # (TB, S)
            # weighted sum over regions as ONE batched contraction
            vI_new = jnp.einsum('bqs,bsd->bqd', p[:, None, :], vI,
                                preferred_element_type=jnp.float32)[:, 0, :]
            vQ = vI_new + vQ                                # residual

        # ------------------ classifier ------------------
        # Dropout == identity at inference; mlp weights lane-padded to 128.
        o_ref[...] = (jnp.dot(vQ, mw_ref[...],
                              preferred_element_type=jnp.float32)
                      + mb_ref[...]).astype(o_ref.dtype)

    return kernel


def question_attention_head(questions, vI, params, num_layers):
    B, T, idim = questions.shape
    S, d = vI.shape[1], vI.shape[2]
    hdim = params["h0"].shape[1]
    out_dim = params["mlp_w"].shape[1]

    q_tbi = jnp.transpose(questions, (1, 0, 2))             # time-major (T,B,I)

    # Lane-dense classifier output: pad out_dim up to a multiple of 128 so the
    # output block stores unmasked; slice back below.
    OP = ((out_dim + 127) // 128) * 128
    mw = jnp.pad(params["mlp_w"], ((0, 0), (0, OP - out_dim)))
    mb = jnp.pad(params["mlp_b"], ((0, 0), (0, OP - out_dim)))

    # TODO(synk): at real dims pick TB (multiple of 8, TB*S*d under VMEM) and
    #             run grid=(B//TB,) so v7x's 2 TensorCores both get work.
    TB = B
    nb = B // TB

    out = pl.pallas_call(
        _make_head_kernel(num_layers, T, hdim),
        out_shape=jax.ShapeDtypeStruct((B, OP), jnp.float32),
        grid=(nb,),
        in_specs=[
            pl.BlockSpec((T, TB, idim), lambda b: (0, b, 0)),
            _bcast(params["lstm_wih"].shape),
            _bcast(params["lstm_whh"].shape),
            _bcast(params["lstm_b"].shape),
            pl.BlockSpec((TB, hdim), lambda b: (b, 0)),
            pl.BlockSpec((TB, hdim), lambda b: (b, 0)),
            pl.BlockSpec((TB, S, d), lambda b: (b, 0, 0)),
            _bcast(params["att_wI"].shape), _bcast(params["att_bI"].shape),
            _bcast(params["att_wQ"].shape), _bcast(params["att_bQ"].shape),
            _bcast(params["att_wA"].shape), _bcast(params["att_bA"].shape),
            _bcast(mw.shape), _bcast(mb.shape),
        ],
        out_specs=pl.BlockSpec((TB, OP), lambda b: (b, 0)),
        compiler_params=pltpu.CompilerParams(
            dimension_semantics=("parallel",)),
    )(q_tbi, params["lstm_wih"], params["lstm_whh"], params["lstm_b"],
      params["h0"], params["c0"], vI,
      params["att_wI"], params["att_bI"], params["att_wQ"], params["att_bQ"],
      params["att_wA"], params["att_bA"], mw, mb)
    return out[:, :out_dim]


# ----------------------------------------------------------------------------
# Full forward pass: 2 pallas_call launches.
# ----------------------------------------------------------------------------
def stacked_attention_vqa_forward(images, questions, params,
                                  num_attention_layers=1):
    vI = image_backbone(images, params["conv_w"], params["conv_b"],
                        params["img_fc_w"], params["img_fc_b"])   # (B, S, d)
    # nn.ModuleList([Attention(...)] * N) shares ONE instance -> weight-tied.
    answer = question_attention_head(questions, vI, params,
                                     num_attention_layers)
    return answer


# ----------------------------------------------------------------------------
# deterministic parameter construction
# ----------------------------------------------------------------------------
def make_params(key, cin=3, cf=8, d=32, k=16, hdim=32, out=10, bsz=2):
    ks = jax.random.split(key, 16)
    r = lambda kk, shape, sc=0.1: (sc * jax.random.normal(kk, shape)).astype(jnp.float32)
    return {
        "conv_w":   r(ks[0], (9 * cin, cf)),
        "conv_b":   r(ks[1], (1, cf)),
        "img_fc_w": r(ks[2], (cf, d)),
        "img_fc_b": r(ks[3], (1, d)),
        # fused-gate LSTM weights, PyTorch gate order (i,f,g,o) along columns;
        # lstm_b corresponds to b_ih + b_hh already folded.
        "lstm_wih": r(ks[4], (k, 4 * hdim)),
        "lstm_whh": r(ks[5], (hdim, 4 * hdim)),
        "lstm_b":   r(ks[6], (1, 4 * hdim)),
        "h0":       r(ks[7], (bsz, hdim), 1.0),
        "c0":       r(ks[8], (bsz, hdim), 1.0),
        "att_wI":   r(ks[9], (d, k)),
        "att_bI":   r(ks[10], (1, k)),
        "att_wQ":   r(ks[11], (d, k)),
        "att_bQ":   r(ks[12], (1, k)),
        "att_wA":   r(ks[13], (1, k)),          # attention_ff weight as a row
        "att_bA":   r(ks[14], (1, 1)),
        "mlp_w":    r(ks[15], (d, out)),
        "mlp_b":    jnp.zeros((1, out), jnp.float32),
    }


if __name__ == "__main__":
    key = jax.random.PRNGKey(0)
    k_img, k_q, k_p = jax.random.split(key, 3)

    B, T = 2, 8
    images = jax.random.normal(k_img, (B, 3, 16, 16), dtype=jnp.float32)   # NCHW like PyTorch
    questions = jax.random.normal(k_q, (B, T, 16), dtype=jnp.float32)      # (B, T, word_emb)

    params = make_params(k_p, bsz=B)

    fwd = jax.jit(lambda im, q: stacked_attention_vqa_forward(
        im, q, params, num_attention_layers=1))
    answer = fwd(images, questions)
    jax.block_until_ready(answer)

    assert answer.shape == (B, 10)
    assert bool(jnp.all(jnp.isfinite(answer)))
    print("KERNEL_OK")
</pallas_src>

<mosaic_0001>
module attributes {stable_mosaic.version = 11 : i64} {
  func.func @kernel(%arg0: i32, %arg1: memref<1x18x18x3xf32, #tpu.memory_space<vmem>>, %arg2: memref<27x8xf32, #tpu.memory_space<vmem>>, %arg3: memref<1x8xf32, #tpu.memory_space<vmem>>, %arg4: memref<8x32xf32, #tpu.memory_space<vmem>>, %arg5: memref<1x32xf32, #tpu.memory_space<vmem>>, %arg6: memref<1x64x32xf32, #tpu.memory_space<vmem>>) attributes {dimension_semantics = [#tpu.dimension_semantics<parallel>], iteration_bounds = array<i64: 2>, scalar_prefetch = 0 : i64, scratch_operands = 0 : i64, tpu.core_type = #tpu.core_type<tc>, window_params = [{transform_indices = @transform_0, window_bounds = array<i64: 1, 18, 18, 3>}, {pipeline_mode = #tpu.pipeline_mode<synchronous>, transform_indices = @transform_1, window_bounds = array<i64: 27, 8>}, {pipeline_mode = #tpu.pipeline_mode<synchronous>, transform_indices = @transform_2, window_bounds = array<i64: 1, 8>}, {pipeline_mode = #tpu.pipeline_mode<synchronous>, transform_indices = @transform_3, window_bounds = array<i64: 8, 32>}, {pipeline_mode = #tpu.pipeline_mode<synchronous>, transform_indices = @transform_4, window_bounds = array<i64: 1, 32>}, {transform_indices = @transform_5, window_bounds = array<i64: 1, 64, 32>}]} {
    %c0 = arith.constant 0 : index
    %c0_0 = arith.constant 0 : index
    %c0_1 = arith.constant 0 : index
    %c0_2 = arith.constant 0 : index
    %0 = vector.load %arg1[%c0, %c0_0, %c0_1, %c0_2] : memref<1x18x18x3xf32, #tpu.memory_space<vmem>>, vector<1x18x18x3xf32>
    %1 = vector.shape_cast %0 : vector<1x18x18x3xf32> to vector<18x18x3xf32>
    %2 = vector.extract_strided_slice %1 {offsets = [0, 0, 0], sizes = [16, 16, 3], strides = [1, 1, 1]} : vector<18x18x3xf32> to vector<16x16x3xf32>
    %3 = vector.shape_cast %2 : vector<16x16x3xf32> to vector<256x3xf32>
    %4 = vector.extract_strided_slice %1 {offsets = [0, 1, 0], sizes = [16, 16, 3], strides = [1, 1, 1]} : vector<18x18x3xf32> to vector<16x16x3xf32>
    %5 = vector.shape_cast %4 : vector<16x16x3xf32> to vector<256x3xf32>
    %6 = vector.extract_strided_slice %1 {offsets = [0, 2, 0], sizes = [16, 16, 3], strides = [1, 1, 1]} : vector<18x18x3xf32> to vector<16x16x3xf32>
    %7 = vector.shape_cast %6 : vector<16x16x3xf32> to vector<256x3xf32>
    %8 = vector.extract_strided_slice %1 {offsets = [1, 0, 0], sizes = [16, 16, 3], strides = [1, 1, 1]} : vector<18x18x3xf32> to vector<16x16x3xf32>
    %9 = vector.shape_cast %8 : vector<16x16x3xf32> to vector<256x3xf32>
    %10 = vector.extract_strided_slice %1 {offsets = [1, 1, 0], sizes = [16, 16, 3], strides = [1, 1, 1]} : vector<18x18x3xf32> to vector<16x16x3xf32>
    %11 = vector.shape_cast %10 : vector<16x16x3xf32> to vector<256x3xf32>
    %12 = vector.extract_strided_slice %1 {offsets = [1, 2, 0], sizes = [16, 16, 3], strides = [1, 1, 1]} : vector<18x18x3xf32> to vector<16x16x3xf32>
    %13 = vector.shape_cast %12 : vector<16x16x3xf32> to vector<256x3xf32>
    %14 = vector.extract_strided_slice %1 {offsets = [2, 0, 0], sizes = [16, 16, 3], strides = [1, 1, 1]} : vector<18x18x3xf32> to vector<16x16x3xf32>
    %15 = vector.shape_cast %14 : vector<16x16x3xf32> to vector<256x3xf32>
    %16 = vector.extract_strided_slice %1 {offsets = [2, 1, 0], sizes = [16, 16, 3], strides = [1, 1, 1]} : vector<18x18x3xf32> to vector<16x16x3xf32>
    %17 = vector.shape_cast %16 : vector<16x16x3xf32> to vector<256x3xf32>
    %18 = vector.extract_strided_slice %1 {offsets = [2, 2, 0], sizes = [16, 16, 3], strides = [1, 1, 1]} : vector<18x18x3xf32> to vector<16x16x3xf32>
    %19 = vector.shape_cast %18 : vector<16x16x3xf32> to vector<256x3xf32>
    %20 = tpu.concatenate %3, %5, %7, %9, %11, %13, %15, %17, %19 in 1 : vector<256x3xf32>, vector<256x3xf32>, vector<256x3xf32>, vector<256x3xf32>, vector<256x3xf32>, vector<256x3xf32>, vector<256x3xf32>, vector<256x3xf32>, vector<256x3xf32> -> vector<256x27xf32>
    %c0_3 = arith.constant 0 : index
    %c0_4 = arith.constant 0 : index
    %21 = vector.load %arg2[%c0_3, %c0_4] : memref<27x8xf32, #tpu.memory_space<vmem>>, vector<27x8xf32>
    %cst = arith.constant dense<0.000000e+00> : vector<256x8xf32>
    %22 = tpu.matmul %20, %21, %cst {dimension_numbers = #tpu.dot_dimension_numbers<[1], [0], [0], [1], [0, 0, 1, 1], [], []>} : vector<256x27xf32>, vector<27x8xf32>, vector<256x8xf32> -> vector<256x8xf32>
    %23 = vector.shape_cast %22 : vector<256x8xf32> to vector<16x8x2x8xf32>
    %24 = vector.extract_strided_slice %23 {offsets = [0, 0, 0, 0], sizes = [16, 8, 1, 8], strides = [1, 1, 1, 1]} : vector<16x8x2x8xf32> to vector<16x8x1x8xf32>
    %25 = vector.shape_cast %24 : vector<16x8x1x8xf32> to vector<16x8x8xf32>
    %26 = vector.extract_strided_slice %23 {offsets = [0, 0, 1, 0], sizes = [16, 8, 1, 8], strides = [1, 1, 1, 1]} : vector<16x8x2x8xf32> to vector<16x8x1x8xf32>
    %27 = vector.shape_cast %26 : vector<16x8x1x8xf32> to vector<16x8x8xf32>
    %28 = arith.maximumf %25, %27 : vector<16x8x8xf32>
    %29 = vector.shape_cast %28 : vector<16x8x8xf32> to vector<8x2x8x8xf32>
    %30 = vector.extract_strided_slice %29 {offsets = [0, 0, 0, 0], sizes = [8, 1, 8, 8], strides = [1, 1, 1, 1]} : vector<8x2x8x8xf32> to vector<8x1x8x8xf32>
    %31 = vector.shape_cast %30 : vector<8x1x8x8xf32> to vector<8x8x8xf32>
    %32 = vector.extract_strided_slice %29 {offsets = [0, 1, 0, 0], sizes = [8, 1, 8, 8], strides = [1, 1, 1, 1]} : vector<8x2x8x8xf32> to vector<8x1x8x8xf32>
    %33 = vector.shape_cast %32 : vector<8x1x8x8xf32> to vector<8x8x8xf32>
    %34 = arith.maximumf %31, %33 : vector<8x8x8xf32>
    %35 = vector.shape_cast %34 : vector<8x8x8xf32> to vector<64x8xf32>
    %c0_5 = arith.constant 0 : index
    %c0_6 = arith.constant 0 : index
    %36 = vector.load %arg3[%c0_5, %c0_6] : memref<1x8xf32, #tpu.memory_space<vmem>>, vector<1x8xf32>
    %37 = vector.broadcast %36 : vector<1x8xf32> to vector<64x8xf32>
    %38 = arith.addf %35, %37 : vector<64x8xf32>
    %cst_7 = arith.constant 0.000000e+00 : f32
    %39 = vector.broadcast %cst_7 : f32 to vector<64x8xf32>
    %40 = arith.maximumf %38, %39 : vector<64x8xf32>
    %c0_8 = arith.constant 0 : index
    %c0_9 = arith.constant 0 : index
    %41 = vector.load %arg4[%c0_8, %c0_9] : memref<8x32xf32, #tpu.memory_space<vmem>>, vector<8x32xf32>
    %cst_10 = arith.constant dense<0.000000e+00> : vector<64x32xf32>
    %42 = tpu.matmul %40, %41, %cst_10 {dimension_numbers = #tpu.dot_dimension_numbers<[1], [0], [0], [1], [0, 0, 1, 1], [], []>} : vector<64x8xf32>, vector<8x32xf32>, vector<64x32xf32> -> vector<64x32xf32>
    %c0_11 = arith.constant 0 : index
    %c0_12 = arith.constant 0 : index
    %43 = vector.load %arg5[%c0_11, %c0_12] : memref<1x32xf32, #tpu.memory_space<vmem>>, vector<1x32xf32>
    %44 = vector.broadcast %43 : vector<1x32xf32> to vector<64x32xf32>
    %45 = arith.addf %42, %44 : vector<64x32xf32>
    %46 = math.tanh %45 : vector<64x32xf32>
    %c0_13 = arith.constant 0 : index
    %c0_14 = arith.constant 0 : index
    %c0_15 = arith.constant 0 : index
    %47 = vector.load %arg6[%c0_13, %c0_14, %c0_15] : memref<1x64x32xf32, #tpu.memory_space<vmem>>, vector<1x64x32xf32>
    %48 = vector.shape_cast %47 : vector<1x64x32xf32> to vector<64x32xf32>
    %49 = vector.shape_cast %46 : vector<64x32xf32> to vector<1x64x32xf32>
    tpu.vector_store %arg6[%c0_13, %c0_14, %c0_15], %49 {strides = array<i32>} : memref<1x64x32xf32, #tpu.memory_space<vmem>>, vector<1x64x32xf32>,
    return
  }
  func.func @transform_0(%arg0: i32) -> (i32, i32, i32, i32) {
    %c0_i32 = arith.constant 0 : i32
    %c0_i32_0 = arith.constant 0 : i32
    %c0_i32_1 = arith.constant 0 : i32
    %c0_i32_2 = arith.constant 0 : i32
    return %arg0, %c0_i32, %c0_i32_0, %c0_i32_1 : i32, i32, i32, i32
  }
  func.func @transform_1(%arg0: i32) -> (i32, i32) {
    %c0_i32 = arith.constant 0 : i32
    %c0_i32_0 = arith.constant 0 : i32
    %c0_i32_1 = arith.constant 0 : i32
    return %c0_i32, %c0_i32_0 : i32, i32
  }
  func.func @transform_2(%arg0: i32) -> (i32, i32) {
    %c0_i32 = arith.constant 0 : i32
    %c0_i32_0 = arith.constant 0 : i32
    %c0_i32_1 = arith.constant 0 : i32
    return %c0_i32, %c0_i32_0 : i32, i32
  }
  func.func @transform_3(%arg0: i32) -> (i32, i32) {
    %c0_i32 = arith.constant 0 : i32
    %c0_i32_0 = arith.constant 0 : i32
    %c0_i32_1 = arith.constant 0 : i32
    return %c0_i32, %c0_i32_0 : i32, i32
  }
  func.func @transform_4(%arg0: i32) -> (i32, i32) {
    %c0_i32 = arith.constant 0 : i32
    %c0_i32_0 = arith.constant 0 : i32
    %c0_i32_1 = arith.constant 0 : i32
    return %c0_i32, %c0_i32_0 : i32, i32
  }
  func.func @transform_5(%arg0: i32) -> (i32, i32, i32) {
    %c0_i32 = arith.constant 0 : i32
    %c0_i32_0 = arith.constant 0 : i32
    %c0_i32_1 = arith.constant 0 : i32
    return %arg0, %c0_i32, %c0_i32_0 : i32, i32, i32
  }
}

module attributes {stable_mosaic.version = 11 : i64} {
  func.func @kernel(%arg0: i32, %arg1: memref<8x2x16xf32, #tpu.memory_space<vmem>>, %arg2: memref<16x128xf32, #tpu.memory_space<vmem>>, %arg3: memref<32x128xf32, #tpu.memory_space<vmem>>, %arg4: memref<1x128xf32, #tpu.memory_space<vmem>>, %arg5: memref<2x32xf32, #tpu.memory_space<vmem>>, %arg6: memref<2x32xf32, #tpu.memory_space<vmem>>, %arg7: memref<2x64x32xf32, #tpu.memory_space<vmem>>, %arg8: memref<32x16xf32, #tpu.memory_space<vmem>>, %arg9: memref<1x16xf32, #tpu.memory_space<vmem>>, %arg10: memref<32x16xf32, #tpu.memory_space<vmem>>, %arg11: memref<1x16xf32, #tpu.memory_space<vmem>>, %arg12: memref<1x16xf32, #tpu.memory_space<vmem>>, %arg13: memref<1x1xf32, #tpu.memory_space<vmem>>, %arg14: memref<32x128xf32, #tpu.memory_space<vmem>>, %arg15: memref<1x128xf32, #tpu.memory_space<vmem>>, %arg16: memref<2x128xf32, #tpu.memory_space<vmem>>) attributes {dimension_semantics = [#tpu.dimension_semantics<parallel>], iteration_bounds = array<i64: 1>, scalar_prefetch = 0 : i64, scratch_operands = 0 : i64, tpu.core_type = #tpu.core_type<tc>, window_params = [{transform_indices = @transform_0, window_bounds = array<i64: 8, 2, 16>}, {pipeline_mode = #tpu.pipeline_mode<synchronous>, transform_indices = @transform_1, window_bounds = array<i64: 16, 128>}, {pipeline_mode = #tpu.pipeline_mode<synchronous>, transform_indices = @transform_2, window_bounds = array<i64: 32, 128>}, {pipeline_mode = #tpu.pipeline_mode<synchronous>, transform_indices = @transform_3, window_bounds = array<i64: 1, 128>}, {transform_indices = @transform_4, window_bounds = array<i64: 2, 32>}, {transform_indices = @transform_5, window_bounds = array<i64: 2, 32>}, {transform_indices = @transform_6, window_bounds = array<i64: 2, 64, 32>}, {pipeline_mode = #tpu.pipeline_mode<synchronous>, transform_indices = @transform_7, window_bounds = array<i64: 32, 16>}, {pipeline_mode = #tpu.pipeline_mode<synchronous>, transform_indices = @transform_8, window_bounds = array<i64: 1, 16>}, {pipeline_mode = #tpu.pipeline_mode<synchronous>, transform_indices = @transform_9, window_bounds = array<i64: 32, 16>}, {pipeline_mode = #tpu.pipeline_mode<synchronous>, transform_indices = @transform_10, window_bounds = array<i64: 1, 16>}, {pipeline_mode = #tpu.pipeline_mode<synchronous>, transform_indices = @transform_11, window_bounds = array<i64: 1, 16>}, {pipeline_mode = #tpu.pipeline_mode<synchronous>, transform_indices = @transform_12, window_bounds = array<i64: 1, 1>}, {pipeline_mode = #tpu.pipeline_mode<synchronous>, transform_indices = @transform_13, window_bounds = array<i64: 32, 128>}, {pipeline_mode = #tpu.pipeline_mode<synchronous>, transform_indices = @transform_14, window_bounds = array<i64: 1, 128>}, {transform_indices = @transform_15, window_bounds = array<i64: 2, 128>}]} {
    %c0 = arith.constant 0 : index
    %c0_0 = arith.constant 0 : index
    %c0_1 = arith.constant 0 : index
    %0 = vector.load %arg1[%c0, %c0_0, %c0_1] : memref<8x2x16xf32, #tpu.memory_space<vmem>>, vector<8x2x16xf32>
    %1 = vector.shape_cast %0 : vector<8x2x16xf32> to vector<16x16xf32>
    %c0_2 = arith.constant 0 : index
    %c0_3 = arith.constant 0 : index
    %2 = vector.load %arg2[%c0_2, %c0_3] : memref<16x128xf32, #tpu.memory_space<vmem>>, vector<16x128xf32>
    %cst = arith.constant dense<0.000000e+00> : vector<16x128xf32>
    %3 = tpu.matmul %1, %2, %cst {dimension_numbers = #tpu.dot_dimension_numbers<[1], [0], [0], [1], [0, 0, 1, 1], [], []>} : vector<16x16xf32>, vector<16x128xf32>, vector<16x128xf32> -> vector<16x128xf32>
    %c0_4 = arith.constant 0 : index
    %c0_5 = arith.constant 0 : index
    %4 = vector.load %arg4[%c0_4, %c0_5] : memref<1x128xf32, #tpu.memory_space<vmem>>, vector<1x128xf32>
    %5 = vector.broadcast %4 : vector<1x128xf32> to vector<16x128xf32>
    %6 = arith.addf %3, %5 : vector<16x128xf32>
    %7 = vector.shape_cast %6 : vector<16x128xf32> to vector<8x2x128xf32>
    %c0_6 = arith.constant 0 : index
    %c0_7 = arith.constant 0 : index
    %8 = vector.load %arg3[%c0_6, %c0_7] : memref<32x128xf32, #tpu.memory_space<vmem>>, vector<32x128xf32>
    %c0_8 = arith.constant 0 : index
    %c0_9 = arith.constant 0 : index
    %9 = vector.load %arg5[%c0_8, %c0_9] : memref<2x32xf32, #tpu.memory_space<vmem>>, vector<2x32xf32>
    %c0_10 = arith.constant 0 : index
    %c0_11 = arith.constant 0 : index
    %10 = vector.load %arg6[%c0_10, %c0_11] : memref<2x32xf32, #tpu.memory_space<vmem>>, vector<2x32xf32>
    %11 = vector.extract_strided_slice %7 {offsets = [0, 0, 0], sizes = [1, 2, 128], strides = [1, 1, 1]} : vector<8x2x128xf32> to vector<1x2x128xf32>
    %12 = vector.shape_cast %11 : vector<1x2x128xf32> to vector<2x128xf32>
    %cst_12 = arith.constant dense<0.000000e+00> : vector<2x128xf32>
    %13 = tpu.matmul %9, %8, %cst_12 {dimension_numbers = #tpu.dot_dimension_numbers<[1], [0], [0], [1], [0, 0, 1, 1], [], []>} : vector<2x32xf32>, vector<32x128xf32>, vector<2x128xf32> -> vector<2x128xf32>
    %14 = arith.addf %12, %13 : vector<2x128xf32>
    %15 = vector.extract_strided_slice %14 {offsets = [0, 0], sizes = [2, 32], strides = [1, 1]} : vector<2x128xf32> to vector<2x32xf32>
    %16 = arith.negf %15 : vector<2x32xf32>
    %17 = math.exp %16 : vector<2x32xf32>
    %cst_13 = arith.constant 1.000000e+00 : f32
    %18 = vector.broadcast %cst_13 : f32 to vector<2x32xf32>
    %19 = arith.addf %18, %17 : vector<2x32xf32>
    %20 = arith.divf %18, %19 : vector<2x32xf32>
    %21 = vector.extract_strided_slice %14 {offsets = [0, 32], sizes = [2, 32], strides = [1, 1]} : vector<2x128xf32> to vector<2x32xf32>
    %22 = arith.negf %21 : vector<2x32xf32>
    %23 = math.exp %22 : vector<2x32xf32>
    %cst_14 = arith.constant 1.000000e+00 : f32
    %24 = vector.broadcast %cst_14 : f32 to vector<2x32xf32>
    %25 = arith.addf %24, %23 : vector<2x32xf32>
    %26 = arith.divf %24, %25 : vector<2x32xf32>
    %27 = vector.extract_strided_slice %14 {offsets = [0, 64], sizes = [2, 32], strides = [1, 1]} : vector<2x128xf32> to vector<2x32xf32>
    %28 = math.tanh %27 : vector<2x32xf32>
    %29 = vector.extract_strided_slice %14 {offsets = [0, 96], sizes = [2, 32], strides = [1, 1]} : vector<2x128xf32> to vector<2x32xf32>
    %30 = arith.negf %29 : vector<2x32xf32>
    %31 = math.exp %30 : vector<2x32xf32>
    %cst_15 = arith.constant 1.000000e+00 : f32
    %32 = vector.broadcast %cst_15 : f32 to vector<2x32xf32>
    %33 = arith.addf %32, %31 : vector<2x32xf32>
    %34 = arith.divf %32, %33 : vector<2x32xf32>
    %35 = arith.mulf %26, %10 : vector<2x32xf32>
    %36 = arith.mulf %20, %28 : vector<2x32xf32>
    %37 = arith.addf %35, %36 : vector<2x32xf32>
    %38 = math.tanh %37 : vector<2x32xf32>
    %39 = arith.mulf %34, %38 : vector<2x32xf32>
    %40 = vector.extract_strided_slice %7 {offsets = [1, 0, 0], sizes = [1, 2, 128], strides = [1, 1, 1]} : vector<8x2x128xf32> to vector<1x2x128xf32>
    %41 = vector.shape_cast %40 : vector<1x2x128xf32> to vector<2x128xf32>
    %cst_16 = arith.constant dense<0.000000e+00> : vector<2x128xf32>
    %42 = tpu.matmul %39, %8, %cst_16 {dimension_numbers = #tpu.dot_dimension_numbers<[1], [0], [0], [1], [0, 0, 1, 1], [], []>} : vector<2x32xf32>, vector<32x128xf32>, vector<2x128xf32> -> vector<2x128xf32>
    %43 = arith.addf %41, %42 : vector<2x128xf32>
    %44 = vector.extract_strided_slice %43 {offsets = [0, 0], sizes = [2, 32], strides = [1, 1]} : vector<2x128xf32> to vector<2x32xf32>
    %45 = arith.negf %44 : vector<2x32xf32>
    %46 = math.exp %45 : vector<2x32xf32>
    %cst_17 = arith.constant 1.000000e+00 : f32
    %47 = vector.broadcast %cst_17 : f32 to vector<2x32xf32>
    %48 = arith.addf %47, %46 : vector<2x32xf32>
    %49 = arith.divf %47, %48 : vector<2x32xf32>
    %50 = vector.extract_strided_slice %43 {offsets = [0, 32], sizes = [2, 32], strides = [1, 1]} : vector<2x128xf32> to vector<2x32xf32>
    %51 = arith.negf %50 : vector<2x32xf32>
    %52 = math.exp %51 : vector<2x32xf32>
    %cst_18 = arith.constant 1.000000e+00 : f32
    %53 = vector.broadcast %cst_18 : f32 to vector<2x32xf32>
    %54 = arith.addf %53, %52 : vector<2x32xf32>
    %55 = arith.divf %53, %54 : vector<2x32xf32>
    %56 = vector.extract_strided_slice %43 {offsets = [0, 64], sizes = [2, 32], strides = [1, 1]} : vector<2x128xf32> to vector<2x32xf32>
    %57 = math.tanh %56 : vector<2x32xf32>
    %58 = vector.extract_strided_slice %43 {offsets = [0, 96], sizes = [2, 32], strides = [1, 1]} : vector<2x128xf32> to vector<2x32xf32>
    %59 = arith.negf %58 : vector<2x32xf32>
    %60 = math.exp %59 : vector<2x32xf32>
    %cst_19 = arith.constant 1.000000e+00 : f32
    %61 = vector.broadcast %cst_19 : f32 to vector<2x32xf32>
    %62 = arith.addf %61, %60 : vector<2x32xf32>
    %63 = arith.divf %61, %62 : vector<2x32xf32>
    %64 = arith.mulf %55, %37 : vector<2x32xf32>
    %65 = arith.mulf %49, %57 : vector<2x32xf32>
    %66 = arith.addf %64, %65 : vector<2x32xf32>
    %67 = math.tanh %66 : vector<2x32xf32>
    %68 = arith.mulf %63, %67 : vector<2x32xf32>
    %69 = vector.extract_strided_slice %7 {offsets = [2, 0, 0], sizes = [1, 2, 128], strides = [1, 1, 1]} : vector<8x2x128xf32> to vector<1x2x128xf32>
    %70 = vector.shape_cast %69 : vector<1x2x128xf32> to vector<2x128xf32>
    %cst_20 = arith.constant dense<0.000000e+00> : vector<2x128xf32>
    %71 = tpu.matmul %68, %8, %cst_20 {dimension_numbers = #tpu.dot_dimension_numbers<[1], [0], [0], [1], [0, 0, 1, 1], [], []>} : vector<2x32xf32>, vector<32x128xf32>, vector<2x128xf32> -> vector<2x128xf32>
    %72 = arith.addf %70, %71 : vector<2x128xf32>
    %73 = vector.extract_strided_slice %72 {offsets = [0, 0], sizes = [2, 32], strides = [1, 1]} : vector<2x128xf32> to vector<2x32xf32>
    %74 = arith.negf %73 : vector<2x32xf32>
    %75 = math.exp %74 : vector<2x32xf32>
    %cst_21 = arith.constant 1.000000e+00 : f32
    %76 = vector.broadcast %cst_21 : f32 to vector<2x32xf32>
    %77 = arith.addf %76, %75 : vector<2x32xf32>
    %78 = arith.divf %76, %77 : vector<2x32xf32>
    %79 = vector.extract_strided_slice %72 {offsets = [0, 32], sizes = [2, 32], strides = [1, 1]} : vector<2x128xf32> to vector<2x32xf32>
    %80 = arith.negf %79 : vector<2x32xf32>
    %81 = math.exp %80 : vector<2x32xf32>
    %cst_22 = arith.constant 1.000000e+00 : f32
    %82 = vector.broadcast %cst_22 : f32 to vector<2x32xf32>
    %83 = arith.addf %82, %81 : vector<2x32xf32>
    %84 = arith.divf %82, %83 : vector<2x32xf32>
    %85 = vector.extract_strided_slice %72 {offsets = [0, 64], sizes = [2, 32], strides = [1, 1]} : vector<2x128xf32> to vector<2x32xf32>
    %86 = math.tanh %85 : vector<2x32xf32>
    %87 = vector.extract_strided_slice %72 {offsets = [0, 96], sizes = [2, 32], strides = [1, 1]} : vector<2x128xf32> to vector<2x32xf32>
    %88 = arith.negf %87 : vector<2x32xf32>
    %89 = math.exp %88 : vector<2x32xf32>
    %cst_23 = arith.constant 1.000000e+00 : f32
    %90 = vector.broadcast %cst_23 : f32 to vector<2x32xf32>
    %91 = arith.addf %90, %89 : vector<2x32xf32>
    %92 = arith.divf %90, %91 : vector<2x32xf32>
    %93 = arith.mulf %84, %66 : vector<2x32xf32>
    %94 = arith.mulf %78, %86 : vector<2x32xf32>
    %95 = arith.addf %93, %94 : vector<2x32xf32>
    %96 = math.tanh %95 : vector<2x32xf32>
    %97 = arith.mulf %92, %96 : vector<2x32xf32>
    %98 = vector.extract_strided_slice %7 {offsets = [3, 0, 0], sizes = [1, 2, 128], strides = [1, 1, 1]} : vector<8x2x128xf32> to vector<1x2x128xf32>
    %99 = vector.shape_cast %98 : vector<1x2x128xf32> to vector<2x128xf32>
    %cst_24 = arith.constant dense<0.000000e+00> : vector<2x128xf32>
    %100 = tpu.matmul %97, %8, %cst_24 {dimension_numbers = #tpu.dot_dimension_numbers<[1], [0], [0], [1], [0, 0, 1, 1], [], []>} : vector<2x32xf32>, vector<32x128xf32>, vector<2x128xf32> -> vector<2x128xf32>
    %101 = arith.addf %99, %100 : vector<2x128xf32>
    %102 = vector.extract_strided_slice %101 {offsets = [0, 0], sizes = [2, 32], strides = [1, 1]} : vector<2x128xf32> to vector<2x32xf32>
    %103 = arith.negf %102 : vector<2x32xf32>
    %104 = math.exp %103 : vector<2x32xf32>
    %cst_25 = arith.constant 1.000000e+00 : f32
    %105 = vector.broadcast %cst_25 : f32 to vector<2x32xf32>
    %106 = arith.addf %105, %104 : vector<2x32xf32>
    %107 = arith.divf %105, %106 : vector<2x32xf32>
    %108 = vector.extract_strided_slice %101 {offsets = [0, 32], sizes = [2, 32], strides = [1, 1]} : vector<2x128xf32> to vector<2x32xf32>
    %109 = arith.negf %108 : vector<2x32xf32>
    %110 = math.exp %109 : vector<2x32xf32>
    %cst_26 = arith.constant 1.000000e+00 : f32
    %111 = vector.broadcast %cst_26 : f32 to vector<2x32xf32>
    %112 = arith.addf %111, %110 : vector<2x32xf32>
    %113 = arith.divf %111, %112 : vector<2x32xf32>
    %114 = vector.extract_strided_slice %101 {offsets = [0, 64], sizes = [2, 32], strides = [1, 1]} : vector<2x128xf32> to vector<2x32xf32>
    %115 = math.tanh %114 : vector<2x32xf32>
    %116 = vector.extract_strided_slice %101 {offsets = [0, 96], sizes = [2, 32], strides = [1, 1]} : vector<2x128xf32> to vector<2x32xf32>
    %117 = arith.negf %116 : vector<2x32xf32>
    %118 = math.exp %117 : vector<2x32xf32>
    %cst_27 = arith.constant 1.000000e+00 : f32
    %119 = vector.broadcast %cst_27 : f32 to vector<2x32xf32>
    %120 = arith.addf %119, %118 : vector<2x32xf32>
    %121 = arith.divf %119, %120 : vector<2x32xf32>
    %122 = arith.mulf %113, %95 : vector<2x32xf32>
    %123 = arith.mulf %107, %115 : vector<2x32xf32>
    %124 = arith.addf %122, %123 : vector<2x32xf32>
    %125 = math.tanh %124 : vector<2x32xf32>
    %126 = arith.mulf %121, %125 : vector<2x32xf32>
    %127 = vector.extract_strided_slice %7 {offsets = [4, 0, 0], sizes = [1, 2, 128], strides = [1, 1, 1]} : vector<8x2x128xf32> to vector<1x2x128xf32>
    %128 = vector.shape_cast %127 : vector<1x2x128xf32> to vector<2x128xf32>
    %cst_28 = arith.constant dense<0.000000e+00> : vector<2x128xf32>
    %129 = tpu.matmul %126, %8, %cst_28 {dimension_numbers = #tpu.dot_dimension_numbers<[1], [0], [0], [1], [0, 0, 1, 1], [], []>} : vector<2x32xf32>, vector<32x128xf32>, vector<2x128xf32> -> vector<2x128xf32>
    %130 = arith.addf %128, %129 : vector<2x128xf32>
    %131 = vector.extract_strided_slice %130 {offsets = [0, 0], sizes = [2, 32], strides = [1, 1]} : vector<2x128xf32> to vector<2x32xf32>
    %132 = arith.negf %131 : vector<2x32xf32>
    %133 = math.exp %132 : vector<2x32xf32>
    %cst_29 = arith.constant 1.000000e+00 : f32
    %134 = vector.broadcast %cst_29 : f32 to vector<2x32xf32>
    %135 = arith.addf %134, %133 : vector<2x32xf32>
    %136 = arith.divf %134, %135 : vector<2x32xf32>
    %137 = vector.extract_strided_slice %130 {offsets = [0, 32], sizes = [2, 32], strides = [1, 1]} : vector<2x128xf32> to vector<2x32xf32>
    %138 = arith.negf %137 : vector<2x32xf32>
    %139 = math.exp %138 : vector<2x32xf32>
    %cst_30 = arith.constant 1.000000e+00 : f32
    %140 = vector.broadcast %cst_30 : f32 to vector<2x32xf32>
    %141 = arith.addf %140, %139 : vector<2x32xf32>
    %142 = arith.divf %140, %141 : vector<2x32xf32>
    %143 = vector.extract_strided_slice %130 {offsets = [0, 64], sizes = [2, 32], strides = [1, 1]} : vector<2x128xf32> to vector<2x32xf32>
    %144 = math.tanh %143 : vector<2x32xf32>
    %145 = vector.extract_strided_slice %130 {offsets = [0, 96], sizes = [2, 32], strides = [1, 1]} : vector<2x128xf32> to vector<2x32xf32>
    %146 = arith.negf %145 : vector<2x32xf32>
    %147 = math.exp %146 : vector<2x32xf32>
    %cst_31 = arith.constant 1.000000e+00 : f32
    %148 = vector.broadcast %cst_31 : f32 to vector<2x32xf32>
    %149 = arith.addf %148, %147 : vector<2x32xf32>
    %150 = arith.divf %148, %149 : vector<2x32xf32>
    %151 = arith.mulf %142, %124 : vector<2x32xf32>
    %152 = arith.mulf %136, %144 : vector<2x32xf32>
    %153 = arith.addf %151, %152 : vector<2x32xf32>
    %154 = math.tanh %153 : vector<2x32xf32>
    %155 = arith.mulf %150, %154 : vector<2x32xf32>
    %156 = vector.extract_strided_slice %7 {offsets = [5, 0, 0], sizes = [1, 2, 128], strides = [1, 1, 1]} : vector<8x2x128xf32> to vector<1x2x128xf32>
    %157 = vector.shape_cast %156 : vector<1x2x128xf32> to vector<2x128xf32>
    %cst_32 = arith.constant dense<0.000000e+00> : vector<2x128xf32>
    %158 = tpu.matmul %155, %8, %cst_32 {dimension_numbers = #tpu.dot_dimension_numbers<[1], [0], [0], [1], [0, 0, 1, 1], [], []>} : vector<2x32xf32>, vector<32x128xf32>, vector<2x128xf32> -> vector<2x128xf32>
    %159 = arith.addf %157, %158 : vector<2x128xf32>
    %160 = vector.extract_strided_slice %159 {offsets = [0, 0], sizes = [2, 32], strides = [1, 1]} : vector<2x128xf32> to vector<2x32xf32>
    %161 = arith.negf %160 : vector<2x32xf32>
    %162 = math.exp %161 : vector<2x32xf32>
    %cst_33 = arith.constant 1.000000e+00 : f32
    %163 = vector.broadcast %cst_33 : f32 to vector<2x32xf32>
    %164 = arith.addf %163, %162 : vector<2x32xf32>
    %165 = arith.divf %163, %164 : vector<2x32xf32>
    %166 = vector.extract_strided_slice %159 {offsets = [0, 32], sizes = [2, 32], strides = [1, 1]} : vector<2x128xf32> to vector<2x32xf32>
    %167 = arith.negf %166 : vector<2x32xf32>
    %168 = math.exp %167 : vector<2x32xf32>
    %cst_34 = arith.constant 1.000000e+00 : f32
    %169 = vector.broadcast %cst_34 : f32 to vector<2x32xf32>
    %170 = arith.addf %169, %168 : vector<2x32xf32>
    %171 = arith.divf %169, %170 : vector<2x32xf32>
    %172 = vector.extract_strided_slice %159 {offsets = [0, 64], sizes = [2, 32], strides = [1, 1]} : vector<2x128xf32> to vector<2x32xf32>
    %173 = math.tanh %172 : vector<2x32xf32>
    %174 = vector.extract_strided_slice %159 {offsets = [0, 96], sizes = [2, 32], strides = [1, 1]} : vector<2x128xf32> to vector<2x32xf32>
    %175 = arith.negf %174 : vector<2x32xf32>
    %176 = math.exp %175 : vector<2x32xf32>
    %cst_35 = arith.constant 1.000000e+00 : f32
    %177 = vector.broadcast %cst_35 : f32 to vector<2x32xf32>
    %178 = arith.addf %177, %176 : vector<2x32xf32>
    %179 = arith.divf %177, %178 : vector<2x32xf32>
    %180 = arith.mulf %171, %153 : vector<2x32xf32>
    %181 = arith.mulf %165, %173 : vector<2x32xf32>
    %182 = arith.addf %180, %181 : vector<2x32xf32>
    %183 = math.tanh %182 : vector<2x32xf32>
    %184 = arith.mulf %179, %183 : vector<2x32xf32>
    %185 = vector.extract_strided_slice %7 {offsets = [6, 0, 0], sizes = [1, 2, 128], strides = [1, 1, 1]} : vector<8x2x128xf32> to vector<1x2x128xf32>
    %186 = vector.shape_cast %185 : vector<1x2x128xf32> to vector<2x128xf32>
    %cst_36 = arith.constant dense<0.000000e+00> : vector<2x128xf32>
    %187 = tpu.matmul %184, %8, %cst_36 {dimension_numbers = #tpu.dot_dimension_numbers<[1], [0], [0], [1], [0, 0, 1, 1], [], []>} : vector<2x32xf32>, vector<32x128xf32>, vector<2x128xf32> -> vector<2x128xf32>
    %188 = arith.addf %186, %187 : vector<2x128xf32>
    %189 = vector.extract_strided_slice %188 {offsets = [0, 0], sizes = [2, 32], strides = [1, 1]} : vector<2x128xf32> to vector<2x32xf32>
    %190 = arith.negf %189 : vector<2x32xf32>
    %191 = math.exp %190 : vector<2x32xf32>
    %cst_37 = arith.constant 1.000000e+00 : f32
    %192 = vector.broadcast %cst_37 : f32 to vector<2x32xf32>
    %193 = arith.addf %192, %191 : vector<2x32xf32>
    %194 = arith.divf %192, %193 : vector<2x32xf32>
    %195 = vector.extract_strided_slice %188 {offsets = [0, 32], sizes = [2, 32], strides = [1, 1]} : vector<2x128xf32> to vector<2x32xf32>
    %196 = arith.negf %195 : vector<2x32xf32>
    %197 = math.exp %196 : vector<2x32xf32>
    %cst_38 = arith.constant 1.000000e+00 : f32
    %198 = vector.broadcast %cst_38 : f32 to vector<2x32xf32>
    %199 = arith.addf %198, %197 : vector<2x32xf32>
    %200 = arith.divf %198, %199 : vector<2x32xf32>
    %201 = vector.extract_strided_slice %188 {offsets = [0, 64], sizes = [2, 32], strides = [1, 1]} : vector<2x128xf32> to vector<2x32xf32>
    %202 = math.tanh %201 : vector<2x32xf32>
    %203 = vector.extract_strided_slice %188 {offsets = [0, 96], sizes = [2, 32], strides = [1, 1]} : vector<2x128xf32> to vector<2x32xf32>
    %204 = arith.negf %203 : vector<2x32xf32>
    %205 = math.exp %204 : vector<2x32xf32>
    %cst_39 = arith.constant 1.000000e+00 : f32
    %206 = vector.broadcast %cst_39 : f32 to vector<2x32xf32>
    %207 = arith.addf %206, %205 : vector<2x32xf32>
    %208 = arith.divf %206, %207 : vector<2x32xf32>
    %209 = arith.mulf %200, %182 : vector<2x32xf32>
    %210 = arith.mulf %194, %202 : vector<2x32xf32>
    %211 = arith.addf %209, %210 : vector<2x32xf32>
    %212 = math.tanh %211 : vector<2x32xf32>
    %213 = arith.mulf %208, %212 : vector<2x32xf32>
    %214 = vector.extract_strided_slice %7 {offsets = [7, 0, 0], sizes = [1, 2, 128], strides = [1, 1, 1]} : vector<8x2x128xf32> to vector<1x2x128xf32>
    %215 = vector.shape_cast %214 : vector<1x2x128xf32> to vector<2x128xf32>
    %cst_40 = arith.constant dense<0.000000e+00> : vector<2x128xf32>
    %216 = tpu.matmul %213, %8, %cst_40 {dimension_numbers = #tpu.dot_dimension_numbers<[1], [0], [0], [1], [0, 0, 1, 1], [], []>} : vector<2x32xf32>, vector<32x128xf32>, vector<2x128xf32> -> vector<2x128xf32>
    %217 = arith.addf %215, %216 : vector<2x128xf32>
    %218 = vector.extract_strided_slice %217 {offsets = [0, 0], sizes = [2, 32], strides = [1, 1]} : vector<2x128xf32> to vector<2x32xf32>
    %219 = arith.negf %218 : vector<2x32xf32>
    %220 = math.exp %219 : vector<2x32xf32>
    %cst_41 = arith.constant 1.000000e+00 : f32
    %221 = vector.broadcast %cst_41 : f32 to vector<2x32xf32>
    %222 = arith.addf %221, %220 : vector<2x32xf32>
    %223 = arith.divf %221, %222 : vector<2x32xf32>
    %224 = vector.extract_strided_slice %217 {offsets = [0, 32], sizes = [2, 32], strides = [1, 1]} : vector<2x128xf32> to vector<2x32xf32>
    %225 = arith.negf %224 : vector<2x32xf32>
    %226 = math.exp %225 : vector<2x32xf32>
    %cst_42 = arith.constant 1.000000e+00 : f32
    %227 = vector.broadcast %cst_42 : f32 to vector<2x32xf32>
    %228 = arith.addf %227, %226 : vector<2x32xf32>
    %229 = arith.divf %227, %228 : vector<2x32xf32>
    %230 = vector.extract_strided_slice %217 {offsets = [0, 64], sizes = [2, 32], strides = [1, 1]} : vector<2x128xf32> to vector<2x32xf32>
    %231 = math.tanh %230 : vector<2x32xf32>
    %232 = vector.extract_strided_slice %217 {offsets = [0, 96], sizes = [2, 32], strides = [1, 1]} : vector<2x128xf32> to vector<2x32xf32>
    %233 = arith.negf %232 : vector<2x32xf32>
    %234 = math.exp %233 : vector<2x32xf32>
    %cst_43 = arith.constant 1.000000e+00 : f32
    %235 = vector.broadcast %cst_43 : f32 to vector<2x32xf32>
    %236 = arith.addf %235, %234 : vector<2x32xf32>
    %237 = arith.divf %235, %236 : vector<2x32xf32>
    %238 = arith.mulf %229, %211 : vector<2x32xf32>
    %239 = arith.mulf %223, %231 : vector<2x32xf32>
    %240 = arith.addf %238, %239 : vector<2x32xf32>
    %241 = math.tanh %240 : vector<2x32xf32>
    %242 = arith.mulf %237, %241 : vector<2x32xf32>
    %c0_44 = arith.constant 0 : index
    %c0_45 = arith.constant 0 : index
    %c0_46 = arith.constant 0 : index
    %243 = vector.load %arg7[%c0_44, %c0_45, %c0_46] : memref<2x64x32xf32, #tpu.memory_space<vmem>>, vector<2x64x32xf32>
    %244 = vector.shape_cast %243 : vector<2x64x32xf32> to vector<128x32xf32>
    %c0_47 = arith.constant 0 : index
    %c0_48 = arith.constant 0 : index
    %245 = vector.load %arg8[%c0_47, %c0_48] : memref<32x16xf32, #tpu.memory_space<vmem>>, vector<32x16xf32>
    %cst_49 = arith.constant dense<0.000000e+00> : vector<128x16xf32>
    %246 = tpu.matmul %244, %245, %cst_49 {dimension_numbers = #tpu.dot_dimension_numbers<[1], [0], [0], [1], [0, 0, 1, 1], [], []>} : vector<128x32xf32>, vector<32x16xf32>, vector<128x16xf32> -> vector<128x16xf32>
    %c0_50 = arith.constant 0 : index
    %c0_51 = arith.constant 0 : index
    %247 = vector.load %arg9[%c0_50, %c0_51] : memref<1x16xf32, #tpu.memory_space<vmem>>, vector<1x16xf32>
    %248 = vector.broadcast %247 : vector<1x16xf32> to vector<128x16xf32>
    %249 = arith.addf %246, %248 : vector<128x16xf32>
    %250 = vector.shape_cast %249 : vector<128x16xf32> to vector<2x64x16xf32>
    %c0_52 = arith.constant 0 : index
    %c0_53 = arith.constant 0 : index
    %251 = vector.load %arg12[%c0_52, %c0_53] : memref<1x16xf32, #tpu.memory_space<vmem>>, vector<1x16xf32>
    %252 = vector.shape_cast %251 : vector<1x16xf32> to vector<1x1x16xf32>
    %253 = vector.shape_cast %252 : vector<1x1x16xf32> to vector<1x1x16xf32>
    %254 = vector.broadcast %253 : vector<1x1x16xf32> to vector<2x64x16xf32>
    %c0_54 = arith.constant 0 : index
    %c0_55 = arith.constant 0 : index
    %255 = vector.load %arg13[%c0_54, %c0_55] : memref<1x1xf32, #tpu.memory_space<vmem>>, vector<1x1xf32>
    %c0_56 = arith.constant 0 : index
    %c0_57 = arith.constant 0 : index
    %256 = vector.load %arg10[%c0_56, %c0_57] : memref<32x16xf32, #tpu.memory_space<vmem>>, vector<32x16xf32>
    %c0_58 = arith.constant 0 : index
    %c0_59 = arith.constant 0 : index
    %257 = vector.load %arg11[%c0_58, %c0_59] : memref<1x16xf32, #tpu.memory_space<vmem>>, vector<1x16xf32>
    %cst_60 = arith.constant dense<0.000000e+00> : vector<2x16xf32>
    %258 = tpu.matmul %242, %256, %cst_60 {dimension_numbers = #tpu.dot_dimension_numbers<[1], [0], [0], [1], [0, 0, 1, 1], [], []>} : vector<2x32xf32>, vector<32x16xf32>, vector<2x16xf32> -> vector<2x16xf32>
    %259 = vector.broadcast %257 : vector<1x16xf32> to vector<2x16xf32>
    %260 = arith.addf %258, %259 : vector<2x16xf32>
    %261 = vector.shape_cast %260 : vector<2x16xf32> to vector<2x1x16xf32>
    %262 = vector.broadcast %261 : vector<2x1x16xf32> to vector<2x64x16xf32>
    %263 = arith.addf %250, %262 : vector<2x64x16xf32>
    %264 = math.tanh %263 : vector<2x64x16xf32>
    %265 = arith.mulf %264, %254 : vector<2x64x16xf32>
    %cst_61 = arith.constant dense<0.000000e+00> : vector<2x64xf32>
    %266 = vector.multi_reduction <add>, %265, %cst_61 [2] : vector<2x64x16xf32> to vector<2x64xf32>
    %267 = vector.broadcast %255 : vector<1x1xf32> to vector<2x64xf32>
    %268 = arith.addf %266, %267 : vector<2x64xf32>
    %cst_62 = arith.constant dense<0xFF800000> : vector<2xf32>
    %269 = vector.multi_reduction <maximumf>, %268, %cst_62 [1] : vector<2x64xf32> to vector<2xf32>
    %270 = vector.shape_cast %269 : vector<2xf32> to vector<2x1xf32>
    %271 = vector.broadcast %270 : vector<2x1xf32> to vector<2x64xf32>
    %272 = arith.subf %268, %271 : vector<2x64xf32>
    %273 = math.exp %272 : vector<2x64xf32>
    %cst_63 = arith.constant dense<0.000000e+00> : vector<2xf32>
    %274 = vector.multi_reduction <add>, %273, %cst_63 [1] : vector<2x64xf32> to vector<2xf32>
    %275 = vector.shape_cast %274 : vector<2xf32> to vector<2x1xf32>
    %276 = tpu.reciprocal %275 {approx = true} : vector<2x1xf32> -> vector<2x1xf32>
    %277 = vector.broadcast %276 : vector<2x1xf32> to vector<2x64xf32>
    %278 = arith.mulf %273, %277 : vector<2x64xf32>
    %279 = vector.shape_cast %278 : vector<2x64xf32> to vector<2x1x64xf32>
    "tpu.trace_start"() <{level = 10 : i32, message = "bqs,bsd->bqd"}> : () -> ()
    %cst_64 = arith.constant dense<0.000000e+00> : vector<2x1x32xf32>
    %280 = tpu.matmul %279, %243, %cst_64 {dimension_numbers = #tpu.dot_dimension_numbers<[2], [1], [1], [2], [0, 0, 0, 1, 1, 2], [0], [0]>} : vector<2x1x64xf32>, vector<2x64x32xf32>, vector<2x1x32xf32> -> vector<2x1x32xf32>
    "tpu.trace_stop"() : () -> ()
    %281 = vector.shape_cast %280 : vector<2x1x32xf32> to vector<2x32xf32>
    %282 = arith.addf %281, %242 : vector<2x32xf32>
    %c0_65 = arith.constant 0 : index
    %c0_66 = arith.constant 0 : index
    %283 = vector.load %arg14[%c0_65, %c0_66] : memref<32x128xf32, #tpu.memory_space<vmem>>, vector<32x128xf32>
    %cst_67 = arith.constant dense<0.000000e+00> : vector<2x128xf32>
    %284 = tpu.matmul %282, %283, %cst_67 {dimension_numbers = #tpu.dot_dimension_numbers<[1], [0], [0], [1], [0, 0, 1, 1], [], []>} : vector<2x32xf32>, vector<32x128xf32>, vector<2x128xf32> -> vector<2x128xf32>
    %c0_68 = arith.constant 0 : index
    %c0_69 = arith.constant 0 : index
    %285 = vector.load %arg15[%c0_68, %c0_69] : memref<1x128xf32, #tpu.memory_space<vmem>>, vector<1x128xf32>
    %286 = vector.broadcast %285 : vector<1x128xf32> to vector<2x128xf32>
    %287 = arith.addf %284, %286 : vector<2x128xf32>
    %c0_70 = arith.constant 0 : index
    %c0_71 = arith.constant 0 : index
    %288 = vector.load %arg16[%c0_70, %c0_71] : memref<2x128xf32, #tpu.memory_space<vmem>>, vector<2x128xf32>
    tpu.vector_store %arg16[%c0_70, %c0_71], %287 {strides = array<i32>} : memref<2x128xf32, #tpu.memory_space<vmem>>, vector<2x128xf32>,
    return
  }
  func.func @transform_0(%arg0: i32) -> (i32, i32, i32) {
    %c0_i32 = arith.constant 0 : i32
    %c0_i32_0 = arith.constant 0 : i32
    %c0_i32_1 = arith.constant 0 : i32
    return %c0_i32, %arg0, %c0_i32_0 : i32, i32, i32
  }
  func.func @transform_1(%arg0: i32) -> (i32, i32) {
    %c0_i32 = arith.constant 0 : i32
    %c0_i32_0 = arith.constant 0 : i32
    %c0_i32_1 = arith.constant 0 : i32
    return %c0_i32, %c0_i32_0 : i32, i32
  }
  func.func @transform_2(%arg0: i32) -> (i32, i32) {
    %c0_i32 = arith.constant 0 : i32
    %c0_i32_0 = arith.constant 0 : i32
    %c0_i32_1 = arith.constant 0 : i32
    return %c0_i32, %c0_i32_0 : i32, i32
  }
  func.func @transform_3(%arg0: i32) -> (i32, i32) {
    %c0_i32 = arith.constant 0 : i32
    %c0_i32_0 = arith.constant 0 : i32
    %c0_i32_1 = arith.constant 0 : i32
    return %c0_i32, %c0_i32_0 : i32, i32
  }
  func.func @transform_4(%arg0: i32) -> (i32, i32) {
    %c0_i32 = arith.constant 0 : i32
    %c0_i32_0 = arith.constant 0 : i32
    return %arg0, %c0_i32 : i32, i32
  }
  func.func @transform_5(%arg0: i32) -> (i32, i32) {
    %c0_i32 = arith.constant 0 : i32
    %c0_i32_0 = arith.constant 0 : i32
    return %arg0, %c0_i32 : i32, i32
  }
  func.func @transform_6(%arg0: i32) -> (i32, i32, i32) {
    %c0_i32 = arith.constant 0 : i32
    %c0_i32_0 = arith.constant 0 : i32
    %c0_i32_1 = arith.constant 0 : i32
    return %arg0, %c0_i32, %c0_i32_0 : i32, i32, i32
  }
  func.func @transform_7(%arg0: i32) -> (i32, i32) {
    %c0_i32 = arith.constant 0 : i32
    %c0_i32_0 = arith.constant 0 : i32
    %c0_i32_1 = arith.constant 0 : i32
    return %c0_i32, %c0_i32_0 : i32, i32
  }
  func.func @transform_8(%arg0: i32) -> (i32, i32) {
    %c0_i32 = arith.constant 0 : i32
    %c0_i32_0 = arith.constant 0 : i32
    %c0_i32_1 = arith.constant 0 : i32
    return %c0_i32, %c0_i32_0 : i32, i32
  }
  func.func @transform_9(%arg0: i32) -> (i32, i32) {
    %c0_i32 = arith.constant 0 : i32
    %c0_i32_0 = arith.constant 0 : i32
    %c0_i32_1 = arith.constant 0 : i32
    return %c0_i32, %c0_i32_0 : i32, i32
  }
  func.func @transform_10(%arg0: i32) -> (i32, i32) {
    %c0_i32 = arith.constant 0 : i32
    %c0_i32_0 = arith.constant 0 : i32
    %c0_i32_1 = arith.constant 0 : i32
    return %c0_i32, %c0_i32_0 : i32, i32
  }
  func.func @transform_11(%arg0: i32) -> (i32, i32) {
    %c0_i32 = arith.constant 0 : i32
    %c0_i32_0 = arith.constant 0 : i32
    %c0_i32_1 = arith.constant 0 : i32
    return %c0_i32, %c0_i32_0 : i32, i32
  }
  func.func @transform_12(%arg0: i32) -> (i32, i32) {
    %c0_i32 = arith.constant 0 : i32
    %c0_i32_0 = arith.constant 0 : i32
    %c0_i32_1 = arith.constant 0 : i32
    return %c0_i32, %c0_i32_0 : i32, i32
  }
  func.func @transform_13(%arg0: i32) -> (i32, i32) {
    %c0_i32 = arith.constant 0 : i32
    %c0_i32_0 = arith.constant 0 : i32
    %c0_i32_1 = arith.constant 0 : i32
    return %c0_i32, %c0_i32_0 : i32, i32
  }
  func.func @transform_14(%arg0: i32) -> (i32, i32) {
    %c0_i32 = arith.constant 0 : i32
    %c0_i32_0 = arith.constant 0 : i32
    %c0_i32_1 = arith.constant 0 : i32
    return %c0_i32, %c0_i32_0 : i32, i32
  }
  func.func @transform_15(%arg0: i32) -> (i32, i32) {
    %c0_i32 = arith.constant 0 : i32
    %c0_i32_0 = arith.constant 0 : i32
    return %arg0, %c0_i32 : i32, i32
  }
}

</mosaic_0001>

<llo_original>
// kernel: _lambda_.3
$region0: #{_lambda_.3}
  #allocation0 [shape = 'u32[]', space=smem, size = 0x4, offset = 0x4, fixed_abs, tag = 'smem constant byte address 0x4 - core index']
  #allocation1 [shape = 'u32[72,128]{1,0:T(1,128)}', space=vmem, size = 0x9000, scoped, tag = 'internal scratch']
  #allocation2 [shape = 'f32[1,1]{1,0:T(1,128)S(1)}', space=vmem, size = 0x200, scoped, tag = 'scoped memory for _lambda_.3']
  %s0 = inlined_call_operand.vmem [shape: f32[8,2,16], index: 0, kind: input, shape index: {}]
  %s1 = inlined_call_operand.vmem [shape: f32[16,128], index: 1, kind: input, shape index: {}]
  %s2 = inlined_call_operand.vmem [shape: f32[32,128], index: 2, kind: input, shape index: {}]
  %s3 = inlined_call_operand.vmem [shape: f32[1,128], index: 3, kind: input, shape index: {}]
  %s4 = inlined_call_operand.vmem [shape: f32[2,32], index: 4, kind: input, shape index: {}]
  %s5 = inlined_call_operand.vmem [shape: f32[2,32], index: 5, kind: input, shape index: {}]
  %s6 = inlined_call_operand.vmem [shape: f32[2,64,32], index: 6, kind: input, shape index: {}]
  %s7 = inlined_call_operand.vmem [shape: f32[32,16], index: 7, kind: input, shape index: {}]
  %s8 = inlined_call_operand.vmem [shape: f32[1,16], index: 8, kind: input, shape index: {}]
  %s9 = inlined_call_operand.vmem [shape: f32[32,16], index: 9, kind: input, shape index: {}]
  %s10 = inlined_call_operand.vmem [shape: f32[1,16], index: 10, kind: input, shape index: {}]
  %s11 = inlined_call_operand.vmem [shape: f32[1,16], index: 11, kind: input, shape index: {}]
  %s12 = inlined_call_operand.<no memory space> [shape: f32[1,1], index: 12, kind: input, shape index: {}]
  %s13 = inlined_call_operand.vmem [shape: f32[32,128], index: 13, kind: input, shape index: {}]
  %s14 = inlined_call_operand.vmem [shape: f32[1,128], index: 14, kind: input, shape index: {}]
  %s15 = inlined_call_operand.hbm [shape: f32[2,128], index: 15, kind: output, shape index: {}]
  %s16 = sld [smem:[#allocation0]]
  $region70: #{_lambda_.3} parent=0
    _
  %s18 = ssub.s32 1, %s16
  %s19 = scalar_select 0, %s18, %s16
  %v20 = vstv %s12
  %21 = vst [vmem:[#allocation2] sm:$0x1] %v20
  $region1: #{_lambda_.3} parent=0
    #allocation3 [shape = 'u8[1024]{0}', space=vmem, size = 0x400, scoped, tag = 'output window, operand 0, single buffered']
    #allocation4 [shape = 's32[1]{0}', space=sflag, size = 0x4, scoped, tag = 'scoped memory for _lambda_.3']
    %22 = vsyncpa [#allocation4], 0
    // Predicated region
    $region2: #{_lambda_.3} parent=1 // pred_check
      _
    $region3: #{_lambda_.3} parent=1 // pred_check_branch
      %24 = sbr.rel (0) target = $region5
    $region4: #{_lambda_.3} parent=1 // pred_region
      _
    $region5: #{_lambda_.3} parent=1 // pred_fallthru
      _
    // Predicated region
    $region6: #{_lambda_.3} parent=1 // pred_check
      _
    $region7: #{_lambda_.3} parent=1 // pred_check_branch
      %26 = sbr.rel (0) target = $region9
    $region8: #{_lambda_.3} parent=1 // pred_region
      _
    $region9: #{_lambda_.3} parent=1 // pred_fallthru
      _
    // Predicated region
    $region10: #{_lambda_.3} parent=1 // pred_check
      _
    $region11: #{_lambda_.3} parent=1 // pred_check_branch
      %28 = sbr.rel (0) target = $region13
    $region12: #{_lambda_.3} parent=1 // pred_region
      _
    $region13: #{_lambda_.3} parent=1 // pred_fallthru
      _
    // Predicated region
    $region14: #{_lambda_.3} parent=1 // pred_check
      _
    $region15: #{_lambda_.3} parent=1 // pred_check_branch
      %30 = sbr.rel (0) target = $region17
    $region16: #{_lambda_.3} parent=1 // pred_region
      _
    $region17: #{_lambda_.3} parent=1 // pred_fallthru
      _
    // Predicated region
    $region18: #{_lambda_.3} parent=1 // pred_check
      _
    $region19: #{_lambda_.3} parent=1 // pred_check_branch
      %32 = sbr.rel (0) target = $region21
    $region20: #{_lambda_.3} parent=1 // pred_region
      _
    $region21: #{_lambda_.3} parent=1 // pred_fallthru
      _
    // Predicated region
    $region22: #{_lambda_.3} parent=1 // pred_check
      _
    $region23: #{_lambda_.3} parent=1 // pred_check_branch
      %34 = sbr.rel (0) target = $region25
    $region24: #{_lambda_.3} parent=1 // pred_region
      _
    $region25: #{_lambda_.3} parent=1 // pred_fallthru
      _
    // Predicated region
    $region26: #{_lambda_.3} parent=1 // pred_check
      _
    $region27: #{_lambda_.3} parent=1 // pred_check_branch
      %36 = sbr.rel (0) target = $region29
    $region28: #{_lambda_.3} parent=1 // pred_region
      _
    $region29: #{_lambda_.3} parent=1 // pred_fallthru
      _
    // Predicated region
    $region30: #{_lambda_.3} parent=1 // pred_check
      _
    $region31: #{_lambda_.3} parent=1 // pred_check_branch
      %38 = sbr.rel (0) target = $region33
    $region32: #{_lambda_.3} parent=1 // pred_region
      _
    $region33: #{_lambda_.3} parent=1 // pred_fallthru
      _
    // Predicated region
    $region34: #{_lambda_.3} parent=1 // pred_check
      _
    $region35: #{_lambda_.3} parent=1 // pred_check_branch
      %40 = sbr.rel (0) target = $region37
    $region36: #{_lambda_.3} parent=1 // pred_region
      _
    $region37: #{_lambda_.3} parent=1 // pred_fallthru
      _
    // Predicated region
    $region38: #{_lambda_.3} parent=1 // pred_check
      _
    $region39: #{_lambda_.3} parent=1 // pred_check_branch
      %42 = sbr.rel (0) target = $region41
    $region40: #{_lambda_.3} parent=1 // pred_region
      _
    $region41: #{_lambda_.3} parent=1 // pred_fallthru
      _
    // Predicated region
    $region42: #{_lambda_.3} parent=1 // pred_check
      _
    $region43: #{_lambda_.3} parent=1 // pred_check_branch
      %44 = sbr.rel (0) target = $region45
    $region44: #{_lambda_.3} parent=1 // pred_region
      _
    $region45: #{_lambda_.3} parent=1 // pred_fallthru
      _
    // Predicated region
    $region46: #{_lambda_.3} parent=1 // pred_check
      _
    $region47: #{_lambda_.3} parent=1 // pred_check_branch
      %46 = sbr.rel (0) target = $region49
    $region48: #{_lambda_.3} parent=1 // pred_region
      _
    $region49: #{_lambda_.3} parent=1 // pred_fallthru
      _
    // Predicated region
    $region50: #{_lambda_.3} parent=1 // pred_check
      _
    $region51: #{_lambda_.3} parent=1 // pred_check_branch
      %48 = sbr.rel (0) target = $region53
    $region52: #{_lambda_.3} parent=1 // pred_region
      _
    $region53: #{_lambda_.3} parent=1 // pred_fallthru
      _
    // Predicated region
    $region54: #{_lambda_.3} parent=1 // pred_check
      _
    $region55: #{_lambda_.3} parent=1 // pred_check_branch
      %50 = sbr.rel (0) target = $region57
    $region56: #{_lambda_.3} parent=1 // pred_region
      _
    $region57: #{_lambda_.3} parent=1 // pred_fallthru
      _
    // Predicated region
    $region58: #{_lambda_.3} parent=1 // pred_check
      _
    $region59: #{_lambda_.3} parent=1 // pred_check_branch
      %52 = sbr.rel (0) target = $region61
    $region60: #{_lambda_.3} parent=1 // pred_region
      _
    $region61: #{_lambda_.3} parent=1 // pred_fallthru
      _
    %v53 = vld [vmem:[%s0] sm:$0x3]
    %v54 = vld [vmem:[%s0 + $0x2] sm:$0x3]
    %v55 = vld [vmem:[%s0 + $0x4] sm:$0x3]
    %v56 = vld [vmem:[%s0 + $0x6] sm:$0x3]
    %v57 = vld [vmem:[%s0 + $0x8] sm:$0x3]
    %v58 = vld [vmem:[%s0 + $0xa] sm:$0x3]
    %v59 = vld [vmem:[%s0 + $0xc] sm:$0x3]
    %v60 = vld [vmem:[%s0 + $0xe] sm:$0x3]
    %v61 = vld [vmem:[%s1] sm:$0xff]
    %v62 = vld [vmem:[%s1 + $0x8] sm:$0xff]
    %v63 = vld [vmem:[%s3] sm:$0x1]
    %v65 = vperm.slane %v63, 0
    %75 = vst [vmem:[#allocation1] ss:$4 sm:$0xff] %v53
    %s76 = scalar_lea.vmem [#allocation1], 1
    %77 = vst [vmem:[%s76] ss:$4 sm:$0xff] %v54
    %s78 = scalar_lea.vmem [#allocation1], 2
    %79 = vst [vmem:[%s78] ss:$4 sm:$0xff] %v55
    %s80 = scalar_lea.vmem [#allocation1], 3
    %81 = vst [vmem:[%s80] ss:$4 sm:$0xff] %v56
    %s82 = scalar_lea.vmem [#allocation1], 32
    %83 = vst [vmem:[%s82] ss:$4 sm:$0xff] %v57
    %s84 = scalar_lea.vmem [#allocation1], 33
    %85 = vst [vmem:[%s84] ss:$4 sm:$0xff] %v58
    %s86 = scalar_lea.vmem [#allocation1], 34
    %87 = vst [vmem:[%s86] ss:$4 sm:$0xff] %v59
    %s88 = scalar_lea.vmem [#allocation1], 35
    %89 = vst [vmem:[%s88] ss:$4 sm:$0xff] %v60
    %v90 = vld.sshfl [vmem:[#allocation1] sm:$0xff pattern:$0x73625140]
    %v91 = vld.sshfl [vmem:[#allocation1 + $0x20] sm:$0xff pattern:$0x73625140]
    %vm92 = vcmask 130048
    %v93 = vsel %vm92, %v90, 0
    %v95 = vsel %vm92, %v91, 0
    %97 = vmatpush.msra.mxu0 0.0
    %98 = vmatpush.msra.mxu0 0.0
    %99 = vmatpush.msra.mxu0 0.0
    %100 = vmatpush.msra.mxu0 0.0
    %101 = vmatpush.msra.mxu0 0.0
    %102 = vmatpush.msra.mxu0 0.0
    %103 = vmatpush.msra.mxu0 0.0
    %104 = vmatpush.msra.mxu0 0.0
    %105 = vmatpush.msra.mxu0 0.0
    %106 = vmatpush.msra.mxu0 0.0
    %107 = vmatpush.msra.mxu0 0.0
    %108 = vmatpush.msra.mxu0 0.0
    %109 = vmatpush.msra.mxu0 0.0
    %110 = vmatpush.msra.mxu0 0.0
    %111 = vmatpush.msra.mxu0 %v62
    %112 = vmatpush.msra.mxu0 %v61
    %113 = vmatmul.f32.gmra.mxu0 %v93
    %v114 = vpop.f32.mrf.mxu0
    %v115 = vadd.f32 %v65, %v114
    %116 = vmatmul.f32.gmra.mxu0 %v95
    %v117 = vpop.f32.mrf.mxu0
    %v118 = vadd.f32 %v65, %v117
    %119 = vdwg.mxu0
    %v122 = vrot.slane %v115, 2
    %v123 = vrot.slane %v115, 4
    %v124 = vrot.slane %v115, 6
    %v125 = vrot.slane %v118, 2
    %v126 = vrot.slane %v118, 4
    %v127 = vrot.slane %v118, 6
    %v134 = vld [vmem:[%s2] sm:$0xff]
    %v135 = vld [vmem:[%s2 + $0x8] sm:$0xff]
    %v136 = vld [vmem:[%s2 + $0x10] sm:$0xff]
    %v137 = vld [vmem:[%s2 + $0x18] sm:$0xff]
    %v138 = vld [vmem:[%s4] sm:$0x3]
    %v139 = vld [vmem:[%s5] sm:$0x3]
    %vm140 = vcmask 261120
    %v142 = vsel %vm140, %v138, 0
    %144 = vmatpush.msra.mxu0 0.0
    %145 = vmatpush.msra.mxu0 0.0
    %146 = vmatpush.msra.mxu0 0.0
    %147 = vmatpush.msra.mxu0 0.0
    %148 = vmatpush.msra.mxu0 0.0
    %149 = vmatpush.msra.mxu0 0.0
    %150 = vmatpush.msra.mxu0 0.0
    %151 = vmatpush.msra.mxu0 0.0
    %152 = vmatpush.msra.mxu0 0.0
    %153 = vmatpush.msra.mxu0 0.0
    %154 = vmatpush.msra.mxu0 0.0
    %155 = vmatpush.msra.mxu0 0.0
    %156 = vmatpush.msra.mxu0 %v137
    %157 = vmatpush.msra.mxu0 %v136
    %158 = vmatpush.msra.mxu0 %v135
    %159 = vmatpush.msra.mxu0 %v134
    %160 = vmatmul.f32.gmra.mxu0 %v142
    %v161 = vpop.f32.mrf.mxu0
    %v162 = vadd.f32 0.0, %v161
    %163 = vdwg.mxu0
    %v164 = vadd.f32 %v115, %v162
    %v165 = vxor.u32 %v164, 2147483648
    %v166 = vmul.f32 %v165, 1.442695
    %v167 = vpow.pop %v166
    %v168 = vadd.f32 %v167, 1.0
    %v169 = vrcp.pop %v168
    %v170 = vmul.f32 %v168, %v169
    %v171 = vsub.f32 1.0, %v170
    %v172 = vmul.f32 %v169, %v171
    %v173 = vadd.f32 %v169, %v172
    %vm174 = vweird.f32 %v168
    %vm175 = vweird.f32 %v169
    %vm176 = vmor %vm174, %vm175
    %v177 = vsel %vm176, %v169, %v173
    %v178 = vand.u32 2147483647, %v168
    %vm179 = vcmp.eq.f32.partialorder %v178, 8.507059e+37
    %v180 = vand.u32 %v168, 2147483648
    %v181 = vor.u32 1.1754944e-38, %v180
    %v182 = vsel %vm179, %v181, %v177
    %v183 = vmul.f32 1.0, %v182
    %v184 = vtanh.pop %v164
    %186 = vrot.lane.b32.xlu0 %v139, 32
    %v187 = vpop.permute.xlu0 %186
    %v189 = vmul.f32 %v183, %v187
    %191 = vrot.lane.b32.xlu0 %v184, 64
    %v192 = vpop.permute.xlu0 %191
    %v194 = vmul.f32 %v183, %v192
    %196 = vrot.lane.b32.xlu0 %v194, 32
    %v197 = vpop.permute.xlu0 %196
    %v199 = vadd.f32 %v189, %v197
    %v200 = vtanh.pop %v199
    %202 = vrot.lane.b32.xlu0 %v200, 64
    %v203 = vpop.permute.xlu0 %202
    %v205 = vmul.f32 %v183, %v203
    %207 = vst [vmem:[#allocation1] ss:$4 sm:$0xff] %v205
    %v208 = vld.sshfl [vmem:[#allocation1] sm:$0xff pattern:$0x73625140]
    %209 = vrot.lane.b32.xlu0 %v208, 32
    %v210 = vpop.permute.xlu0 %209
    %v211 = vsel %vm140, %v210, 0
    %213 = vmatpush.msra.mxu0 0.0
    %214 = vmatpush.msra.mxu0 0.0
    %215 = vmatpush.msra.mxu0 0.0
    %216 = vmatpush.msra.mxu0 0.0
    %217 = vmatpush.msra.mxu0 0.0
    %218 = vmatpush.msra.mxu0 0.0
    %219 = vmatpush.msra.mxu0 0.0
    %220 = vmatpush.msra.mxu0 0.0
    %221 = vmatpush.msra.mxu0 0.0
    %222 = vmatpush.msra.mxu0 0.0
    %223 = vmatpush.msra.mxu0 0.0
    %224 = vmatpush.msra.mxu0 0.0
    %225 = vmatpush.msra.mxu0 %v137
    %226 = vmatpush.msra.mxu0 %v136
    %227 = vmatpush.msra.mxu0 %v135
    %228 = vmatpush.msra.mxu0 %v134
    %229 = vmatmul.f32.gmra.mxu0 %v211
    %v230 = vpop.f32.mrf.mxu0
    %v231 = vadd.f32 0.0, %v230
    %232 = vdwg.mxu0
    %v233 = vadd.f32 %v122, %v231
    %v234 = vxor.u32 %v233, 2147483648
    %v235 = vmul.f32 %v234, 1.442695
    %v236 = vpow.pop %v235
    %v237 = vadd.f32 %v236, 1.0
    %v238 = vrcp.pop %v237
    %v239 = vmul.f32 %v237, %v238
    %v240 = vsub.f32 1.0, %v239
    %v241 = vmul.f32 %v238, %v240
    %v242 = vadd.f32 %v238, %v241
    %vm243 = vweird.f32 %v237
    %vm244 = vweird.f32 %v238
    %vm245 = vmor %vm243, %vm244
    %v246 = vsel %vm245, %v238, %v242
    %v247 = vand.u32 2147483647, %v237
    %vm248 = vcmp.eq.f32.partialorder %v247, 8.507059e+37
    %v249 = vand.u32 %v237, 2147483648
    %v250 = vor.u32 1.1754944e-38, %v249
    %v251 = vsel %vm248, %v250, %v246
    %v252 = vmul.f32 1.0, %v251
    %v253 = vtanh.pop %v233
    %v254 = vmul.f32 %v252, %v199
    %256 = vrot.lane.b32.xlu0 %v253, 64
    %v257 = vpop.permute.xlu0 %256
    %v259 = vmul.f32 %v252, %v257
    %261 = vrot.lane.b32.xlu0 %v259, 32
    %v262 = vpop.permute.xlu0 %261
    %v264 = vadd.f32 %v254, %v262
    %v265 = vtanh.pop %v264
    %267 = vrot.lane.b32.xlu0 %v265, 64
    %v268 = vpop.permute.xlu0 %267
    %v270 = vmul.f32 %v252, %v268
    %272 = vst [vmem:[#allocation1] ss:$4 sm:$0xff] %v270
    %v273 = vld.sshfl [vmem:[#allocation1] sm:$0xff pattern:$0x73625140]
    %274 = vrot.lane.b32.xlu0 %v273, 32
    %v275 = vpop.permute.xlu0 %274
    %v276 = vsel %vm140, %v275, 0
    %278 = vmatpush.msra.mxu0 0.0
    %279 = vmatpush.msra.mxu0 0.0
    %280 = vmatpush.msra.mxu0 0.0
    %281 = vmatpush.msra.mxu0 0.0
    %282 = vmatpush.msra.mxu0 0.0
    %283 = vmatpush.msra.mxu0 0.0
    %284 = vmatpush.msra.mxu0 0.0
    %285 = vmatpush.msra.mxu0 0.0
    %286 = vmatpush.msra.mxu0 0.0
    %287 = vmatpush.msra.mxu0 0.0
    %288 = vmatpush.msra.mxu0 0.0
    %289 = vmatpush.msra.mxu0 0.0
    %290 = vmatpush.msra.mxu0 %v137
    %291 = vmatpush.msra.mxu0 %v136
    %292 = vmatpush.msra.mxu0 %v135
    %293 = vmatpush.msra.mxu0 %v134
    %294 = vmatmul.f32.gmra.mxu0 %v276
    %v295 = vpop.f32.mrf.mxu0
    %v296 = vadd.f32 0.0, %v295
    %297 = vdwg.mxu0
    %v298 = vadd.f32 %v123, %v296
    %v299 = vxor.u32 %v298, 2147483648
    %v300 = vmul.f32 %v299, 1.442695
    %v301 = vpow.pop %v300
    %v302 = vadd.f32 %v301, 1.0
    %v303 = vrcp.pop %v302
    %v304 = vmul.f32 %v302, %v303
    %v305 = vsub.f32 1.0, %v304
    %v306 = vmul.f32 %v303, %v305
    %v307 = vadd.f32 %v303, %v306
    %vm308 = vweird.f32 %v302
    %vm309 = vweird.f32 %v303
    %vm310 = vmor %vm308, %vm309
    %v311 = vsel %vm310, %v303, %v307
    %v312 = vand.u32 2147483647, %v302
    %vm313 = vcmp.eq.f32.partialorder %v312, 8.507059e+37
    %v314 = vand.u32 %v302, 2147483648
    %v315 = vor.u32 1.1754944e-38, %v314
    %v316 = vsel %vm313, %v315, %v311
    %v317 = vmul.f32 1.0, %v316
    %v318 = vtanh.pop %v298
    %v319 = vmul.f32 %v317, %v264
    %321 = vrot.lane.b32.xlu0 %v318, 64
    %v322 = vpop.permute.xlu0 %321
    %v324 = vmul.f32 %v317, %v322
    %326 = vrot.lane.b32.xlu0 %v324, 32
    %v327 = vpop.permute.xlu0 %326
    %v329 = vadd.f32 %v319, %v327
    %v330 = vtanh.pop %v329
    %332 = vrot.lane.b32.xlu0 %v330, 64
    %v333 = vpop.permute.xlu0 %332
    %v335 = vmul.f32 %v317, %v333
    %337 = vst [vmem:[#allocation1] ss:$4 sm:$0xff] %v335
    %v338 = vld.sshfl [vmem:[#allocation1] sm:$0xff pattern:$0x73625140]
    %339 = vrot.lane.b32.xlu0 %v338, 32
    %v340 = vpop.permute.xlu0 %339
    %v341 = vsel %vm140, %v340, 0
    %343 = vmatpush.msra.mxu0 0.0
    %344 = vmatpush.msra.mxu0 0.0
    %345 = vmatpush.msra.mxu0 0.0
    %346 = vmatpush.msra.mxu0 0.0
    %347 = vmatpush.msra.mxu0 0.0
    %348 = vmatpush.msra.mxu0 0.0
    %349 = vmatpush.msra.mxu0 0.0
    %350 = vmatpush.msra.mxu0 0.0
    %351 = vmatpush.msra.mxu0 0.0
    %352 = vmatpush.msra.mxu0 0.0
    %353 = vmatpush.msra.mxu0 0.0
    %354 = vmatpush.msra.mxu0 0.0
    %355 = vmatpush.msra.mxu0 %v137
    %356 = vmatpush.msra.mxu0 %v136
    %357 = vmatpush.msra.mxu0 %v135
    %358 = vmatpush.msra.mxu0 %v134
    %359 = vmatmul.f32.gmra.mxu0 %v341
    %v360 = vpop.f32.mrf.mxu0
    %v361 = vadd.f32 0.0, %v360
    %362 = vdwg.mxu0
    %v363 = vadd.f32 %v124, %v361
    %v364 = vxor.u32 %v363, 2147483648
    %v365 = vmul.f32 %v364, 1.442695
    %v366 = vpow.pop %v365
    %v367 = vadd.f32 %v366, 1.0
    %v368 = vrcp.pop %v367
    %v369 = vmul.f32 %v367, %v368
    %v370 = vsub.f32 1.0, %v369
    %v371 = vmul.f32 %v368, %v370
    %v372 = vadd.f32 %v368, %v371
    %vm373 = vweird.f32 %v367
    %vm374 = vweird.f32 %v368
    %vm375 = vmor %vm373, %vm374
    %v376 = vsel %vm375, %v368, %v372
    %v377 = vand.u32 2147483647, %v367
    %vm378 = vcmp.eq.f32.partialorder %v377, 8.507059e+37
    %v379 = vand.u32 %v367, 2147483648
    %v380 = vor.u32 1.1754944e-38, %v379
    %v381 = vsel %vm378, %v380, %v376
    %v382 = vmul.f32 1.0, %v381
    %v383 = vtanh.pop %v363
    %v384 = vmul.f32 %v382, %v329
    %386 = vrot.lane.b32.xlu0 %v383, 64
    %v387 = vpop.permute.xlu0 %386
    %v389 = vmul.f32 %v382, %v387
    %391 = vrot.lane.b32.xlu0 %v389, 32
    %v392 = vpop.permute.xlu0 %391
    %v394 = vadd.f32 %v384, %v392
    %v395 = vtanh.pop %v394
    %397 = vrot.lane.b32.xlu0 %v395, 64
    %v398 = vpop.permute.xlu0 %397
    %v400 = vmul.f32 %v382, %v398
    %402 = vst [vmem:[#allocation1] ss:$4 sm:$0xff] %v400
    %v403 = vld.sshfl [vmem:[#allocation1] sm:$0xff pattern:$0x73625140]
    %404 = vrot.lane.b32.xlu0 %v403, 32
    %v405 = vpop.permute.xlu0 %404
    %v406 = vsel %vm140, %v405, 0
    %408 = vmatpush.msra.mxu0 0.0
    %409 = vmatpush.msra.mxu0 0.0
    %410 = vmatpush.msra.mxu0 0.0
    %411 = vmatpush.msra.mxu0 0.0
    %412 = vmatpush.msra.mxu0 0.0
    %413 = vmatpush.msra.mxu0 0.0
    %414 = vmatpush.msra.mxu0 0.0
    %415 = vmatpush.msra.mxu0 0.0
    %416 = vmatpush.msra.mxu0 0.0
    %417 = vmatpush.msra.mxu0 0.0
    %418 = vmatpush.msra.mxu0 0.0
    %419 = vmatpush.msra.mxu0 0.0
    %420 = vmatpush.msra.mxu0 %v137
    %421 = vmatpush.msra.mxu0 %v136
    %422 = vmatpush.msra.mxu0 %v135
    %423 = vmatpush.msra.mxu0 %v134
    %424 = vmatmul.f32.gmra.mxu0 %v406
    %v425 = vpop.f32.mrf.mxu0
    %v426 = vadd.f32 0.0, %v425
    %427 = vdwg.mxu0
    %v428 = vadd.f32 %v118, %v426
    %v429 = vxor.u32 %v428, 2147483648
    %v430 = vmul.f32 %v429, 1.442695
    %v431 = vpow.pop %v430
    %v432 = vadd.f32 %v431, 1.0
    %v433 = vrcp.pop %v432
    %v434 = vmul.f32 %v432, %v433
    %v435 = vsub.f32 1.0, %v434
    %v436 = vmul.f32 %v433, %v435
    %v437 = vadd.f32 %v433, %v436
    %vm438 = vweird.f32 %v432
    %vm439 = vweird.f32 %v433
    %vm440 = vmor %vm438, %vm439
    %v441 = vsel %vm440, %v433, %v437
    %v442 = vand.u32 2147483647, %v432
    %vm443 = vcmp.eq.f32.partialorder %v442, 8.507059e+37
    %v444 = vand.u32 %v432, 2147483648
    %v445 = vor.u32 1.1754944e-38, %v444
    %v446 = vsel %vm443, %v445, %v441
    %v447 = vmul.f32 1.0, %v446
    %v448 = vtanh.pop %v428
    %v449 = vmul.f32 %v447, %v394
    %451 = vrot.lane.b32.xlu0 %v448, 64
    %v452 = vpop.permute.xlu0 %451
    %v454 = vmul.f32 %v447, %v452
    %456 = vrot.lane.b32.xlu0 %v454, 32
    %v457 = vpop.permute.xlu0 %456
    %v459 = vadd.f32 %v449, %v457
    %v460 = vtanh.pop %v459
    %462 = vrot.lane.b32.xlu0 %v460, 64
    %v463 = vpop.permute.xlu0 %462
    %v465 = vmul.f32 %v447, %v463
    %467 = vst [vmem:[#allocation1] ss:$4 sm:$0xff] %v465
    %v468 = vld.sshfl [vmem:[#allocation1] sm:$0xff pattern:$0x73625140]
    %469 = vrot.lane.b32.xlu0 %v468, 32
    %v470 = vpop.permute.xlu0 %469
    %v471 = vsel %vm140, %v470, 0
    %473 = vmatpush.msra.mxu0 0.0
    %474 = vmatpush.msra.mxu0 0.0
    %475 = vmatpush.msra.mxu0 0.0
    %476 = vmatpush.msra.mxu0 0.0
    %477 = vmatpush.msra.mxu0 0.0
    %478 = vmatpush.msra.mxu0 0.0
    %479 = vmatpush.msra.mxu0 0.0
    %480 = vmatpush.msra.mxu0 0.0
    %481 = vmatpush.msra.mxu0 0.0
    %482 = vmatpush.msra.mxu0 0.0
    %483 = vmatpush.msra.mxu0 0.0
    %484 = vmatpush.msra.mxu0 0.0
    %485 = vmatpush.msra.mxu0 %v137
    %486 = vmatpush.msra.mxu0 %v136
    %487 = vmatpush.msra.mxu0 %v135
    %488 = vmatpush.msra.mxu0 %v134
    %489 = vmatmul.f32.gmra.mxu0 %v471
    %v490 = vpop.f32.mrf.mxu0
    %v491 = vadd.f32 0.0, %v490
    %492 = vdwg.mxu0
    %v493 = vadd.f32 %v125, %v491
    %v494 = vxor.u32 %v493, 2147483648
    %v495 = vmul.f32 %v494, 1.442695
    %v496 = vpow.pop %v495
    %v497 = vadd.f32 %v496, 1.0
    %v498 = vrcp.pop %v497
    %v499 = vmul.f32 %v497, %v498
    %v500 = vsub.f32 1.0, %v499
    %v501 = vmul.f32 %v498, %v500
    %v502 = vadd.f32 %v498, %v501
    %vm503 = vweird.f32 %v497
    %vm504 = vweird.f32 %v498
    %vm505 = vmor %vm503, %vm504
    %v506 = vsel %vm505, %v498, %v502
    %v507 = vand.u32 2147483647, %v497
    %vm508 = vcmp.eq.f32.partialorder %v507, 8.507059e+37
    %v509 = vand.u32 %v497, 2147483648
    %v510 = vor.u32 1.1754944e-38, %v509
    %v511 = vsel %vm508, %v510, %v506
    %v512 = vmul.f32 1.0, %v511
    %v513 = vtanh.pop %v493
    %v514 = vmul.f32 %v512, %v459
    %516 = vrot.lane.b32.xlu0 %v513, 64
    %v517 = vpop.permute.xlu0 %516
    %v519 = vmul.f32 %v512, %v517
    %521 = vrot.lane.b32.xlu0 %v519, 32
    %v522 = vpop.permute.xlu0 %521
    %v524 = vadd.f32 %v514, %v522
    %v525 = vtanh.pop %v524
    %527 = vrot.lane.b32.xlu0 %v525, 64
    %v528 = vpop.permute.xlu0 %527
    %v530 = vmul.f32 %v512, %v528
    %532 = vst [vmem:[#allocation1] ss:$4 sm:$0xff] %v530
    %v533 = vld.sshfl [vmem:[#allocation1] sm:$0xff pattern:$0x73625140]
    %534 = vrot.lane.b32.xlu0 %v533, 32
    %v535 = vpop.permute.xlu0 %534
    %v536 = vsel %vm140, %v535, 0
    %538 = vmatpush.msra.mxu0 0.0
    %539 = vmatpush.msra.mxu0 0.0
    %540 = vmatpush.msra.mxu0 0.0
    %541 = vmatpush.msra.mxu0 0.0
    %542 = vmatpush.msra.mxu0 0.0
    %543 = vmatpush.msra.mxu0 0.0
    %544 = vmatpush.msra.mxu0 0.0
    %545 = vmatpush.msra.mxu0 0.0
    %546 = vmatpush.msra.mxu0 0.0
    %547 = vmatpush.msra.mxu0 0.0
    %548 = vmatpush.msra.mxu0 0.0
    %549 = vmatpush.msra.mxu0 0.0
    %550 = vmatpush.msra.mxu0 %v137
    %551 = vmatpush.msra.mxu0 %v136
    %552 = vmatpush.msra.mxu0 %v135
    %553 = vmatpush.msra.mxu0 %v134
    %554 = vmatmul.f32.gmra.mxu0 %v536
    %v555 = vpop.f32.mrf.mxu0
    %v556 = vadd.f32 0.0, %v555
    %557 = vdwg.mxu0
    %v558 = vadd.f32 %v126, %v556
    %v559 = vxor.u32 %v558, 2147483648
    %v560 = vmul.f32 %v559, 1.442695
    %v561 = vpow.pop %v560
    %v562 = vadd.f32 %v561, 1.0
    %v563 = vrcp.pop %v562
    %v564 = vmul.f32 %v562, %v563
    %v565 = vsub.f32 1.0, %v564
    %v566 = vmul.f32 %v563, %v565
    %v567 = vadd.f32 %v563, %v566
    %vm568 = vweird.f32 %v562
    %vm569 = vweird.f32 %v563
    %vm570 = vmor %vm568, %vm569
    %v571 = vsel %vm570, %v563, %v567
    %v572 = vand.u32 2147483647, %v562
    %vm573 = vcmp.eq.f32.partialorder %v572, 8.507059e+37
    %v574 = vand.u32 %v562, 2147483648
    %v575 = vor.u32 1.1754944e-38, %v574
    %v576 = vsel %vm573, %v575, %v571
    %v577 = vmul.f32 1.0, %v576
    %v578 = vtanh.pop %v558
    %v579 = vmul.f32 %v577, %v524
    %581 = vrot.lane.b32.xlu0 %v578, 64
    %v582 = vpop.permute.xlu0 %581
    %v584 = vmul.f32 %v577, %v582
    %586 = vrot.lane.b32.xlu0 %v584, 32
    %v587 = vpop.permute.xlu0 %586
    %v589 = vadd.f32 %v579, %v587
    %v590 = vtanh.pop %v589
    %592 = vrot.lane.b32.xlu0 %v590, 64
    %v593 = vpop.permute.xlu0 %592
    %v595 = vmul.f32 %v577, %v593
    %597 = vst [vmem:[#allocation1] ss:$4 sm:$0xff] %v595
    %v598 = vld.sshfl [vmem:[#allocation1] sm:$0xff pattern:$0x73625140]
    %599 = vrot.lane.b32.xlu0 %v598, 32
    %v600 = vpop.permute.xlu0 %599
    %v601 = vsel %vm140, %v600, 0
    %603 = vmatpush.msra.mxu0 0.0
    %604 = vmatpush.msra.mxu0 0.0
    %605 = vmatpush.msra.mxu0 0.0
    %606 = vmatpush.msra.mxu0 0.0
    %607 = vmatpush.msra.mxu0 0.0
    %608 = vmatpush.msra.mxu0 0.0
    %609 = vmatpush.msra.mxu0 0.0
    %610 = vmatpush.msra.mxu0 0.0
    %611 = vmatpush.msra.mxu0 0.0
    %612 = vmatpush.msra.mxu0 0.0
    %613 = vmatpush.msra.mxu0 0.0
    %614 = vmatpush.msra.mxu0 0.0
    %615 = vmatpush.msra.mxu0 %v137
    %616 = vmatpush.msra.mxu0 %v136
    %617 = vmatpush.msra.mxu0 %v135
    %618 = vmatpush.msra.mxu0 %v134
    %619 = vmatmul.f32.gmra.mxu0 %v601
    %v620 = vpop.f32.mrf.mxu0
    %v621 = vadd.f32 0.0, %v620
    %622 = vdwg.mxu0
    %v623 = vadd.f32 %v127, %v621
    %v624 = vxor.u32 %v623, 2147483648
    %v625 = vmul.f32 %v624, 1.442695
    %v626 = vpow.pop %v625
    %v627 = vadd.f32 %v626, 1.0
    %v628 = vrcp.pop %v627
    %v629 = vmul.f32 %v627, %v628
    %v630 = vsub.f32 1.0, %v629
    %v631 = vmul.f32 %v628, %v630
    %v632 = vadd.f32 %v628, %v631
    %vm633 = vweird.f32 %v627
    %vm634 = vweird.f32 %v628
    %vm635 = vmor %vm633, %vm634
    %v636 = vsel %vm635, %v628, %v632
    %v637 = vand.u32 2147483647, %v627
    %vm638 = vcmp.eq.f32.partialorder %v637, 8.507059e+37
    %v639 = vand.u32 %v627, 2147483648
    %v640 = vor.u32 1.1754944e-38, %v639
    %v641 = vsel %vm638, %v640, %v636
    %v642 = vmul.f32 1.0, %v641
    %v643 = vtanh.pop %v623
    %v644 = vmul.f32 %v642, %v589
    %646 = vrot.lane.b32.xlu0 %v643, 64
    %v647 = vpop.permute.xlu0 %646
    %v649 = vmul.f32 %v642, %v647
    %651 = vrot.lane.b32.xlu0 %v649, 32
    %v652 = vpop.permute.xlu0 %651
    %v654 = vadd.f32 %v644, %v652
    %v655 = vtanh.pop %v654
    %657 = vrot.lane.b32.xlu0 %v655, 64
    %v658 = vpop.permute.xlu0 %657
    %v660 = vmul.f32 %v642, %v658
    %v661 = vld [vmem:[%s6] sm:$0xff]
    %v662 = vld [vmem:[%s6 + $0x8] sm:$0xff]
    %v663 = vld [vmem:[%s6 + $0x10] sm:$0xff]
    %v664 = vld [vmem:[%s6 + $0x18] sm:$0xff]
    %v665 = vld [vmem:[%s6 + $0x20] sm:$0xff]
    %v666 = vld [vmem:[%s6 + $0x28] sm:$0xff]
    %v667 = vld [vmem:[%s6 + $0x30] sm:$0xff]
    %v668 = vld [vmem:[%s6 + $0x38] sm:$0xff]
    %v669 = vld [vmem:[%s6 + $0x40] sm:$0xff]
    %v670 = vld [vmem:[%s6 + $0x48] sm:$0xff]
    %v671 = vld [vmem:[%s6 + $0x50] sm:$0xff]
    %v672 = vld [vmem:[%s6 + $0x58] sm:$0xff]
    %v673 = vld [vmem:[%s6 + $0x60] sm:$0xff]
    %v674 = vld [vmem:[%s6 + $0x68] sm:$0xff]
    %v675 = vld [vmem:[%s6 + $0x70] sm:$0xff]
    %v676 = vld [vmem:[%s6 + $0x78] sm:$0xff]
    %v677 = vld [vmem:[%s7] sm:$0xff]
    %v678 = vld [vmem:[%s7 + $0x8] sm:$0xff]
    %v679 = vld [vmem:[%s7 + $0x10] sm:$0xff]
    %v680 = vld [vmem:[%s7 + $0x18] sm:$0xff]
    %v681 = vld [vmem:[%s8] sm:$0x1]
    %v683 = vperm.slane %v681, 0
    %v686 = vsel %vm140, %v661, 0
    %v689 = vsel %vm140, %v662, 0
    %v692 = vsel %vm140, %v663, 0
    %v695 = vsel %vm140, %v664, 0
    %v698 = vsel %vm140, %v665, 0
    %v701 = vsel %vm140, %v666, 0
    %v704 = vsel %vm140, %v667, 0
    %v707 = vsel %vm140, %v668, 0
    %v710 = vsel %vm140, %v669, 0
    %v713 = vsel %vm140, %v670, 0
    %v716 = vsel %vm140, %v671, 0
    %v719 = vsel %vm140, %v672, 0
    %v722 = vsel %vm140, %v673, 0
    %v725 = vsel %vm140, %v674, 0
    %v728 = vsel %vm140, %v675, 0
    %v731 = vsel %vm140, %v676, 0
    %733 = vmatpush.msra.mxu0 0.0
    %734 = vmatpush.msra.mxu0 0.0
    %735 = vmatpush.msra.mxu0 0.0
    %736 = vmatpush.msra.mxu0 0.0
    %737 = vmatpush.msra.mxu0 0.0
    %738 = vmatpush.msra.mxu0 0.0
    %739 = vmatpush.msra.mxu0 0.0
    %740 = vmatpush.msra.mxu0 0.0
    %741 = vmatpush.msra.mxu0 0.0
    %742 = vmatpush.msra.mxu0 0.0
    %743 = vmatpush.msra.mxu0 0.0
    %744 = vmatpush.msra.mxu0 0.0
    %745 = vmatpush.msra.mxu0 %v680
    %746 = vmatpush.msra.mxu0 %v679
    %747 = vmatpush.msra.mxu0 %v678
    %748 = vmatpush.msra.mxu0 %v677
    %749 = vmatmul.f32.gmra.mxu0 %v686
    %v750 = vpop.f32.mrf.mxu0
    %v751 = vadd.f32 %v683, %v750
    %752 = vmatmul.f32.gmra.mxu0 %v689
    %v753 = vpop.f32.mrf.mxu0
    %v754 = vadd.f32 %v683, %v753
    %755 = vmatmul.f32.gmra.mxu0 %v692
    %v756 = vpop.f32.mrf.mxu0
    %v757 = vadd.f32 %v683, %v756
    %758 = vmatmul.f32.gmra.mxu0 %v695
    %v759 = vpop.f32.mrf.mxu0
    %v760 = vadd.f32 %v683, %v759
    %761 = vmatmul.f32.gmra.mxu0 %v698
    %v762 = vpop.f32.mrf.mxu0
    %v763 = vadd.f32 %v683, %v762
    %764 = vmatmul.f32.gmra.mxu0 %v701
    %v765 = vpop.f32.mrf.mxu0
    %v766 = vadd.f32 %v683, %v765
    %767 = vmatmul.f32.gmra.mxu0 %v704
    %v768 = vpop.f32.mrf.mxu0
    %v769 = vadd.f32 %v683, %v768
    %770 = vmatmul.f32.gmra.mxu0 %v707
    %v771 = vpop.f32.mrf.mxu0
    %v772 = vadd.f32 %v683, %v771
    %773 = vmatmul.f32.gmra.mxu0 %v710
    %v774 = vpop.f32.mrf.mxu0
    %v775 = vadd.f32 %v683, %v774
    %776 = vmatmul.f32.gmra.mxu0 %v713
    %v777 = vpop.f32.mrf.mxu0
    %v778 = vadd.f32 %v683, %v777
    %779 = vmatmul.f32.gmra.mxu0 %v716
    %v780 = vpop.f32.mrf.mxu0
    %v781 = vadd.f32 %v683, %v780
    %782 = vmatmul.f32.gmra.mxu0 %v719
    %v783 = vpop.f32.mrf.mxu0
    %v784 = vadd.f32 %v683, %v783
    %785 = vmatmul.f32.gmra.mxu0 %v722
    %v786 = vpop.f32.mrf.mxu0
    %v787 = vadd.f32 %v683, %v786
    %788 = vmatmul.f32.gmra.mxu0 %v725
    %v789 = vpop.f32.mrf.mxu0
    %v790 = vadd.f32 %v683, %v789
    %791 = vmatmul.f32.gmra.mxu0 %v728
    %v792 = vpop.f32.mrf.mxu0
    %v793 = vadd.f32 %v683, %v792
    %794 = vmatmul.f32.gmra.mxu0 %v731
    %v795 = vpop.f32.mrf.mxu0
    %v796 = vadd.f32 %v683, %v795
    %797 = vdwg.mxu0
    %v798 = vld [vmem:[%s11] sm:$0x1]
    %v800 = vperm.slane %v798, 0
    %v802 = vld [vmem:[#allocation2] sm:$0x1]
    %v803 = vld [vmem:[%s9] sm:$0xff]
    %v804 = vld [vmem:[%s9 + $0x8] sm:$0xff]
    %v805 = vld [vmem:[%s9 + $0x10] sm:$0xff]
    %v806 = vld [vmem:[%s9 + $0x18] sm:$0xff]
    %v807 = vld [vmem:[%s10] sm:$0x1]
    %v809 = vperm.slane %v807, 0
    %812 = vst [vmem:[#allocation1] ss:$4 sm:$0xff] %v660
    %v813 = vld.sshfl [vmem:[#allocation1] sm:$0xff pattern:$0x73625140]
    %814 = vrot.lane.b32.xlu0 %v813, 32
    %v815 = vpop.permute.xlu0 %814
    %v816 = vsel %vm140, %v815, 0
    %818 = vmatpush.msra.mxu0 0.0
    %819 = vmatpush.msra.mxu0 0.0
    %820 = vmatpush.msra.mxu0 0.0
    %821 = vmatpush.msra.mxu0 0.0
    %822 = vmatpush.msra.mxu0 0.0
    %823 = vmatpush.msra.mxu0 0.0
    %824 = vmatpush.msra.mxu0 0.0
    %825 = vmatpush.msra.mxu0 0.0
    %826 = vmatpush.msra.mxu0 0.0
    %827 = vmatpush.msra.mxu0 0.0
    %828 = vmatpush.msra.mxu0 0.0
    %829 = vmatpush.msra.mxu0 0.0
    %830 = vmatpush.msra.mxu0 %v806
    %831 = vmatpush.msra.mxu0 %v805
    %832 = vmatpush.msra.mxu0 %v804
    %833 = vmatpush.msra.mxu0 %v803
    %834 = vmatmul.f32.gmra.mxu0 %v816
    %v835 = vpop.f32.mrf.mxu0
    %v836 = vadd.f32 %v809, %v835
    %837 = vdwg.mxu0
    %v839 = vrot.slane %v836, 1
    %v840 = vperm.slane %v836, 0
    %v841 = vperm.slane %v839, 0
    %v844 = vadd.f32 %v751, %v840
    %v845 = vadd.f32 %v754, %v840
    %v846 = vadd.f32 %v757, %v840
    %v847 = vadd.f32 %v760, %v840
    %v848 = vadd.f32 %v763, %v840
    %v849 = vadd.f32 %v766, %v840
    %v850 = vadd.f32 %v769, %v840
    %v851 = vadd.f32 %v772, %v840
    %v852 = vadd.f32 %v775, %v841
    %v853 = vadd.f32 %v778, %v841
    %v854 = vadd.f32 %v781, %v841
    %v855 = vadd.f32 %v784, %v841
    %v856 = vadd.f32 %v787, %v841
    %v857 = vadd.f32 %v790, %v841
    %v858 = vadd.f32 %v793, %v841
    %v859 = vadd.f32 %v796, %v841
    %v860 = vtanh.pop %v844
    %v861 = vtanh.pop %v845
    %v862 = vtanh.pop %v846
    %v863 = vtanh.pop %v847
    %v864 = vtanh.pop %v848
    %v865 = vtanh.pop %v849
    %v866 = vtanh.pop %v850
    %v867 = vtanh.pop %v851
    %v868 = vtanh.pop %v852
    %v869 = vtanh.pop %v853
    %v870 = vtanh.pop %v854
    %v871 = vtanh.pop %v855
    %v872 = vtanh.pop %v856
    %v873 = vtanh.pop %v857
    %v874 = vtanh.pop %v858
    %v875 = vtanh.pop %v859
    %v876 = vmul.f32 %v860, %v800
    %v877 = vmul.f32 %v861, %v800
    %v878 = vmul.f32 %v862, %v800
    %v879 = vmul.f32 %v863, %v800
    %v880 = vmul.f32 %v864, %v800
    %v881 = vmul.f32 %v865, %v800
    %v882 = vmul.f32 %v866, %v800
    %v883 = vmul.f32 %v867, %v800
    %v884 = vmul.f32 %v868, %v800
    %v885 = vmul.f32 %v869, %v800
    %v886 = vmul.f32 %v870, %v800
    %v887 = vmul.f32 %v871, %v800
    %v888 = vmul.f32 %v872, %v800
    %v889 = vmul.f32 %v873, %v800
    %v890 = vmul.f32 %v874, %v800
    %v891 = vmul.f32 %v875, %v800
    %v892 = vsel %vm92, %v876, 0.0
    %893 = vadd.xlane.f32.xlu0 %v892
    %v894 = vpop.xlane.xlu0 %893
    %v895 = vsel %vm92, %v877, 0.0
    %896 = vadd.xlane.f32.xlu0 %v895
    %v897 = vpop.xlane.xlu0 %896
    %v898 = vsel %vm92, %v878, 0.0
    %899 = vadd.xlane.f32.xlu0 %v898
    %v900 = vpop.xlane.xlu0 %899
    %v901 = vsel %vm92, %v879, 0.0
    %902 = vadd.xlane.f32.xlu0 %v901
    %v903 = vpop.xlane.xlu0 %902
    %v904 = vsel %vm92, %v880, 0.0
    %905 = vadd.xlane.f32.xlu0 %v904
    %v906 = vpop.xlane.xlu0 %905
    %v907 = vsel %vm92, %v881, 0.0
    %908 = vadd.xlane.f32.xlu0 %v907
    %v909 = vpop.xlane.xlu0 %908
    %v910 = vsel %vm92, %v882, 0.0
    %911 = vadd.xlane.f32.xlu0 %v910
    %v912 = vpop.xlane.xlu0 %911
    %v913 = vsel %vm92, %v883, 0.0
    %914 = vadd.xlane.f32.xlu0 %v913
    %v915 = vpop.xlane.xlu0 %914
    %v916 = vsel %vm92, %v884, 0.0
    %917 = vadd.xlane.f32.xlu0 %v916
    %v918 = vpop.xlane.xlu0 %917
    %v919 = vsel %vm92, %v885, 0.0
    %920 = vadd.xlane.f32.xlu0 %v919
    %v921 = vpop.xlane.xlu0 %920
    %v922 = vsel %vm92, %v886, 0.0
    %923 = vadd.xlane.f32.xlu0 %v922
    %v924 = vpop.xlane.xlu0 %923
    %v925 = vsel %vm92, %v887, 0.0
    %926 = vadd.xlane.f32.xlu0 %v925
    %v927 = vpop.xlane.xlu0 %926
    %v928 = vsel %vm92, %v888, 0.0
    %929 = vadd.xlane.f32.xlu0 %v928
    %v930 = vpop.xlane.xlu0 %929
    %v931 = vsel %vm92, %v889, 0.0
    %932 = vadd.xlane.f32.xlu0 %v931
    %v933 = vpop.xlane.xlu0 %932
    %v934 = vsel %vm92, %v890, 0.0
    %935 = vadd.xlane.f32.xlu0 %v934
    %v936 = vpop.xlane.xlu0 %935
    %v937 = vsel %vm92, %v891, 0.0
    %938 = vadd.xlane.f32.xlu0 %v937
    %v939 = vpop.xlane.xlu0 %938
    %v941 = vperm.slane %v802, 0
    %942 = vset.pattern.permute.xlu0 0
    %943 = vperm.xlu0 %942, %v941
    %v944 = vpop.permute.xlu0 %943
    %v946 = vadd.f32 %v894, %v944
    %v947 = vadd.f32 %v897, %v944
    %v948 = vadd.f32 %v900, %v944
    %v949 = vadd.f32 %v903, %v944
    %v950 = vadd.f32 %v906, %v944
    %v951 = vadd.f32 %v909, %v944
    %v952 = vadd.f32 %v912, %v944
    %v953 = vadd.f32 %v915, %v944
    %v954 = vadd.f32 %v918, %v944
    %v955 = vadd.f32 %v921, %v944
    %v956 = vadd.f32 %v924, %v944
    %v957 = vadd.f32 %v927, %v944
    %v958 = vadd.f32 %v930, %v944
    %v959 = vadd.f32 %v933, %v944
    %v960 = vadd.f32 %v936, %v944
    %v961 = vadd.f32 %v939, %v944
    %v978 = vlaneseq
    %v979 = vand.u32 %v978, 127
    %v980 = vperm.slane %v946, %v979
    %v981 = vadd.s32 %v979, 4294967288
    %v982 = vperm.slane %v947, %v981
    %vm983 = vcmask 130112
    %v984 = vsel %vm983, %v982, %v980
    %v985 = vadd.s32 %v979, 4294967280
    %v986 = vperm.slane %v948, %v985
    %vm987 = vcmask 195712
    %v988 = vsel %vm987, %v986, %v984
    %v989 = vadd.s32 %v979, 4294967272
    %v990 = vperm.slane %v949, %v989
    %vm991 = vcmask 261312
    %v992 = vsel %vm991, %v990, %v988
    %v993 = vadd.s32 %v979, 4294967264
    %v994 = vperm.slane %v950, %v993
    %vm995 = vcmask 326912
    %v996 = vsel %vm995, %v994, %v992
    %v997 = vadd.s32 %v979, 4294967256
    %v998 = vperm.slane %v951, %v997
    %vm999 = vcmask 392512
    %v1000 = vsel %vm999, %v998, %v996
    %v1001 = vadd.s32 %v979, 4294967248
    %v1002 = vperm.slane %v952, %v1001
    %vm1003 = vcmask 458112
    %v1004 = vsel %vm1003, %v1002, %v1000
    %v1005 = vadd.s32 %v979, 4294967240
    %v1006 = vperm.slane %v953, %v1005
    %vm1007 = vcmask 523712
    %v1008 = vsel %vm1007, %v1006, %v1004
    %v1009 = vperm.slane %v954, %v979
    %v1010 = vperm.slane %v955, %v981
    %v1011 = vsel %vm983, %v1010, %v1009
    %v1012 = vperm.slane %v956, %v985
    %v1013 = vsel %vm987, %v1012, %v1011
    %v1014 = vperm.slane %v957, %v989
    %v1015 = vsel %vm991, %v1014, %v1013
    %v1016 = vperm.slane %v958, %v993
    %v1017 = vsel %vm995, %v1016, %v1015
    %v1018 = vperm.slane %v959, %v997
    %v1019 = vsel %vm999, %v1018, %v1017
    %v1020 = vperm.slane %v960, %v1001
    %v1021 = vsel %vm1003, %v1020, %v1019
    %v1022 = vperm.slane %v961, %v1005
    %v1023 = vsel %vm1007, %v1022, %v1021
    %vm1024 = vcmask 1041409
    %v1025 = vsel %vm1024, %v1023, %v1008
    %vm1027 = vcmask 517120
    %v1028 = vsel %vm1027, %v1025, -inf
    %1029 = vmax.xlane.f32.xlu0 %v1028
    %v1030 = vpop.xlane.xlu0 %1029
    %v1032 = vperm.slane %v1030, 0
    %v1033 = vperm.slane %v1030, 1
    %v1036 = vsub.f32 %v946, %v1032
    %v1037 = vsub.f32 %v947, %v1032
    %v1038 = vsub.f32 %v948, %v1032
    %v1039 = vsub.f32 %v949, %v1032
    %v1040 = vsub.f32 %v950, %v1032
    %v1041 = vsub.f32 %v951, %v1032
    %v1042 = vsub.f32 %v952, %v1032
    %v1043 = vsub.f32 %v953, %v1032
    %v1044 = vsub.f32 %v954, %v1033
    %v1045 = vsub.f32 %v955, %v1033
    %v1046 = vsub.f32 %v956, %v1033
    %v1047 = vsub.f32 %v957, %v1033
    %v1048 = vsub.f32 %v958, %v1033
    %v1049 = vsub.f32 %v959, %v1033
    %v1050 = vsub.f32 %v960, %v1033
    %v1051 = vsub.f32 %v961, %v1033
    %v1052 = vmul.f32 %v1036, 1.442695
    %v1053 = vpow.pop %v1052
    %v1054 = vmul.f32 %v1037, 1.442695
    %v1055 = vpow.pop %v1054
    %v1056 = vmul.f32 %v1038, 1.442695
    %v1057 = vpow.pop %v1056
    %v1058 = vmul.f32 %v1039, 1.442695
    %v1059 = vpow.pop %v1058
    %v1060 = vmul.f32 %v1040, 1.442695
    %v1061 = vpow.pop %v1060
    %v1062 = vmul.f32 %v1041, 1.442695
    %v1063 = vpow.pop %v1062
    %v1064 = vmul.f32 %v1042, 1.442695
    %v1065 = vpow.pop %v1064
    %v1066 = vmul.f32 %v1043, 1.442695
    %v1067 = vpow.pop %v1066
    %v1068 = vmul.f32 %v1044, 1.442695
    %v1069 = vpow.pop %v1068
    %v1070 = vmul.f32 %v1045, 1.442695
    %v1071 = vpow.pop %v1070
    %v1072 = vmul.f32 %v1046, 1.442695
    %v1073 = vpow.pop %v1072
    %v1074 = vmul.f32 %v1047, 1.442695
    %v1075 = vpow.pop %v1074
    %v1076 = vmul.f32 %v1048, 1.442695
    %v1077 = vpow.pop %v1076
    %v1078 = vmul.f32 %v1049, 1.442695
    %v1079 = vpow.pop %v1078
    %v1080 = vmul.f32 %v1050, 1.442695
    %v1081 = vpow.pop %v1080
    %v1082 = vmul.f32 %v1051, 1.442695
    %v1083 = vpow.pop %v1082
    %1100 = vset.pattern.permute.xlu0 0
    %1101 = vperm.xlu0 %1100, %v1053
    %v1102 = vpop.permute.xlu0 %1101
    %1103 = vset.pattern.permute.xlu0 0
    %1104 = vperm.xlu0 %1103, %v1055
    %v1105 = vpop.permute.xlu0 %1104
    %1106 = vset.pattern.permute.xlu0 0
    %1107 = vperm.xlu0 %1106, %v1057
    %v1108 = vpop.permute.xlu0 %1107
    %1109 = vset.pattern.permute.xlu0 0
    %1110 = vperm.xlu0 %1109, %v1059
    %v1111 = vpop.permute.xlu0 %1110
    %1112 = vset.pattern.permute.xlu0 0
    %1113 = vperm.xlu0 %1112, %v1061
    %v1114 = vpop.permute.xlu0 %1113
    %1115 = vset.pattern.permute.xlu0 0
    %1116 = vperm.xlu0 %1115, %v1063
    %v1117 = vpop.permute.xlu0 %1116
    %1118 = vset.pattern.permute.xlu0 0
    %1119 = vperm.xlu0 %1118, %v1065
    %v1120 = vpop.permute.xlu0 %1119
    %1121 = vset.pattern.permute.xlu0 0
    %1122 = vperm.xlu0 %1121, %v1067
    %v1123 = vpop.permute.xlu0 %1122
    %1124 = vset.pattern.permute.xlu0 0
    %1125 = vperm.xlu0 %1124, %v1069
    %v1126 = vpop.permute.xlu0 %1125
    %1127 = vset.pattern.permute.xlu0 0
    %1128 = vperm.xlu0 %1127, %v1071
    %v1129 = vpop.permute.xlu0 %1128
    %1130 = vset.pattern.permute.xlu0 0
    %1131 = vperm.xlu0 %1130, %v1073
    %v1132 = vpop.permute.xlu0 %1131
    %1133 = vset.pattern.permute.xlu0 0
    %1134 = vperm.xlu0 %1133, %v1075
    %v1135 = vpop.permute.xlu0 %1134
    %1136 = vset.pattern.permute.xlu0 0
    %1137 = vperm.xlu0 %1136, %v1077
    %v1138 = vpop.permute.xlu0 %1137
    %1139 = vset.pattern.permute.xlu0 0
    %1140 = vperm.xlu0 %1139, %v1079
    %v1141 = vpop.permute.xlu0 %1140
    %1142 = vset.pattern.permute.xlu0 0
    %1143 = vperm.xlu0 %1142, %v1081
    %v1144 = vpop.permute.xlu0 %1143
    %1145 = vset.pattern.permute.xlu0 0
    %1146 = vperm.xlu0 %1145, %v1083
    %v1147 = vpop.permute.xlu0 %1146
    %v1148 = vperm.slane %v1102, %v979
    %v1149 = vperm.slane %v1105, %v981
    %v1150 = vsel %vm983, %v1149, %v1148
    %v1151 = vperm.slane %v1108, %v985
    %v1152 = vsel %vm987, %v1151, %v1150
    %v1153 = vperm.slane %v1111, %v989
    %v1154 = vsel %vm991, %v1153, %v1152
    %v1155 = vperm.slane %v1114, %v993
    %v1156 = vsel %vm995, %v1155, %v1154
    %v1157 = vperm.slane %v1117, %v997
    %v1158 = vsel %vm999, %v1157, %v1156
    %v1159 = vperm.slane %v1120, %v1001
    %v1160 = vsel %vm1003, %v1159, %v1158
    %v1161 = vperm.slane %v1123, %v1005
    %v1162 = vsel %vm1007, %v1161, %v1160
    %v1163 = vperm.slane %v1126, %v979
    %v1164 = vperm.slane %v1129, %v981
    %v1165 = vsel %vm983, %v1164, %v1163
    %v1166 = vperm.slane %v1132, %v985
    %v1167 = vsel %vm987, %v1166, %v1165
    %v1168 = vperm.slane %v1135, %v989
    %v1169 = vsel %vm991, %v1168, %v1167
    %v1170 = vperm.slane %v1138, %v993
    %v1171 = vsel %vm995, %v1170, %v1169
    %v1172 = vperm.slane %v1141, %v997
    %v1173 = vsel %vm999, %v1172, %v1171
    %v1174 = vperm.slane %v1144, %v1001
    %v1175 = vsel %vm1003, %v1174, %v1173
    %v1176 = vperm.slane %v1147, %v1005
    %v1177 = vsel %vm1007, %v1176, %v1175
    %v1178 = vsel %vm1024, %v1177, %v1162
    %v1180 = vsel %vm1027, %v1178, 0.0
    %1181 = vadd.xlane.f32.xlu0 %v1180
    %v1182 = vpop.xlane.xlu0 %1181
    %v1183 = vrcp.pop %v1182
    %v1185 = vperm.slane %v1183, 0
    %v1186 = vperm.slane %v1183, 1
    %v1189 = vmul.f32 %v1053, %v1185
    %v1190 = vmul.f32 %v1055, %v1185
    %v1191 = vmul.f32 %v1057, %v1185
    %v1192 = vmul.f32 %v1059, %v1185
    %v1193 = vmul.f32 %v1061, %v1185
    %v1194 = vmul.f32 %v1063, %v1185
    %v1195 = vmul.f32 %v1065, %v1185
    %v1196 = vmul.f32 %v1067, %v1185
    %v1197 = vmul.f32 %v1069, %v1186
    %v1198 = vmul.f32 %v1071, %v1186
    %v1199 = vmul.f32 %v1073, %v1186
    %v1200 = vmul.f32 %v1075, %v1186
    %v1201 = vmul.f32 %v1077, %v1186
    %v1202 = vmul.f32 %v1079, %v1186
    %v1203 = vmul.f32 %v1081, %v1186
    %v1204 = vmul.f32 %v1083, %v1186
    %1213 = vset.pattern.permute.xlu0 0
    %1214 = vperm.xlu0 %1213, %v1189
    %v1215 = vpop.permute.xlu0 %1214
    %1216 = vset.pattern.permute.xlu0 0
    %1217 = vperm.xlu0 %1216, %v1190
    %v1218 = vpop.permute.xlu0 %1217
    %1219 = vset.pattern.permute.xlu0 0
    %1220 = vperm.xlu0 %1219, %v1191
    %v1221 = vpop.permute.xlu0 %1220
    %1222 = vset.pattern.permute.xlu0 0
    %1223 = vperm.xlu0 %1222, %v1192
    %v1224 = vpop.permute.xlu0 %1223
    %1225 = vset.pattern.permute.xlu0 0
    %1226 = vperm.xlu0 %1225, %v1193
    %v1227 = vpop.permute.xlu0 %1226
    %1228 = vset.pattern.permute.xlu0 0
    %1229 = vperm.xlu0 %1228, %v1194
    %v1230 = vpop.permute.xlu0 %1229
    %1231 = vset.pattern.permute.xlu0 0
    %1232 = vperm.xlu0 %1231, %v1195
    %v1233 = vpop.permute.xlu0 %1232
    %1234 = vset.pattern.permute.xlu0 0
    %1235 = vperm.xlu0 %1234, %v1196
    %v1236 = vpop.permute.xlu0 %1235
    %v1237 = vperm.slane %v1215, %v979
    %v1238 = vperm.slane %v1218, %v981
    %v1239 = vsel %vm983, %v1238, %v1237
    %v1240 = vperm.slane %v1221, %v985
    %v1241 = vsel %vm987, %v1240, %v1239
    %v1242 = vperm.slane %v1224, %v989
    %v1243 = vsel %vm991, %v1242, %v1241
    %v1244 = vperm.slane %v1227, %v993
    %v1245 = vsel %vm995, %v1244, %v1243
    %v1246 = vperm.slane %v1230, %v997
    %v1247 = vsel %vm999, %v1246, %v1245
    %v1248 = vperm.slane %v1233, %v1001
    %v1249 = vsel %vm1003, %v1248, %v1247
    %v1250 = vperm.slane %v1236, %v1005
    %v1251 = vsel %vm1007, %v1250, %v1249
    %vm1252 = vcmask 523264
    %v1253 = vsel %vm1252, %v1251, 0
    %1255 = vmatpush.msra.mxu0 0.0
    %1256 = vmatpush.msra.mxu0 0.0
    %1257 = vmatpush.msra.mxu0 0.0
    %1258 = vmatpush.msra.mxu0 0.0
    %1259 = vmatpush.msra.mxu0 0.0
    %1260 = vmatpush.msra.mxu0 0.0
    %1261 = vmatpush.msra.mxu0 0.0
    %1262 = vmatpush.msra.mxu0 0.0
    %1263 = vmatpush.msra.mxu0 %v668
    %1264 = vmatpush.msra.mxu0 %v667
    %1265 = vmatpush.msra.mxu0 %v666
    %1266 = vmatpush.msra.mxu0 %v665
    %1267 = vmatpush.msra.mxu0 %v664
    %1268 = vmatpush.msra.mxu0 %v663
    %1269 = vmatpush.msra.mxu0 %v662
    %1270 = vmatpush.msra.mxu0 %v661
    %1271 = vmatmul.f32.gmra.mxu0 %v1253
    %v1272 = vpop.f32.mrf.mxu0
    %v1273 = vadd.f32 0.0, %v1272
    %1274 = vdwg.mxu0
    %1283 = vset.pattern.permute.xlu0 0
    %1284 = vperm.xlu0 %1283, %v1197
    %v1285 = vpop.permute.xlu0 %1284
    %1286 = vset.pattern.permute.xlu0 0
    %1287 = vperm.xlu0 %1286, %v1198
    %v1288 = vpop.permute.xlu0 %1287
    %1289 = vset.pattern.permute.xlu0 0
    %1290 = vperm.xlu0 %1289, %v1199
    %v1291 = vpop.permute.xlu0 %1290
    %1292 = vset.pattern.permute.xlu0 0
    %1293 = vperm.xlu0 %1292, %v1200
    %v1294 = vpop.permute.xlu0 %1293
    %1295 = vset.pattern.permute.xlu0 0
    %1296 = vperm.xlu0 %1295, %v1201
    %v1297 = vpop.permute.xlu0 %1296
    %1298 = vset.pattern.permute.xlu0 0
    %1299 = vperm.xlu0 %1298, %v1202
    %v1300 = vpop.permute.xlu0 %1299
    %1301 = vset.pattern.permute.xlu0 0
    %1302 = vperm.xlu0 %1301, %v1203
    %v1303 = vpop.permute.xlu0 %1302
    %1304 = vset.pattern.permute.xlu0 0
    %1305 = vperm.xlu0 %1304, %v1204
    %v1306 = vpop.permute.xlu0 %1305
    %v1307 = vperm.slane %v1285, %v979
    %v1308 = vperm.slane %v1288, %v981
    %v1309 = vsel %vm983, %v1308, %v1307
    %v1310 = vperm.slane %v1291, %v985
    %v1311 = vsel %vm987, %v1310, %v1309
    %v1312 = vperm.slane %v1294, %v989
    %v1313 = vsel %vm991, %v1312, %v1311
    %v1314 = vperm.slane %v1297, %v993
    %v1315 = vsel %vm995, %v1314, %v1313
    %v1316 = vperm.slane %v1300, %v997
    %v1317 = vsel %vm999, %v1316, %v1315
    %v1318 = vperm.slane %v1303, %v1001
    %v1319 = vsel %vm1003, %v1318, %v1317
    %v1320 = vperm.slane %v1306, %v1005
    %v1321 = vsel %vm1007, %v1320, %v1319
    %v1322 = vsel %vm1252, %v1321, 0
    %1324 = vmatpush.msra.mxu0 0.0
    %1325 = vmatpush.msra.mxu0 0.0
    %1326 = vmatpush.msra.mxu0 0.0
    %1327 = vmatpush.msra.mxu0 0.0
    %1328 = vmatpush.msra.mxu0 0.0
    %1329 = vmatpush.msra.mxu0 0.0
    %1330 = vmatpush.msra.mxu0 0.0
    %1331 = vmatpush.msra.mxu0 0.0
    %1332 = vmatpush.msra.mxu0 %v676
    %1333 = vmatpush.msra.mxu0 %v675
    %1334 = vmatpush.msra.mxu0 %v674
    %1335 = vmatpush.msra.mxu0 %v673
    %1336 = vmatpush.msra.mxu0 %v672
    %1337 = vmatpush.msra.mxu0 %v671
    %1338 = vmatpush.msra.mxu0 %v670
    %1339 = vmatpush.msra.mxu0 %v669
    %1340 = vmatmul.f32.gmra.mxu0 %v1322
    %v1341 = vpop.f32.mrf.mxu0
    %v1342 = vadd.f32 0.0, %v1341
    %1343 = vdwg.mxu0
    %1344 = vst [vmem:[#allocation1] ss:$4 sm:$0xff] %v660
    %v1345 = vld.sshfl [vmem:[#allocation1] sm:$0xff pattern:$0x73625140]
    %v1346 = vrot.slane %v1345, 1
    %1347 = vrot.lane.b32.xlu0 %v1345, 32
    %v1348 = vpop.permute.xlu0 %1347
    %1349 = vrot.lane.b32.xlu0 %v1346, 32
    %v1350 = vpop.permute.xlu0 %1349
    %v1353 = vadd.f32 %v1273, %v1348
    %v1354 = vadd.f32 %v1342, %v1350
    %v1355 = vld [vmem:[%s13] sm:$0xff]
    %v1356 = vld [vmem:[%s13 + $0x8] sm:$0xff]
    %v1357 = vld [vmem:[%s13 + $0x10] sm:$0xff]
    %v1358 = vld [vmem:[%s13 + $0x18] sm:$0xff]
    %v1359 = vld [vmem:[%s14] sm:$0x1]
    %v1361 = vperm.slane %v1359, 0
    %v1365 = vrot.slane %v1354, 7
    %v1366 = vsel %vm1024, %v1365, %v1353
    %v1367 = vsel %vm140, %v1366, 0
    %1369 = vmatpush.msra.mxu0 0.0
    %1370 = vmatpush.msra.mxu0 0.0
    %1371 = vmatpush.msra.mxu0 0.0
    %1372 = vmatpush.msra.mxu0 0.0
    %1373 = vmatpush.msra.mxu0 0.0
    %1374 = vmatpush.msra.mxu0 0.0
    %1375 = vmatpush.msra.mxu0 0.0
    %1376 = vmatpush.msra.mxu0 0.0
    %1377 = vmatpush.msra.mxu0 0.0
    %1378 = vmatpush.msra.mxu0 0.0
    %1379 = vmatpush.msra.mxu0 0.0
    %1380 = vmatpush.msra.mxu0 0.0
    %1381 = vmatpush.msra.mxu0 %v1358
    %1382 = vmatpush.msra.mxu0 %v1357
    %1383 = vmatpush.msra.mxu0 %v1356
    %1384 = vmatpush.msra.mxu0 %v1355
    %1385 = vmatmul.f32.gmra.mxu0 %v1367
    %v1386 = vpop.f32.mrf.mxu0
    %v1387 = vadd.f32 %v1361, %v1386
    %1388 = vdwg.mxu0
    %1389 = vst [vmem:[#allocation3] sm:$0x3] %v1387
    // Predicated region
    $region62: #{_lambda_.3} parent=1 // pred_check
      _
    $region63: #{_lambda_.3} parent=1 // pred_check_branch
      %1391 = sbr.rel (0) target = $region65
    $region64: #{_lambda_.3} parent=1 // pred_region
      %1393 = vsyncadd [#allocation4], 0
      %s1395 = sshll.u32 [#allocation3], 4
      %s1396 = int_to_ptr.vmem [resolvable:$true] %s1395
      %s1397 = sshll.u32 %s15, 4
      %s1398 = int_to_ptr.hbm [resolvable:$true] %s1397
      %1400 = dma.vmem_to_hbm [thread:$0]  %s1396, 32, %s1398, [#allocation4]
    $region65: #{_lambda_.3} parent=1 // pred_fallthru
      _
    // Predicated region
    $region66: #{_lambda_.3} parent=1 // pred_check
      _
    $region67: #{_lambda_.3} parent=1 // pred_check_branch
      %1402 = sbr.rel (0) target = $region69
    $region68: #{_lambda_.3} parent=1 // pred_region
      %1404 = dma.done [#allocation4], 32
    $region69: #{_lambda_.3} parent=1 // pred_fallthru
      _
    %1405 = vsyncpa [#allocation4], 1

// kernel: _lambda_.2
$region0: #{_lambda_.2}
  #allocation0 [shape = 'u32[]', space=smem, size = 0x4, offset = 0x4, fixed_abs, tag = 'smem constant byte address 0x4 - core index']
  #allocation1 [shape = 'u32[72,128]{1,0:T(1,128)}', space=vmem, size = 0x9000, scoped, tag = 'internal scratch']
  %s0 = inlined_call_operand.vmem [shape: f32[2,18,18,3], index: 0, kind: input, shape index: {}]
  %s1 = inlined_call_operand.vmem [shape: f32[27,8], index: 1, kind: input, shape index: {}]
  %s2 = inlined_call_operand.vmem [shape: f32[1,8], index: 2, kind: input, shape index: {}]
  %s3 = inlined_call_operand.vmem [shape: f32[8,32], index: 3, kind: input, shape index: {}]
  %s4 = inlined_call_operand.vmem [shape: f32[1,32], index: 4, kind: input, shape index: {}]
  %s5 = inlined_call_operand.vmem [shape: f32[2,64,32], index: 5, kind: output, shape index: {}]
  %s6 = sld [smem:[#allocation0]]
  $region53: #{_lambda_.2} parent=0
    _
  %s8 = ssub.s32 1, %s6
  %s9 = scalar_select 0, %s8, %s6
  loop: start=0, step=1, limit=4
  $region2: #{_lambda_.2} parent=0 // loop_pre_header
    _
  $region3: #{_lambda_.2} parent=0 // loop_header
    %s11 = sphi 0, %s15
    %p12 = scmp.ge.s32.totalorder %s11, 4
    %s21 = sphi 0, %s23
    %s24 = sphi 0, %s21
    %s25 = sphi 0, %s24
    %s41 = sphi 0, %s25
    %s45 = sphi 0, %s45
    %s47 = sphi 0, %s45
    %s48 = sphi 0, %s47
    %s62 = sphi 0, %s48
    %s66 = sphi 0, %s66
    %s68 = sphi 0, %s66
    %s69 = sphi 0, %s68
    %s83 = sphi 0, %s69
    %s87 = sphi 0, %s87
    %s89 = sphi 0, %s87
    %s90 = sphi 0, %s89
    %s104 = sphi 0, %s90
    %s108 = sphi 0, %s108
    %s110 = sphi 0, %s108
    %s111 = sphi 0, %s110
    %s125 = sphi 0, %s111
    %s131 = sphi 0, %s133
    %s134 = sphi 0, %s131
    %s135 = sphi 0, %s134
    %s151 = sphi 0, %s135
  $region4: #{_lambda_.2} parent=0 // loop_header_branch
    %14 = sbr.rel (%p12) target = $region8
  $region5: #{_lambda_.2} parent=0 // loop_body
    %s16 = ssub.s32 %s11, 1
    %s17 = ssub.s32 %s11, 2
    %s18 = sadd.s32 %s11, 1
    %s19 = ssub.s32 %s11, %s18
    %p20 = scmp.eq.s32.totalorder %s19, 0
    %s22 = sadd.s32 %s21, 1
    %s23 = scalar_select %p20, %s21, %s22
    %p26 = pneg %p20
    %p27 = scmp.eq.s32.totalorder %s11, 1
    %p28 = por %p26, %p27
    %p29 = scmp.ne.s32.totalorder %s21, %s24
    %p30 = scmp.eq.s32.totalorder %s11, 0
    %p31 = por %p29, %p30
    %p32 = scmp.ne.s32.totalorder %s21, %s24
    %p33 = scmp.eq.s32.totalorder %s16, 1
    %p34 = por %p32, %p33
    %p35 = scmp.ne.s32.totalorder %s24, %s25
    %p36 = scmp.eq.s32.totalorder %s16, 0
    %p37 = por %p35, %p36
    %p38 = scmp.ne.s32.totalorder %s24, %s25
    %p39 = scmp.eq.s32.totalorder %s17, 1
    %p40 = por %p38, %p39
    %p42 = scmp.ne.s32.totalorder %s25, %s41
    %p43 = scmp.eq.s32.totalorder %s17, 0
    %p44 = por %p42, %p43
    %s46 = sadd.s32 %s45, 1
    %p49 = scmp.eq.s32.totalorder %s11, 1
    %p50 = scmp.ne.s32.totalorder %s45, %s47
    %p51 = scmp.eq.s32.totalorder %s11, 0
    %p52 = por %p50, %p51
    %p53 = scmp.ne.s32.totalorder %s45, %s47
    %p54 = scmp.eq.s32.totalorder %s16, 1
    %p55 = por %p53, %p54
    %p56 = scmp.ne.s32.totalorder %s47, %s48
    %p57 = scmp.eq.s32.totalorder %s16, 0
    %p58 = por %p56, %p57
    %p59 = scmp.ne.s32.totalorder %s47, %s48
    %p60 = scmp.eq.s32.totalorder %s17, 1
    %p61 = por %p59, %p60
    %p63 = scmp.ne.s32.totalorder %s48, %s62
    %p64 = scmp.eq.s32.totalorder %s17, 0
    %p65 = por %p63, %p64
    %s67 = sadd.s32 %s66, 1
    %p70 = scmp.eq.s32.totalorder %s11, 1
    %p71 = scmp.ne.s32.totalorder %s66, %s68
    %p72 = scmp.eq.s32.totalorder %s11, 0
    %p73 = por %p71, %p72
    %p74 = scmp.ne.s32.totalorder %s66, %s68
    %p75 = scmp.eq.s32.totalorder %s16, 1
    %p76 = por %p74, %p75
    %p77 = scmp.ne.s32.totalorder %s68, %s69
    %p78 = scmp.eq.s32.totalorder %s16, 0
    %p79 = por %p77, %p78
    %p80 = scmp.ne.s32.totalorder %s68, %s69
    %p81 = scmp.eq.s32.totalorder %s17, 1
    %p82 = por %p80, %p81
    %p84 = scmp.ne.s32.totalorder %s69, %s83
    %p85 = scmp.eq.s32.totalorder %s17, 0
    %p86 = por %p84, %p85
    %s88 = sadd.s32 %s87, 1
    %p91 = scmp.eq.s32.totalorder %s11, 1
    %p92 = scmp.ne.s32.totalorder %s87, %s89
    %p93 = scmp.eq.s32.totalorder %s11, 0
    %p94 = por %p92, %p93
    %p95 = scmp.ne.s32.totalorder %s87, %s89
    %p96 = scmp.eq.s32.totalorder %s16, 1
    %p97 = por %p95, %p96
    %p98 = scmp.ne.s32.totalorder %s89, %s90
    %p99 = scmp.eq.s32.totalorder %s16, 0
    %p100 = por %p98, %p99
    %p101 = scmp.ne.s32.totalorder %s89, %s90
    %p102 = scmp.eq.s32.totalorder %s17, 1
    %p103 = por %p101, %p102
    %p105 = scmp.ne.s32.totalorder %s90, %s104
    %p106 = scmp.eq.s32.totalorder %s17, 0
    %p107 = por %p105, %p106
    %s109 = sadd.s32 %s108, 1
    %p112 = scmp.eq.s32.totalorder %s11, 1
    %p113 = scmp.ne.s32.totalorder %s108, %s110
    %p114 = scmp.eq.s32.totalorder %s11, 0
    %p115 = por %p113, %p114
    %p116 = scmp.ne.s32.totalorder %s108, %s110
    %p117 = scmp.eq.s32.totalorder %s16, 1
    %p118 = por %p116, %p117
    %p119 = scmp.ne.s32.totalorder %s110, %s111
    %p120 = scmp.eq.s32.totalorder %s16, 0
    %p121 = por %p119, %p120
    %p122 = scmp.ne.s32.totalorder %s110, %s111
    %p123 = scmp.eq.s32.totalorder %s17, 1
    %p124 = por %p122, %p123
    %p126 = scmp.ne.s32.totalorder %s111, %s125
    %p127 = scmp.eq.s32.totalorder %s17, 0
    %p128 = por %p126, %p127
    %s129 = ssub.s32 %s11, %s18
    %p130 = scmp.eq.s32.totalorder %s129, 0
    %s132 = sadd.s32 %s131, 1
    %s133 = scalar_select %p130, %s131, %s132
    %p136 = pneg %p130
    %p137 = scmp.eq.s32.totalorder %s11, 1
    %p138 = por %p136, %p137
    %p139 = scmp.ne.s32.totalorder %s131, %s134
    %p140 = scmp.eq.s32.totalorder %s11, 0
    %p141 = por %p139, %p140
    %p142 = scmp.ne.s32.totalorder %s131, %s134
    %p143 = scmp.eq.s32.totalorder %s16, 1
    %p144 = por %p142, %p143
    %p145 = scmp.ne.s32.totalorder %s134, %s135
    %p146 = scmp.eq.s32.totalorder %s16, 0
    %p147 = por %p145, %p146
    %p148 = scmp.ne.s32.totalorder %s134, %s135
    %p149 = scmp.eq.s32.totalorder %s17, 1
    %p150 = por %p148, %p149
    %p152 = scmp.ne.s32.totalorder %s135, %s151
    %p153 = scmp.eq.s32.totalorder %s17, 0
    %p154 = por %p152, %p153
    %p155 = scmp.le.s32.totalorder 1, %s11
    %p156 = scmp.lt.s32.totalorder %s11, 3
    %p157 = pnand %p155, %p156
    %p158 = pneg %p157
    // Predicated region
    $region9: #{_lambda_.2} parent=5 // pred_check
      _
    $region10: #{_lambda_.2} parent=5 // pred_check_branch
      %160 = sbr.rel (%p157) target = $region12
    $region11: #{_lambda_.2} parent=5 // pred_region
      %s161 = ssub.s32 %s11, 1
      // Predicated region
      $region13: #{_lambda_.2} parent=11 // pred_check
        %p162 = pneg %p58
      $region14: #{_lambda_.2} parent=11 // pred_check_branch
        %164 = sbr.rel (%p162) target = $region16
      $region15: #{_lambda_.2} parent=11 // pred_region
        _
      $region16: #{_lambda_.2} parent=11 // pred_fallthru
        _
      // Predicated region
      $region17: #{_lambda_.2} parent=11 // pred_check
        %p165 = pneg %p79
      $region18: #{_lambda_.2} parent=11 // pred_check_branch
        %167 = sbr.rel (%p165) target = $region20
      $region19: #{_lambda_.2} parent=11 // pred_region
        _
      $region20: #{_lambda_.2} parent=11 // pred_fallthru
        _
      // Predicated region
      $region21: #{_lambda_.2} parent=11 // pred_check
        %p168 = pneg %p100
      $region22: #{_lambda_.2} parent=11 // pred_check_branch
        %170 = sbr.rel (%p168) target = $region24
      $region23: #{_lambda_.2} parent=11 // pred_region
        _
      $region24: #{_lambda_.2} parent=11 // pred_fallthru
        _
      // Predicated region
      $region25: #{_lambda_.2} parent=11 // pred_check
        %p171 = pneg %p121
      $region26: #{_lambda_.2} parent=11 // pred_check_branch
        %173 = sbr.rel (%p171) target = $region28
      $region27: #{_lambda_.2} parent=11 // pred_region
        _
      $region28: #{_lambda_.2} parent=11 // pred_fallthru
        _
    $region12: #{_lambda_.2} parent=5 // pred_fallthru
      _
    %p174 = scmp.lt.s32.totalorder %s11, 2
    // Predicated region
    $region29: #{_lambda_.2} parent=5 // pred_check
      %p175 = pneg %p174
    $region30: #{_lambda_.2} parent=5 // pred_check_branch
      %177 = sbr.rel (%p175) target = $region32
    $region31: #{_lambda_.2} parent=5 // pred_region
      // Predicated region
      $region33: #{_lambda_.2} parent=31 // pred_check
        %p178 = pneg %p31
      $region34: #{_lambda_.2} parent=31 // pred_check_branch
        %180 = sbr.rel (%p178) target = $region36
      $region35: #{_lambda_.2} parent=31 // pred_region
        %p181 = scmp.lt.s32.totalorder %s11, 1
        %s182 = scalar_select %p181, %s11, 1
        %s183 = smul.addr %s182, 54
        %s184 = smul.addr %s183, 8
        %s185 = scalar_lea.vmem %s0, %s184
      $region36: #{_lambda_.2} parent=31 // pred_fallthru
        _
    $region32: #{_lambda_.2} parent=5 // pred_fallthru
      _
    %p186 = scmp.le.s32.totalorder 1, %s11
    %p187 = scmp.lt.s32.totalorder %s11, 3
    %p188 = pnand %p186, %p187
    %p189 = pneg %p188
    // Predicated region
    $region37: #{_lambda_.2} parent=5 // pred_check
      _
    $region38: #{_lambda_.2} parent=5 // pred_check_branch
      %191 = sbr.rel (%p188) target = $region40
    $region39: #{_lambda_.2} parent=5 // pred_region
      %s192 = ssub.s32 %s11, 1
      %p193 = scmp.lt.s32.totalorder %s16, 1
      %s194 = scalar_select %p193, %s16, 1
      %s195 = smul.addr %s194, 54
      %s196 = smul.addr %s195, 8
      %s197 = scalar_lea.vmem %s0, %s196
      %p198 = pneg %p37
      %p199 = pneg %p34
      %p200 = pneg %p58
      %p201 = pneg %p55
      %p202 = pneg %p79
      %p203 = pneg %p76
      %p204 = pneg %p100
      %p205 = pneg %p97
      %p206 = pneg %p121
      %p207 = pneg %p118
      %p208 = pneg %p147
      %p209 = pneg %p144
      %p210 = scmp.lt.s32.totalorder %s16, 1
      %s211 = scalar_select %p210, %s16, 1
      %s212 = smul.addr %s211, 8
      %s213 = smul.addr %s212, 8
      %s214 = scalar_lea.vmem %s5, %s213
      %p215 = scmp.lt.s32.totalorder %s16, 1
      %s216 = scalar_select %p215, %s16, 1
      %s217 = smul.addr %s216, 54
      %s218 = smul.addr %s217, 8
      %s219 = scalar_lea.vmem %s0, %s218
      %p220 = scmp.lt.s32.totalorder %s16, 1
      %s221 = scalar_select %p220, %s16, 1
      %s222 = smul.addr %s221, 8
      %s223 = smul.addr %s222, 8
      %s224 = scalar_lea.vmem %s5, %s223
      %v225 = vld [vmem:[%s219] sm:$0xff]
      %v226 = vld [vmem:[%s219 + $0x8] sm:$0xff]
      %v227 = vld [vmem:[%s219 + $0x10] sm:$0x3]
      %v228 = vld [vmem:[%s219 + $0x18] sm:$0xff]
      %v229 = vld [vmem:[%s219 + $0x20] sm:$0xff]
      %v230 = vld [vmem:[%s219 + $0x28] sm:$0x3]
      %v231 = vld [vmem:[%s219 + $0x30] sm:$0xff]
      %v232 = vld [vmem:[%s219 + $0x38] sm:$0xff]
      %v233 = vld [vmem:[%s219 + $0x40] sm:$0x3]
      %v234 = vld [vmem:[%s219 + $0x48] sm:$0xff]
      %v235 = vld [vmem:[%s219 + $0x50] sm:$0xff]
      %v236 = vld [vmem:[%s219 + $0x58] sm:$0x3]
      %v237 = vld [vmem:[%s219 + $0x60] sm:$0xff]
      %v238 = vld [vmem:[%s219 + $0x68] sm:$0xff]
      %v239 = vld [vmem:[%s219 + $0x70] sm:$0x3]
      %v240 = vld [vmem:[%s219 + $0x78] sm:$0xff]
      %v241 = vld [vmem:[%s219 + $0x80] sm:$0xff]
      %v242 = vld [vmem:[%s219 + $0x88] sm:$0x3]
      %v243 = vld [vmem:[%s219 + $0x90] sm:$0xff]
      %v244 = vld [vmem:[%s219 + $0x98] sm:$0xff]
      %v245 = vld [vmem:[%s219 + $0xa0] sm:$0x3]
      %v246 = vld [vmem:[%s219 + $0xa8] sm:$0xff]
      %v247 = vld [vmem:[%s219 + $0xb0] sm:$0xff]
      %v248 = vld [vmem:[%s219 + $0xb8] sm:$0x3]
      %v249 = vld [vmem:[%s219 + $0xc0] sm:$0xff]
      %v250 = vld [vmem:[%s219 + $0xc8] sm:$0xff]
      %v251 = vld [vmem:[%s219 + $0xd0] sm:$0x3]
      %v252 = vld [vmem:[%s219 + $0xd8] sm:$0xff]
      %v253 = vld [vmem:[%s219 + $0xe0] sm:$0xff]
      %v254 = vld [vmem:[%s219 + $0xe8] sm:$0x3]
      %v255 = vld [vmem:[%s219 + $0xf0] sm:$0xff]
      %v256 = vld [vmem:[%s219 + $0xf8] sm:$0xff]
      %v257 = vld [vmem:[%s219 + $0x100] sm:$0x3]
      %v258 = vld [vmem:[%s219 + $0x108] sm:$0xff]
      %v259 = vld [vmem:[%s219 + $0x110] sm:$0xff]
      %v260 = vld [vmem:[%s219 + $0x118] sm:$0x3]
      %v261 = vld [vmem:[%s219 + $0x120] sm:$0xff]
      %v262 = vld [vmem:[%s219 + $0x128] sm:$0xff]
      %v263 = vld [vmem:[%s219 + $0x130] sm:$0x3]
      %v264 = vld [vmem:[%s219 + $0x138] sm:$0xff]
      %v265 = vld [vmem:[%s219 + $0x140] sm:$0xff]
      %v266 = vld [vmem:[%s219 + $0x148] sm:$0x3]
      %v267 = vld [vmem:[%s219 + $0x150] sm:$0xff]
      %v268 = vld [vmem:[%s219 + $0x158] sm:$0xff]
      %v269 = vld [vmem:[%s219 + $0x160] sm:$0x3]
      %v270 = vld [vmem:[%s219 + $0x168] sm:$0xff]
      %v271 = vld [vmem:[%s219 + $0x170] sm:$0xff]
      %v272 = vld [vmem:[%s219 + $0x178] sm:$0x3]
      %v273 = vld [vmem:[%s219 + $0x180] sm:$0xff]
      %v274 = vld [vmem:[%s219 + $0x188] sm:$0xff]
      %v275 = vld [vmem:[%s219 + $0x190] sm:$0x3]
      %v276 = vld [vmem:[%s219 + $0x198] sm:$0xff]
      %v277 = vld [vmem:[%s219 + $0x1a0] sm:$0xff]
      %v278 = vld [vmem:[%s219 + $0x1a8] sm:$0x3]
      %vm327 = vcmask 1046528
      %v328 = vrot.slane %v225, 1
      %v329 = vrot.slane %v226, 1
      %v330 = vsel %vm327, %v328, %v329
      %v331 = vrot.slane %v227, 1
      %v332 = vsel %vm327, %v329, %v331
      %v333 = vrot.slane %v228, 1
      %v334 = vrot.slane %v229, 1
      %v335 = vsel %vm327, %v333, %v334
      %v336 = vrot.slane %v230, 1
      %v337 = vsel %vm327, %v334, %v336
      %v338 = vrot.slane %v231, 1
      %v339 = vrot.slane %v232, 1
      %v340 = vsel %vm327, %v338, %v339
      %v341 = vrot.slane %v233, 1
      %v342 = vsel %vm327, %v339, %v341
      %v343 = vrot.slane %v234, 1
      %v344 = vrot.slane %v235, 1
      %v345 = vsel %vm327, %v343, %v344
      %v346 = vrot.slane %v236, 1
      %v347 = vsel %vm327, %v344, %v346
      %v348 = vrot.slane %v237, 1
      %v349 = vrot.slane %v238, 1
      %v350 = vsel %vm327, %v348, %v349
      %v351 = vrot.slane %v239, 1
      %v352 = vsel %vm327, %v349, %v351
      %v353 = vrot.slane %v240, 1
      %v354 = vrot.slane %v241, 1
      %v355 = vsel %vm327, %v353, %v354
      %v356 = vrot.slane %v242, 1
      %v357 = vsel %vm327, %v354, %v356
      %v358 = vrot.slane %v243, 1
      %v359 = vrot.slane %v244, 1
      %v360 = vsel %vm327, %v358, %v359
      %v361 = vrot.slane %v245, 1
      %v362 = vsel %vm327, %v359, %v361
      %v363 = vrot.slane %v246, 1
      %v364 = vrot.slane %v247, 1
      %v365 = vsel %vm327, %v363, %v364
      %v366 = vrot.slane %v248, 1
      %v367 = vsel %vm327, %v364, %v366
      %v368 = vrot.slane %v249, 1
      %v369 = vrot.slane %v250, 1
      %v370 = vsel %vm327, %v368, %v369
      %v371 = vrot.slane %v251, 1
      %v372 = vsel %vm327, %v369, %v371
      %v373 = vrot.slane %v252, 1
      %v374 = vrot.slane %v253, 1
      %v375 = vsel %vm327, %v373, %v374
      %v376 = vrot.slane %v254, 1
      %v377 = vsel %vm327, %v374, %v376
      %v378 = vrot.slane %v255, 1
      %v379 = vrot.slane %v256, 1
      %v380 = vsel %vm327, %v378, %v379
      %v381 = vrot.slane %v257, 1
      %v382 = vsel %vm327, %v379, %v381
      %v383 = vrot.slane %v258, 1
      %v384 = vrot.slane %v259, 1
      %v385 = vsel %vm327, %v383, %v384
      %v386 = vrot.slane %v260, 1
      %v387 = vsel %vm327, %v384, %v386
      %v388 = vrot.slane %v261, 1
      %v389 = vrot.slane %v262, 1
      %v390 = vsel %vm327, %v388, %v389
      %v391 = vrot.slane %v263, 1
      %v392 = vsel %vm327, %v389, %v391
      %v393 = vrot.slane %v264, 1
      %v394 = vrot.slane %v265, 1
      %v395 = vsel %vm327, %v393, %v394
      %v396 = vrot.slane %v266, 1
      %v397 = vsel %vm327, %v394, %v396
      %v398 = vrot.slane %v267, 1
      %v399 = vrot.slane %v268, 1
      %v400 = vsel %vm327, %v398, %v399
      %v401 = vrot.slane %v269, 1
      %v402 = vsel %vm327, %v399, %v401
      %v403 = vrot.slane %v270, 1
      %v404 = vrot.slane %v271, 1
      %v405 = vsel %vm327, %v403, %v404
      %v406 = vrot.slane %v272, 1
      %v407 = vsel %vm327, %v404, %v406
      %vm408 = vcmask 1045504
      %v409 = vrot.slane %v225, 2
      %v410 = vrot.slane %v226, 2
      %v411 = vsel %vm408, %v409, %v410
      %v412 = vrot.slane %v227, 2
      %v413 = vsel %vm408, %v410, %v412
      %v414 = vrot.slane %v228, 2
      %v415 = vrot.slane %v229, 2
      %v416 = vsel %vm408, %v414, %v415
      %v417 = vrot.slane %v230, 2
      %v418 = vsel %vm408, %v415, %v417
      %v419 = vrot.slane %v231, 2
      %v420 = vrot.slane %v232, 2
      %v421 = vsel %vm408, %v419, %v420
      %v422 = vrot.slane %v233, 2
      %v423 = vsel %vm408, %v420, %v422
      %v424 = vrot.slane %v234, 2
      %v425 = vrot.slane %v235, 2
      %v426 = vsel %vm408, %v424, %v425
      %v427 = vrot.slane %v236, 2
      %v428 = vsel %vm408, %v425, %v427
      %v429 = vrot.slane %v237, 2
      %v430 = vrot.slane %v238, 2
      %v431 = vsel %vm408, %v429, %v430
      %v432 = vrot.slane %v239, 2
      %v433 = vsel %vm408, %v430, %v432
      %v434 = vrot.slane %v240, 2
      %v435 = vrot.slane %v241, 2
      %v436 = vsel %vm408, %v434, %v435
      %v437 = vrot.slane %v242, 2
      %v438 = vsel %vm408, %v435, %v437
      %v439 = vrot.slane %v243, 2
      %v440 = vrot.slane %v244, 2
      %v441 = vsel %vm408, %v439, %v440
      %v442 = vrot.slane %v245, 2
      %v443 = vsel %vm408, %v440, %v442
      %v444 = vrot.slane %v246, 2
      %v445 = vrot.slane %v247, 2
      %v446 = vsel %vm408, %v444, %v445
      %v447 = vrot.slane %v248, 2
      %v448 = vsel %vm408, %v445, %v447
      %v449 = vrot.slane %v249, 2
      %v450 = vrot.slane %v250, 2
      %v451 = vsel %vm408, %v449, %v450
      %v452 = vrot.slane %v251, 2
      %v453 = vsel %vm408, %v450, %v452
      %v454 = vrot.slane %v252, 2
      %v455 = vrot.slane %v253, 2
      %v456 = vsel %vm408, %v454, %v455
      %v457 = vrot.slane %v254, 2
      %v458 = vsel %vm408, %v455, %v457
      %v459 = vrot.slane %v255, 2
      %v460 = vrot.slane %v256, 2
      %v461 = vsel %vm408, %v459, %v460
      %v462 = vrot.slane %v257, 2
      %v463 = vsel %vm408, %v460, %v462
      %v464 = vrot.slane %v258, 2
      %v465 = vrot.slane %v259, 2
      %v466 = vsel %vm408, %v464, %v465
      %v467 = vrot.slane %v260, 2
      %v468 = vsel %vm408, %v465, %v467
      %v469 = vrot.slane %v261, 2
      %v470 = vrot.slane %v262, 2
      %v471 = vsel %vm408, %v469, %v470
      %v472 = vrot.slane %v263, 2
      %v473 = vsel %vm408, %v470, %v472
      %v474 = vrot.slane %v264, 2
      %v475 = vrot.slane %v265, 2
      %v476 = vsel %vm408, %v474, %v475
      %v477 = vrot.slane %v266, 2
      %v478 = vsel %vm408, %v475, %v477
      %v479 = vrot.slane %v267, 2
      %v480 = vrot.slane %v268, 2
      %v481 = vsel %vm408, %v479, %v480
      %v482 = vrot.slane %v269, 2
      %v483 = vsel %vm408, %v480, %v482
      %v484 = vrot.slane %v270, 2
      %v485 = vrot.slane %v271, 2
      %v486 = vsel %vm408, %v484, %v485
      %v487 = vrot.slane %v272, 2
      %v488 = vsel %vm408, %v485, %v487
      %v492 = vrot.slane %v273, 1
      %v493 = vrot.slane %v274, 1
      %v494 = vsel %vm327, %v492, %v493
      %v495 = vrot.slane %v275, 1
      %v496 = vsel %vm327, %v493, %v495
      %v497 = vrot.slane %v273, 2
      %v498 = vrot.slane %v274, 2
      %v499 = vsel %vm408, %v497, %v498
      %v500 = vrot.slane %v275, 2
      %v501 = vsel %vm408, %v498, %v500
      %v505 = vrot.slane %v276, 1
      %v506 = vrot.slane %v277, 1
      %v507 = vsel %vm327, %v505, %v506
      %v508 = vrot.slane %v278, 1
      %v509 = vsel %vm327, %v506, %v508
      %v510 = vrot.slane %v276, 2
      %v511 = vrot.slane %v277, 2
      %v512 = vsel %vm408, %v510, %v511
      %v513 = vrot.slane %v278, 2
      %v514 = vsel %vm408, %v511, %v513
      %515 = vrot.lane.b32.xlu0 %v330, 3
      %v516 = vpop.permute.xlu0 %515
      %517 = vrot.lane.b32.xlu0 %v332, 3
      %v518 = vpop.permute.xlu0 %517
      %519 = vrot.lane.b32.xlu0 %v335, 3
      %v520 = vpop.permute.xlu0 %519
      %521 = vrot.lane.b32.xlu0 %v337, 3
      %v522 = vpop.permute.xlu0 %521
      %523 = vrot.lane.b32.xlu0 %v340, 3
      %v524 = vpop.permute.xlu0 %523
      %525 = vrot.lane.b32.xlu0 %v342, 3
      %v526 = vpop.permute.xlu0 %525
      %527 = vrot.lane.b32.xlu0 %v345, 3
      %v528 = vpop.permute.xlu0 %527
      %529 = vrot.lane.b32.xlu0 %v347, 3
      %v530 = vpop.permute.xlu0 %529
      %531 = vrot.lane.b32.xlu0 %v350, 3
      %v532 = vpop.permute.xlu0 %531
      %533 = vrot.lane.b32.xlu0 %v352, 3
      %v534 = vpop.permute.xlu0 %533
      %535 = vrot.lane.b32.xlu0 %v355, 3
      %v536 = vpop.permute.xlu0 %535
      %537 = vrot.lane.b32.xlu0 %v357, 3
      %v538 = vpop.permute.xlu0 %537
      %539 = vrot.lane.b32.xlu0 %v360, 3
      %v540 = vpop.permute.xlu0 %539
      %541 = vrot.lane.b32.xlu0 %v362, 3
      %v542 = vpop.permute.xlu0 %541
      %543 = vrot.lane.b32.xlu0 %v365, 3
      %v544 = vpop.permute.xlu0 %543
      %545 = vrot.lane.b32.xlu0 %v367, 3
      %v546 = vpop.permute.xlu0 %545
      %547 = vrot.lane.b32.xlu0 %v370, 3
      %v548 = vpop.permute.xlu0 %547
      %549 = vrot.lane.b32.xlu0 %v372, 3
      %v550 = vpop.permute.xlu0 %549
      %551 = vrot.lane.b32.xlu0 %v375, 3
      %v552 = vpop.permute.xlu0 %551
      %553 = vrot.lane.b32.xlu0 %v377, 3
      %v554 = vpop.permute.xlu0 %553
      %555 = vrot.lane.b32.xlu0 %v380, 3
      %v556 = vpop.permute.xlu0 %555
      %557 = vrot.lane.b32.xlu0 %v382, 3
      %v558 = vpop.permute.xlu0 %557
      %559 = vrot.lane.b32.xlu0 %v385, 3
      %v560 = vpop.permute.xlu0 %559
      %561 = vrot.lane.b32.xlu0 %v387, 3
      %v562 = vpop.permute.xlu0 %561
      %563 = vrot.lane.b32.xlu0 %v390, 3
      %v564 = vpop.permute.xlu0 %563
      %565 = vrot.lane.b32.xlu0 %v392, 3
      %v566 = vpop.permute.xlu0 %565
      %567 = vrot.lane.b32.xlu0 %v395, 3
      %v568 = vpop.permute.xlu0 %567
      %569 = vrot.lane.b32.xlu0 %v397, 3
      %v570 = vpop.permute.xlu0 %569
      %571 = vrot.lane.b32.xlu0 %v400, 3
      %v572 = vpop.permute.xlu0 %571
      %573 = vrot.lane.b32.xlu0 %v402, 3
      %v574 = vpop.permute.xlu0 %573
      %575 = vrot.lane.b32.xlu0 %v405, 3
      %v576 = vpop.permute.xlu0 %575
      %577 = vrot.lane.b32.xlu0 %v407, 3
      %v578 = vpop.permute.xlu0 %577
      %611 = vrot.lane.b32.xlu0 %v411, 6
      %v612 = vpop.permute.xlu0 %611
      %613 = vrot.lane.b32.xlu0 %v413, 6
      %v614 = vpop.permute.xlu0 %613
      %615 = vrot.lane.b32.xlu0 %v416, 6
      %v616 = vpop.permute.xlu0 %615
      %617 = vrot.lane.b32.xlu0 %v418, 6
      %v618 = vpop.permute.xlu0 %617
      %619 = vrot.lane.b32.xlu0 %v421, 6
      %v620 = vpop.permute.xlu0 %619
      %621 = vrot.lane.b32.xlu0 %v423, 6
      %v622 = vpop.permute.xlu0 %621
      %623 = vrot.lane.b32.xlu0 %v426, 6
      %v624 = vpop.permute.xlu0 %623
      %625 = vrot.lane.b32.xlu0 %v428, 6
      %v626 = vpop.permute.xlu0 %625
      %627 = vrot.lane.b32.xlu0 %v431, 6
      %v628 = vpop.permute.xlu0 %627
      %629 = vrot.lane.b32.xlu0 %v433, 6
      %v630 = vpop.permute.xlu0 %629
      %631 = vrot.lane.b32.xlu0 %v436, 6
      %v632 = vpop.permute.xlu0 %631
      %633 = vrot.lane.b32.xlu0 %v438, 6
      %v634 = vpop.permute.xlu0 %633
      %635 = vrot.lane.b32.xlu0 %v441, 6
      %v636 = vpop.permute.xlu0 %635
      %637 = vrot.lane.b32.xlu0 %v443, 6
      %v638 = vpop.permute.xlu0 %637
      %639 = vrot.lane.b32.xlu0 %v446, 6
      %v640 = vpop.permute.xlu0 %639
      %641 = vrot.lane.b32.xlu0 %v448, 6
      %v642 = vpop.permute.xlu0 %641
      %643 = vrot.lane.b32.xlu0 %v451, 6
      %v644 = vpop.permute.xlu0 %643
      %645 = vrot.lane.b32.xlu0 %v453, 6
      %v646 = vpop.permute.xlu0 %645
      %647 = vrot.lane.b32.xlu0 %v456, 6
      %v648 = vpop.permute.xlu0 %647
      %649 = vrot.lane.b32.xlu0 %v458, 6
      %v650 = vpop.permute.xlu0 %649
      %651 = vrot.lane.b32.xlu0 %v461, 6
      %v652 = vpop.permute.xlu0 %651
      %653 = vrot.lane.b32.xlu0 %v463, 6
      %v654 = vpop.permute.xlu0 %653
      %655 = vrot.lane.b32.xlu0 %v466, 6
      %v656 = vpop.permute.xlu0 %655
      %657 = vrot.lane.b32.xlu0 %v468, 6
      %v658 = vpop.permute.xlu0 %657
      %659 = vrot.lane.b32.xlu0 %v471, 6
      %v660 = vpop.permute.xlu0 %659
      %661 = vrot.lane.b32.xlu0 %v473, 6
      %v662 = vpop.permute.xlu0 %661
      %663 = vrot.lane.b32.xlu0 %v476, 6
      %v664 = vpop.permute.xlu0 %663
      %665 = vrot.lane.b32.xlu0 %v478, 6
      %v666 = vpop.permute.xlu0 %665
      %667 = vrot.lane.b32.xlu0 %v481, 6
      %v668 = vpop.permute.xlu0 %667
      %669 = vrot.lane.b32.xlu0 %v483, 6
      %v670 = vpop.permute.xlu0 %669
      %671 = vrot.lane.b32.xlu0 %v486, 6
      %v672 = vpop.permute.xlu0 %671
      %673 = vrot.lane.b32.xlu0 %v488, 6
      %v674 = vpop.permute.xlu0 %673
      %707 = vrot.lane.b32.xlu0 %v228, 9
      %v708 = vpop.permute.xlu0 %707
      %709 = vrot.lane.b32.xlu0 %v229, 9
      %v710 = vpop.permute.xlu0 %709
      %711 = vrot.lane.b32.xlu0 %v231, 9
      %v712 = vpop.permute.xlu0 %711
      %713 = vrot.lane.b32.xlu0 %v232, 9
      %v714 = vpop.permute.xlu0 %713
      %715 = vrot.lane.b32.xlu0 %v234, 9
      %v716 = vpop.permute.xlu0 %715
      %717 = vrot.lane.b32.xlu0 %v235, 9
      %v718 = vpop.permute.xlu0 %717
      %719 = vrot.lane.b32.xlu0 %v237, 9
      %v720 = vpop.permute.xlu0 %719
      %721 = vrot.lane.b32.xlu0 %v238, 9
      %v722 = vpop.permute.xlu0 %721
      %723 = vrot.lane.b32.xlu0 %v240, 9
      %v724 = vpop.permute.xlu0 %723
      %725 = vrot.lane.b32.xlu0 %v241, 9
      %v726 = vpop.permute.xlu0 %725
      %727 = vrot.lane.b32.xlu0 %v243, 9
      %v728 = vpop.permute.xlu0 %727
      %729 = vrot.lane.b32.xlu0 %v244, 9
      %v730 = vpop.permute.xlu0 %729
      %731 = vrot.lane.b32.xlu0 %v246, 9
      %v732 = vpop.permute.xlu0 %731
      %733 = vrot.lane.b32.xlu0 %v247, 9
      %v734 = vpop.permute.xlu0 %733
      %735 = vrot.lane.b32.xlu0 %v249, 9
      %v736 = vpop.permute.xlu0 %735
      %737 = vrot.lane.b32.xlu0 %v250, 9
      %v738 = vpop.permute.xlu0 %737
      %739 = vrot.lane.b32.xlu0 %v252, 9
      %v740 = vpop.permute.xlu0 %739
      %741 = vrot.lane.b32.xlu0 %v253, 9
      %v742 = vpop.permute.xlu0 %741
      %743 = vrot.lane.b32.xlu0 %v255, 9
      %v744 = vpop.permute.xlu0 %743
      %745 = vrot.lane.b32.xlu0 %v256, 9
      %v746 = vpop.permute.xlu0 %745
      %747 = vrot.lane.b32.xlu0 %v258, 9
      %v748 = vpop.permute.xlu0 %747
      %749 = vrot.lane.b32.xlu0 %v259, 9
      %v750 = vpop.permute.xlu0 %749
      %751 = vrot.lane.b32.xlu0 %v261, 9
      %v752 = vpop.permute.xlu0 %751
      %753 = vrot.lane.b32.xlu0 %v262, 9
      %v754 = vpop.permute.xlu0 %753
      %755 = vrot.lane.b32.xlu0 %v264, 9
      %v756 = vpop.permute.xlu0 %755
      %757 = vrot.lane.b32.xlu0 %v265, 9
      %v758 = vpop.permute.xlu0 %757
      %759 = vrot.lane.b32.xlu0 %v267, 9
      %v760 = vpop.permute.xlu0 %759
      %761 = vrot.lane.b32.xlu0 %v268, 9
      %v762 = vpop.permute.xlu0 %761
      %763 = vrot.lane.b32.xlu0 %v270, 9
      %v764 = vpop.permute.xlu0 %763
      %765 = vrot.lane.b32.xlu0 %v271, 9
      %v766 = vpop.permute.xlu0 %765
      %767 = vrot.lane.b32.xlu0 %v273, 9
      %v768 = vpop.permute.xlu0 %767
      %769 = vrot.lane.b32.xlu0 %v274, 9
      %v770 = vpop.permute.xlu0 %769
      %803 = vrot.lane.b32.xlu0 %v335, 12
      %v804 = vpop.permute.xlu0 %803
      %805 = vrot.lane.b32.xlu0 %v337, 12
      %v806 = vpop.permute.xlu0 %805
      %807 = vrot.lane.b32.xlu0 %v340, 12
      %v808 = vpop.permute.xlu0 %807
      %809 = vrot.lane.b32.xlu0 %v342, 12
      %v810 = vpop.permute.xlu0 %809
      %811 = vrot.lane.b32.xlu0 %v345, 12
      %v812 = vpop.permute.xlu0 %811
      %813 = vrot.lane.b32.xlu0 %v347, 12
      %v814 = vpop.permute.xlu0 %813
      %815 = vrot.lane.b32.xlu0 %v350, 12
      %v816 = vpop.permute.xlu0 %815
      %817 = vrot.lane.b32.xlu0 %v352, 12
      %v818 = vpop.permute.xlu0 %817
      %819 = vrot.lane.b32.xlu0 %v355, 12
      %v820 = vpop.permute.xlu0 %819
      %821 = vrot.lane.b32.xlu0 %v357, 12
      %v822 = vpop.permute.xlu0 %821
      %823 = vrot.lane.b32.xlu0 %v360, 12
      %v824 = vpop.permute.xlu0 %823
      %825 = vrot.lane.b32.xlu0 %v362, 12
      %v826 = vpop.permute.xlu0 %825
      %827 = vrot.lane.b32.xlu0 %v365, 12
      %v828 = vpop.permute.xlu0 %827
      %829 = vrot.lane.b32.xlu0 %v367, 12
      %v830 = vpop.permute.xlu0 %829
      %831 = vrot.lane.b32.xlu0 %v370, 12
      %v832 = vpop.permute.xlu0 %831
      %833 = vrot.lane.b32.xlu0 %v372, 12
      %v834 = vpop.permute.xlu0 %833
      %835 = vrot.lane.b32.xlu0 %v375, 12
      %v836 = vpop.permute.xlu0 %835
      %837 = vrot.lane.b32.xlu0 %v377, 12
      %v838 = vpop.permute.xlu0 %837
      %839 = vrot.lane.b32.xlu0 %v380, 12
      %v840 = vpop.permute.xlu0 %839
      %841 = vrot.lane.b32.xlu0 %v382, 12
      %v842 = vpop.permute.xlu0 %841
      %843 = vrot.lane.b32.xlu0 %v385, 12
      %v844 = vpop.permute.xlu0 %843
      %845 = vrot.lane.b32.xlu0 %v387, 12
      %v846 = vpop.permute.xlu0 %845
      %847 = vrot.lane.b32.xlu0 %v390, 12
      %v848 = vpop.permute.xlu0 %847
      %849 = vrot.lane.b32.xlu0 %v392, 12
      %v850 = vpop.permute.xlu0 %849
      %851 = vrot.lane.b32.xlu0 %v395, 12
      %v852 = vpop.permute.xlu0 %851
      %853 = vrot.lane.b32.xlu0 %v397, 12
      %v854 = vpop.permute.xlu0 %853
      %855 = vrot.lane.b32.xlu0 %v400, 12
      %v856 = vpop.permute.xlu0 %855
      %857 = vrot.lane.b32.xlu0 %v402, 12
      %v858 = vpop.permute.xlu0 %857
      %859 = vrot.lane.b32.xlu0 %v405, 12
      %v860 = vpop.permute.xlu0 %859
      %861 = vrot.lane.b32.xlu0 %v407, 12
      %v862 = vpop.permute.xlu0 %861
      %863 = vrot.lane.b32.xlu0 %v494, 12
      %v864 = vpop.permute.xlu0 %863
      %865 = vrot.lane.b32.xlu0 %v496, 12
      %v866 = vpop.permute.xlu0 %865
      %899 = vrot.lane.b32.xlu0 %v416, 15
      %v900 = vpop.permute.xlu0 %899
      %901 = vrot.lane.b32.xlu0 %v418, 15
      %v902 = vpop.permute.xlu0 %901
      %903 = vrot.lane.b32.xlu0 %v421, 15
      %v904 = vpop.permute.xlu0 %903
      %905 = vrot.lane.b32.xlu0 %v423, 15
      %v906 = vpop.permute.xlu0 %905
      %907 = vrot.lane.b32.xlu0 %v426, 15
      %v908 = vpop.permute.xlu0 %907
      %909 = vrot.lane.b32.xlu0 %v428, 15
      %v910 = vpop.permute.xlu0 %909
      %911 = vrot.lane.b32.xlu0 %v431, 15
      %v912 = vpop.permute.xlu0 %911
      %913 = vrot.lane.b32.xlu0 %v433, 15
      %v914 = vpop.permute.xlu0 %913
      %915 = vrot.lane.b32.xlu0 %v436, 15
      %v916 = vpop.permute.xlu0 %915
      %917 = vrot.lane.b32.xlu0 %v438, 15
      %v918 = vpop.permute.xlu0 %917
      %919 = vrot.lane.b32.xlu0 %v441, 15
      %v920 = vpop.permute.xlu0 %919
      %921 = vrot.lane.b32.xlu0 %v443, 15
      %v922 = vpop.permute.xlu0 %921
      %923 = vrot.lane.b32.xlu0 %v446, 15
      %v924 = vpop.permute.xlu0 %923
      %925 = vrot.lane.b32.xlu0 %v448, 15
      %v926 = vpop.permute.xlu0 %925
      %927 = vrot.lane.b32.xlu0 %v451, 15
      %v928 = vpop.permute.xlu0 %927
      %929 = vrot.lane.b32.xlu0 %v453, 15
      %v930 = vpop.permute.xlu0 %929
      %931 = vrot.lane.b32.xlu0 %v456, 15
      %v932 = vpop.permute.xlu0 %931
      %933 = vrot.lane.b32.xlu0 %v458, 15
      %v934 = vpop.permute.xlu0 %933
      %935 = vrot.lane.b32.xlu0 %v461, 15
      %v936 = vpop.permute.xlu0 %935
      %937 = vrot.lane.b32.xlu0 %v463, 15
      %v938 = vpop.permute.xlu0 %937
      %939 = vrot.lane.b32.xlu0 %v466, 15
      %v940 = vpop.permute.xlu0 %939
      %941 = vrot.lane.b32.xlu0 %v468, 15
      %v942 = vpop.permute.xlu0 %941
      %943 = vrot.lane.b32.xlu0 %v471, 15
      %v944 = vpop.permute.xlu0 %943
      %945 = vrot.lane.b32.xlu0 %v473, 15
      %v946 = vpop.permute.xlu0 %945
      %947 = vrot.lane.b32.xlu0 %v476, 15
      %v948 = vpop.permute.xlu0 %947
      %949 = vrot.lane.b32.xlu0 %v478, 15
      %v950 = vpop.permute.xlu0 %949
      %951 = vrot.lane.b32.xlu0 %v481, 15
      %v952 = vpop.permute.xlu0 %951
      %953 = vrot.lane.b32.xlu0 %v483, 15
      %v954 = vpop.permute.xlu0 %953
      %955 = vrot.lane.b32.xlu0 %v486, 15
      %v956 = vpop.permute.xlu0 %955
      %957 = vrot.lane.b32.xlu0 %v488, 15
      %v958 = vpop.permute.xlu0 %957
      %959 = vrot.lane.b32.xlu0 %v499, 15
      %v960 = vpop.permute.xlu0 %959
      %961 = vrot.lane.b32.xlu0 %v501, 15
      %v962 = vpop.permute.xlu0 %961
      %995 = vrot.lane.b32.xlu0 %v231, 18
      %v996 = vpop.permute.xlu0 %995
      %997 = vrot.lane.b32.xlu0 %v232, 18
      %v998 = vpop.permute.xlu0 %997
      %999 = vrot.lane.b32.xlu0 %v234, 18
      %v1000 = vpop.permute.xlu0 %999
      %1001 = vrot.lane.b32.xlu0 %v235, 18
      %v1002 = vpop.permute.xlu0 %1001
      %1003 = vrot.lane.b32.xlu0 %v237, 18
      %v1004 = vpop.permute.xlu0 %1003
      %1005 = vrot.lane.b32.xlu0 %v238, 18
      %v1006 = vpop.permute.xlu0 %1005
      %1007 = vrot.lane.b32.xlu0 %v240, 18
      %v1008 = vpop.permute.xlu0 %1007
      %1009 = vrot.lane.b32.xlu0 %v241, 18
      %v1010 = vpop.permute.xlu0 %1009
      %1011 = vrot.lane.b32.xlu0 %v243, 18
      %v1012 = vpop.permute.xlu0 %1011
      %1013 = vrot.lane.b32.xlu0 %v244, 18
      %v1014 = vpop.permute.xlu0 %1013
      %1015 = vrot.lane.b32.xlu0 %v246, 18
      %v1016 = vpop.permute.xlu0 %1015
      %1017 = vrot.lane.b32.xlu0 %v247, 18
      %v1018 = vpop.permute.xlu0 %1017
      %1019 = vrot.lane.b32.xlu0 %v249, 18
      %v1020 = vpop.permute.xlu0 %1019
      %1021 = vrot.lane.b32.xlu0 %v250, 18
      %v1022 = vpop.permute.xlu0 %1021
      %1023 = vrot.lane.b32.xlu0 %v252, 18
      %v1024 = vpop.permute.xlu0 %1023
      %1025 = vrot.lane.b32.xlu0 %v253, 18
      %v1026 = vpop.permute.xlu0 %1025
      %1027 = vrot.lane.b32.xlu0 %v255, 18
      %v1028 = vpop.permute.xlu0 %1027
      %1029 = vrot.lane.b32.xlu0 %v256, 18
      %v1030 = vpop.permute.xlu0 %1029
      %1031 = vrot.lane.b32.xlu0 %v258, 18
      %v1032 = vpop.permute.xlu0 %1031
      %1033 = vrot.lane.b32.xlu0 %v259, 18
      %v1034 = vpop.permute.xlu0 %1033
      %1035 = vrot.lane.b32.xlu0 %v261, 18
      %v1036 = vpop.permute.xlu0 %1035
      %1037 = vrot.lane.b32.xlu0 %v262, 18
      %v1038 = vpop.permute.xlu0 %1037
      %1039 = vrot.lane.b32.xlu0 %v264, 18
      %v1040 = vpop.permute.xlu0 %1039
      %1041 = vrot.lane.b32.xlu0 %v265, 18
      %v1042 = vpop.permute.xlu0 %1041
      %1043 = vrot.lane.b32.xlu0 %v267, 18
      %v1044 = vpop.permute.xlu0 %1043
      %1045 = vrot.lane.b32.xlu0 %v268, 18
      %v1046 = vpop.permute.xlu0 %1045
      %1047 = vrot.lane.b32.xlu0 %v270, 18
      %v1048 = vpop.permute.xlu0 %1047
      %1049 = vrot.lane.b32.xlu0 %v271, 18
      %v1050 = vpop.permute.xlu0 %1049
      %1051 = vrot.lane.b32.xlu0 %v273, 18
      %v1052 = vpop.permute.xlu0 %1051
      %1053 = vrot.lane.b32.xlu0 %v274, 18
      %v1054 = vpop.permute.xlu0 %1053
      %1055 = vrot.lane.b32.xlu0 %v276, 18
      %v1056 = vpop.permute.xlu0 %1055
      %1057 = vrot.lane.b32.xlu0 %v277, 18
      %v1058 = vpop.permute.xlu0 %1057
      %1091 = vrot.lane.b32.xlu0 %v340, 21
      %v1092 = vpop.permute.xlu0 %1091
      %1093 = vrot.lane.b32.xlu0 %v342, 21
      %v1094 = vpop.permute.xlu0 %1093
      %1095 = vrot.lane.b32.xlu0 %v345, 21
      %v1096 = vpop.permute.xlu0 %1095
      %1097 = vrot.lane.b32.xlu0 %v347, 21
      %v1098 = vpop.permute.xlu0 %1097
      %1099 = vrot.lane.b32.xlu0 %v350, 21
      %v1100 = vpop.permute.xlu0 %1099
      %1101 = vrot.lane.b32.xlu0 %v352, 21
      %v1102 = vpop.permute.xlu0 %1101
      %1103 = vrot.lane.b32.xlu0 %v355, 21
      %v1104 = vpop.permute.xlu0 %1103
      %1105 = vrot.lane.b32.xlu0 %v357, 21
      %v1106 = vpop.permute.xlu0 %1105
      %1107 = vrot.lane.b32.xlu0 %v360, 21
      %v1108 = vpop.permute.xlu0 %1107
      %1109 = vrot.lane.b32.xlu0 %v362, 21
      %v1110 = vpop.permute.xlu0 %1109
      %1111 = vrot.lane.b32.xlu0 %v365, 21
      %v1112 = vpop.permute.xlu0 %1111
      %1113 = vrot.lane.b32.xlu0 %v367, 21
      %v1114 = vpop.permute.xlu0 %1113
      %1115 = vrot.lane.b32.xlu0 %v370, 21
      %v1116 = vpop.permute.xlu0 %1115
      %1117 = vrot.lane.b32.xlu0 %v372, 21
      %v1118 = vpop.permute.xlu0 %1117
      %1119 = vrot.lane.b32.xlu0 %v375, 21
      %v1120 = vpop.permute.xlu0 %1119
      %1121 = vrot.lane.b32.xlu0 %v377, 21
      %v1122 = vpop.permute.xlu0 %1121
      %1123 = vrot.lane.b32.xlu0 %v380, 21
      %v1124 = vpop.permute.xlu0 %1123
      %1125 = vrot.lane.b32.xlu0 %v382, 21
      %v1126 = vpop.permute.xlu0 %1125
      %1127 = vrot.lane.b32.xlu0 %v385, 21
      %v1128 = vpop.permute.xlu0 %1127
      %1129 = vrot.lane.b32.xlu0 %v387, 21
      %v1130 = vpop.permute.xlu0 %1129
      %1131 = vrot.lane.b32.xlu0 %v390, 21
      %v1132 = vpop.permute.xlu0 %1131
      %1133 = vrot.lane.b32.xlu0 %v392, 21
      %v1134 = vpop.permute.xlu0 %1133
      %1135 = vrot.lane.b32.xlu0 %v395, 21
      %v1136 = vpop.permute.xlu0 %1135
      %1137 = vrot.lane.b32.xlu0 %v397, 21
      %v1138 = vpop.permute.xlu0 %1137
      %1139 = vrot.lane.b32.xlu0 %v400, 21
      %v1140 = vpop.permute.xlu0 %1139
      %1141 = vrot.lane.b32.xlu0 %v402, 21
      %v1142 = vpop.permute.xlu0 %1141
      %1143 = vrot.lane.b32.xlu0 %v405, 21
      %v1144 = vpop.permute.xlu0 %1143
      %1145 = vrot.lane.b32.xlu0 %v407, 21
      %v1146 = vpop.permute.xlu0 %1145
      %1147 = vrot.lane.b32.xlu0 %v494, 21
      %v1148 = vpop.permute.xlu0 %1147
      %1149 = vrot.lane.b32.xlu0 %v496, 21
      %v1150 = vpop.permute.xlu0 %1149
      %1151 = vrot.lane.b32.xlu0 %v507, 21
      %v1152 = vpop.permute.xlu0 %1151
      %1153 = vrot.lane.b32.xlu0 %v509, 21
      %v1154 = vpop.permute.xlu0 %1153
      %1187 = vrot.lane.b32.xlu0 %v421, 24
      %v1188 = vpop.permute.xlu0 %1187
      %1189 = vrot.lane.b32.xlu0 %v423, 24
      %v1190 = vpop.permute.xlu0 %1189
      %1191 = vrot.lane.b32.xlu0 %v426, 24
      %v1192 = vpop.permute.xlu0 %1191
      %1193 = vrot.lane.b32.xlu0 %v428, 24
      %v1194 = vpop.permute.xlu0 %1193
      %1195 = vrot.lane.b32.xlu0 %v431, 24
      %v1196 = vpop.permute.xlu0 %1195
      %1197 = vrot.lane.b32.xlu0 %v433, 24
      %v1198 = vpop.permute.xlu0 %1197
      %1199 = vrot.lane.b32.xlu0 %v436, 24
      %v1200 = vpop.permute.xlu0 %1199
      %1201 = vrot.lane.b32.xlu0 %v438, 24
      %v1202 = vpop.permute.xlu0 %1201
      %1203 = vrot.lane.b32.xlu0 %v441, 24
      %v1204 = vpop.permute.xlu0 %1203
      %1205 = vrot.lane.b32.xlu0 %v443, 24
      %v1206 = vpop.permute.xlu0 %1205
      %1207 = vrot.lane.b32.xlu0 %v446, 24
      %v1208 = vpop.permute.xlu0 %1207
      %1209 = vrot.lane.b32.xlu0 %v448, 24
      %v1210 = vpop.permute.xlu0 %1209
      %1211 = vrot.lane.b32.xlu0 %v451, 24
      %v1212 = vpop.permute.xlu0 %1211
      %1213 = vrot.lane.b32.xlu0 %v453, 24
      %v1214 = vpop.permute.xlu0 %1213
      %1215 = vrot.lane.b32.xlu0 %v456, 24
      %v1216 = vpop.permute.xlu0 %1215
      %1217 = vrot.lane.b32.xlu0 %v458, 24
      %v1218 = vpop.permute.xlu0 %1217
      %1219 = vrot.lane.b32.xlu0 %v461, 24
      %v1220 = vpop.permute.xlu0 %1219
      %1221 = vrot.lane.b32.xlu0 %v463, 24
      %v1222 = vpop.permute.xlu0 %1221
      %1223 = vrot.lane.b32.xlu0 %v466, 24
      %v1224 = vpop.permute.xlu0 %1223
      %1225 = vrot.lane.b32.xlu0 %v468, 24
      %v1226 = vpop.permute.xlu0 %1225
      %1227 = vrot.lane.b32.xlu0 %v471, 24
      %v1228 = vpop.permute.xlu0 %1227
      %1229 = vrot.lane.b32.xlu0 %v473, 24
      %v1230 = vpop.permute.xlu0 %1229
      %1231 = vrot.lane.b32.xlu0 %v476, 24
      %v1232 = vpop.permute.xlu0 %1231
      %1233 = vrot.lane.b32.xlu0 %v478, 24
      %v1234 = vpop.permute.xlu0 %1233
      %1235 = vrot.lane.b32.xlu0 %v481, 24
      %v1236 = vpop.permute.xlu0 %1235
      %1237 = vrot.lane.b32.xlu0 %v483, 24
      %v1238 = vpop.permute.xlu0 %1237
      %1239 = vrot.lane.b32.xlu0 %v486, 24
      %v1240 = vpop.permute.xlu0 %1239
      %1241 = vrot.lane.b32.xlu0 %v488, 24
      %v1242 = vpop.permute.xlu0 %1241
      %1243 = vrot.lane.b32.xlu0 %v499, 24
      %v1244 = vpop.permute.xlu0 %1243
      %1245 = vrot.lane.b32.xlu0 %v501, 24
      %v1246 = vpop.permute.xlu0 %1245
      %1247 = vrot.lane.b32.xlu0 %v512, 24
      %v1248 = vpop.permute.xlu0 %1247
      %1249 = vrot.lane.b32.xlu0 %v514, 24
      %v1250 = vpop.permute.xlu0 %1249
      %vm1283 = vcmask 23552
      %v1284 = vsel %vm1283, %v225, %v516
      %v1285 = vsel %vm1283, %v226, %v518
      %v1286 = vsel %vm1283, %v228, %v520
      %v1287 = vsel %vm1283, %v229, %v522
      %v1288 = vsel %vm1283, %v231, %v524
      %v1289 = vsel %vm1283, %v232, %v526
      %v1290 = vsel %vm1283, %v234, %v528
      %v1291 = vsel %vm1283, %v235, %v530
      %v1292 = vsel %vm1283, %v237, %v532
      %v1293 = vsel %vm1283, %v238, %v534
      %v1294 = vsel %vm1283, %v240, %v536
      %v1295 = vsel %vm1283, %v241, %v538
      %v1296 = vsel %vm1283, %v243, %v540
      %v1297 = vsel %vm1283, %v244, %v542
      %v1298 = vsel %vm1283, %v246, %v544
      %v1299 = vsel %vm1283, %v247, %v546
      %v1300 = vsel %vm1283, %v249, %v548
      %v1301 = vsel %vm1283, %v250, %v550
      %v1302 = vsel %vm1283, %v252, %v552
      %v1303 = vsel %vm1283, %v253, %v554
      %v1304 = vsel %vm1283, %v255, %v556
      %v1305 = vsel %vm1283, %v256, %v558
      %v1306 = vsel %vm1283, %v258, %v560
      %v1307 = vsel %vm1283, %v259, %v562
      %v1308 = vsel %vm1283, %v261, %v564
      %v1309 = vsel %vm1283, %v262, %v566
      %v1310 = vsel %vm1283, %v264, %v568
      %v1311 = vsel %vm1283, %v265, %v570
      %v1312 = vsel %vm1283, %v267, %v572
      %v1313 = vsel %vm1283, %v268, %v574
      %v1314 = vsel %vm1283, %v270, %v576
      %v1315 = vsel %vm1283, %v271, %v578
      %vm1316 = vcmask 48128
      %v1317 = vsel %vm1316, %v1284, %v612
      %v1318 = vsel %vm1316, %v1285, %v614
      %v1319 = vsel %vm1316, %v1286, %v616
      %v1320 = vsel %vm1316, %v1287, %v618
      %v1321 = vsel %vm1316, %v1288, %v620
      %v1322 = vsel %vm1316, %v1289, %v622
      %v1323 = vsel %vm1316, %v1290, %v624
      %v1324 = vsel %vm1316, %v1291, %v626
      %v1325 = vsel %vm1316, %v1292, %v628
      %v1326 = vsel %vm1316, %v1293, %v630
      %v1327 = vsel %vm1316, %v1294, %v632
      %v1328 = vsel %vm1316, %v1295, %v634
      %v1329 = vsel %vm1316, %v1296, %v636
      %v1330 = vsel %vm1316, %v1297, %v638
      %v1331 = vsel %vm1316, %v1298, %v640
      %v1332 = vsel %vm1316, %v1299, %v642
      %v1333 = vsel %vm1316, %v1300, %v644
      %v1334 = vsel %vm1316, %v1301, %v646
      %v1335 = vsel %vm1316, %v1302, %v648
      %v1336 = vsel %vm1316, %v1303, %v650
      %v1337 = vsel %vm1316, %v1304, %v652
      %v1338 = vsel %vm1316, %v1305, %v654
      %v1339 = vsel %vm1316, %v1306, %v656
      %v1340 = vsel %vm1316, %v1307, %v658
      %v1341 = vsel %vm1316, %v1308, %v660
      %v1342 = vsel %vm1316, %v1309, %v662
      %v1343 = vsel %vm1316, %v1310, %v664
      %v1344 = vsel %vm1316, %v1311, %v666
      %v1345 = vsel %vm1316, %v1312, %v668
      %v1346 = vsel %vm1316, %v1313, %v670
      %v1347 = vsel %vm1316, %v1314, %v672
      %v1348 = vsel %vm1316, %v1315, %v674
      %vm1349 = vcmask 72704
      %v1350 = vsel %vm1349, %v1317, %v708
      %v1351 = vsel %vm1349, %v1318, %v710
      %v1352 = vsel %vm1349, %v1319, %v712
      %v1353 = vsel %vm1349, %v1320, %v714
      %v1354 = vsel %vm1349, %v1321, %v716
      %v1355 = vsel %vm1349, %v1322, %v718
      %v1356 = vsel %vm1349, %v1323, %v720
      %v1357 = vsel %vm1349, %v1324, %v722
      %v1358 = vsel %vm1349, %v1325, %v724
      %v1359 = vsel %vm1349, %v1326, %v726
      %v1360 = vsel %vm1349, %v1327, %v728
      %v1361 = vsel %vm1349, %v1328, %v730
      %v1362 = vsel %vm1349, %v1329, %v732
      %v1363 = vsel %vm1349, %v1330, %v734
      %v1364 = vsel %vm1349, %v1331, %v736
      %v1365 = vsel %vm1349, %v1332, %v738
      %v1366 = vsel %vm1349, %v1333, %v740
      %v1367 = vsel %vm1349, %v1334, %v742
      %v1368 = vsel %vm1349, %v1335, %v744
      %v1369 = vsel %vm1349, %v1336, %v746
      %v1370 = vsel %vm1349, %v1337, %v748
      %v1371 = vsel %vm1349, %v1338, %v750
      %v1372 = vsel %vm1349, %v1339, %v752
      %v1373 = vsel %vm1349, %v1340, %v754
      %v1374 = vsel %vm1349, %v1341, %v756
      %v1375 = vsel %vm1349, %v1342, %v758
      %v1376 = vsel %vm1349, %v1343, %v760
      %v1377 = vsel %vm1349, %v1344, %v762
      %v1378 = vsel %vm1349, %v1345, %v764
      %v1379 = vsel %vm1349, %v1346, %v766
      %v1380 = vsel %vm1349, %v1347, %v768
      %v1381 = vsel %vm1349, %v1348, %v770
      %vm1382 = vcmask 97280
      %v1383 = vsel %vm1382, %v1350, %v804
      %v1384 = vsel %vm1382, %v1351, %v806
      %v1385 = vsel %vm1382, %v1352, %v808
      %v1386 = vsel %vm1382, %v1353, %v810
      %v1387 = vsel %vm1382, %v1354, %v812
      %v1388 = vsel %vm1382, %v1355, %v814
      %v1389 = vsel %vm1382, %v1356, %v816
      %v1390 = vsel %vm1382, %v1357, %v818
      %v1391 = vsel %vm1382, %v1358, %v820
      %v1392 = vsel %vm1382, %v1359, %v822
      %v1393 = vsel %vm1382, %v1360, %v824
      %v1394 = vsel %vm1382, %v1361, %v826
      %v1395 = vsel %vm1382, %v1362, %v828
      %v1396 = vsel %vm1382, %v1363, %v830
      %v1397 = vsel %vm1382, %v1364, %v832
      %v1398 = vsel %vm1382, %v1365, %v834
      %v1399 = vsel %vm1382, %v1366, %v836
      %v1400 = vsel %vm1382, %v1367, %v838
      %v1401 = vsel %vm1382, %v1368, %v840
      %v1402 = vsel %vm1382, %v1369, %v842
      %v1403 = vsel %vm1382, %v1370, %v844
      %v1404 = vsel %vm1382, %v1371, %v846
      %v1405 = vsel %vm1382, %v1372, %v848
      %v1406 = vsel %vm1382, %v1373, %v850
      %v1407 = vsel %vm1382, %v1374, %v852
      %v1408 = vsel %vm1382, %v1375, %v854
      %v1409 = vsel %vm1382, %v1376, %v856
      %v1410 = vsel %vm1382, %v1377, %v858
      %v1411 = vsel %vm1382, %v1378, %v860
      %v1412 = vsel %vm1382, %v1379, %v862
      %v1413 = vsel %vm1382, %v1380, %v864
      %v1414 = vsel %vm1382, %v1381, %v866
      %vm1415 = vcmask 121856
      %v1416 = vsel %vm1415, %v1383, %v900
      %v1417 = vsel %vm1415, %v1384, %v902
      %v1418 = vsel %vm1415, %v1385, %v904
      %v1419 = vsel %vm1415, %v1386, %v906
      %v1420 = vsel %vm1415, %v1387, %v908
      %v1421 = vsel %vm1415, %v1388, %v910
      %v1422 = vsel %vm1415, %v1389, %v912
      %v1423 = vsel %vm1415, %v1390, %v914
      %v1424 = vsel %vm1415, %v1391, %v916
      %v1425 = vsel %vm1415, %v1392, %v918
      %v1426 = vsel %vm1415, %v1393, %v920
      %v1427 = vsel %vm1415, %v1394, %v922
      %v1428 = vsel %vm1415, %v1395, %v924
      %v1429 = vsel %vm1415, %v1396, %v926
      %v1430 = vsel %vm1415, %v1397, %v928
      %v1431 = vsel %vm1415, %v1398, %v930
      %v1432 = vsel %vm1415, %v1399, %v932
      %v1433 = vsel %vm1415, %v1400, %v934
      %v1434 = vsel %vm1415, %v1401, %v936
      %v1435 = vsel %vm1415, %v1402, %v938
      %v1436 = vsel %vm1415, %v1403, %v940
      %v1437 = vsel %vm1415, %v1404, %v942
      %v1438 = vsel %vm1415, %v1405, %v944
      %v1439 = vsel %vm1415, %v1406, %v946
      %v1440 = vsel %vm1415, %v1407, %v948
      %v1441 = vsel %vm1415, %v1408, %v950
      %v1442 = vsel %vm1415, %v1409, %v952
      %v1443 = vsel %vm1415, %v1410, %v954
      %v1444 = vsel %vm1415, %v1411, %v956
      %v1445 = vsel %vm1415, %v1412, %v958
      %v1446 = vsel %vm1415, %v1413, %v960
      %v1447 = vsel %vm1415, %v1414, %v962
      %vm1448 = vcmask 146432
      %v1449 = vsel %vm1448, %v1416, %v996
      %v1450 = vsel %vm1448, %v1417, %v998
      %v1451 = vsel %vm1448, %v1418, %v1000
      %v1452 = vsel %vm1448, %v1419, %v1002
      %v1453 = vsel %vm1448, %v1420, %v1004
      %v1454 = vsel %vm1448, %v1421, %v1006
      %v1455 = vsel %vm1448, %v1422, %v1008
      %v1456 = vsel %vm1448, %v1423, %v1010
      %v1457 = vsel %vm1448, %v1424, %v1012
      %v1458 = vsel %vm1448, %v1425, %v1014
      %v1459 = vsel %vm1448, %v1426, %v1016
      %v1460 = vsel %vm1448, %v1427, %v1018
      %v1461 = vsel %vm1448, %v1428, %v1020
      %v1462 = vsel %vm1448, %v1429, %v1022
      %v1463 = vsel %vm1448, %v1430, %v1024
      %v1464 = vsel %vm1448, %v1431, %v1026
      %v1465 = vsel %vm1448, %v1432, %v1028
      %v1466 = vsel %vm1448, %v1433, %v1030
      %v1467 = vsel %vm1448, %v1434, %v1032
      %v1468 = vsel %vm1448, %v1435, %v1034
      %v1469 = vsel %vm1448, %v1436, %v1036
      %v1470 = vsel %vm1448, %v1437, %v1038
      %v1471 = vsel %vm1448, %v1438, %v1040
      %v1472 = vsel %vm1448, %v1439, %v1042
      %v1473 = vsel %vm1448, %v1440, %v1044
      %v1474 = vsel %vm1448, %v1441, %v1046
      %v1475 = vsel %vm1448, %v1442, %v1048
      %v1476 = vsel %vm1448, %v1443, %v1050
      %v1477 = vsel %vm1448, %v1444, %v1052
      %v1478 = vsel %vm1448, %v1445, %v1054
      %v1479 = vsel %vm1448, %v1446, %v1056
      %v1480 = vsel %vm1448, %v1447, %v1058
      %vm1481 = vcmask 171008
      %v1482 = vsel %vm1481, %v1449, %v1092
      %v1483 = vsel %vm1481, %v1450, %v1094
      %v1484 = vsel %vm1481, %v1451, %v1096
      %v1485 = vsel %vm1481, %v1452, %v1098
      %v1486 = vsel %vm1481, %v1453, %v1100
      %v1487 = vsel %vm1481, %v1454, %v1102
      %v1488 = vsel %vm1481, %v1455, %v1104
      %v1489 = vsel %vm1481, %v1456, %v1106
      %v1490 = vsel %vm1481, %v1457, %v1108
      %v1491 = vsel %vm1481, %v1458, %v1110
      %v1492 = vsel %vm1481, %v1459, %v1112
      %v1493 = vsel %vm1481, %v1460, %v1114
      %v1494 = vsel %vm1481, %v1461, %v1116
      %v1495 = vsel %vm1481, %v1462, %v1118
      %v1496 = vsel %vm1481, %v1463, %v1120
      %v1497 = vsel %vm1481, %v1464, %v1122
      %v1498 = vsel %vm1481, %v1465, %v1124
      %v1499 = vsel %vm1481, %v1466, %v1126
      %v1500 = vsel %vm1481, %v1467, %v1128
      %v1501 = vsel %vm1481, %v1468, %v1130
      %v1502 = vsel %vm1481, %v1469, %v1132
      %v1503 = vsel %vm1481, %v1470, %v1134
      %v1504 = vsel %vm1481, %v1471, %v1136
      %v1505 = vsel %vm1481, %v1472, %v1138
      %v1506 = vsel %vm1481, %v1473, %v1140
      %v1507 = vsel %vm1481, %v1474, %v1142
      %v1508 = vsel %vm1481, %v1475, %v1144
      %v1509 = vsel %vm1481, %v1476, %v1146
      %v1510 = vsel %vm1481, %v1477, %v1148
      %v1511 = vsel %vm1481, %v1478, %v1150
      %v1512 = vsel %vm1481, %v1479, %v1152
      %v1513 = vsel %vm1481, %v1480, %v1154
      %vm1514 = vcmask 195584
      %v1515 = vsel %vm1514, %v1482, %v1188
      %v1516 = vsel %vm1514, %v1483, %v1190
      %v1517 = vsel %vm1514, %v1484, %v1192
      %v1518 = vsel %vm1514, %v1485, %v1194
      %v1519 = vsel %vm1514, %v1486, %v1196
      %v1520 = vsel %vm1514, %v1487, %v1198
      %v1521 = vsel %vm1514, %v1488, %v1200
      %v1522 = vsel %vm1514, %v1489, %v1202
      %v1523 = vsel %vm1514, %v1490, %v1204
      %v1524 = vsel %vm1514, %v1491, %v1206
      %v1525 = vsel %vm1514, %v1492, %v1208
      %v1526 = vsel %vm1514, %v1493, %v1210
      %v1527 = vsel %vm1514, %v1494, %v1212
      %v1528 = vsel %vm1514, %v1495, %v1214
      %v1529 = vsel %vm1514, %v1496, %v1216
      %v1530 = vsel %vm1514, %v1497, %v1218
      %v1531 = vsel %vm1514, %v1498, %v1220
      %v1532 = vsel %vm1514, %v1499, %v1222
      %v1533 = vsel %vm1514, %v1500, %v1224
      %v1534 = vsel %vm1514, %v1501, %v1226
      %v1535 = vsel %vm1514, %v1502, %v1228
      %v1536 = vsel %vm1514, %v1503, %v1230
      %v1537 = vsel %vm1514, %v1504, %v1232
      %v1538 = vsel %vm1514, %v1505, %v1234
      %v1539 = vsel %vm1514, %v1506, %v1236
      %v1540 = vsel %vm1514, %v1507, %v1238
      %v1541 = vsel %vm1514, %v1508, %v1240
      %v1542 = vsel %vm1514, %v1509, %v1242
      %v1543 = vsel %vm1514, %v1510, %v1244
      %v1544 = vsel %vm1514, %v1511, %v1246
      %v1545 = vsel %vm1514, %v1512, %v1248
      %v1546 = vsel %vm1514, %v1513, %v1250
      %v1547 = vld [vmem:[%s1] sm:$0xff]
      %v1548 = vld [vmem:[%s1 + $0x8] sm:$0xff]
      %v1549 = vld [vmem:[%s1 + $0x10] sm:$0xff]
      %v1550 = vld [vmem:[%s1 + $0x18] sm:$0x7]
      %vm1551 = vcmask 220160
      %v1553 = vsel %vm1551, %v1515, 0
      %v1556 = vsel %vm1551, %v1516, 0
      %v1559 = vsel %vm1551, %v1517, 0
      %v1562 = vsel %vm1551, %v1518, 0
      %v1565 = vsel %vm1551, %v1519, 0
      %v1568 = vsel %vm1551, %v1520, 0
      %v1571 = vsel %vm1551, %v1521, 0
      %v1574 = vsel %vm1551, %v1522, 0
      %v1577 = vsel %vm1551, %v1523, 0
      %v1580 = vsel %vm1551, %v1524, 0
      %v1583 = vsel %vm1551, %v1525, 0
      %v1586 = vsel %vm1551, %v1526, 0
      %v1589 = vsel %vm1551, %v1527, 0
      %v1592 = vsel %vm1551, %v1528, 0
      %v1595 = vsel %vm1551, %v1529, 0
      %v1598 = vsel %vm1551, %v1530, 0
      %v1601 = vsel %vm1551, %v1531, 0
      %v1604 = vsel %vm1551, %v1532, 0
      %v1607 = vsel %vm1551, %v1533, 0
      %v1610 = vsel %vm1551, %v1534, 0
      %v1613 = vsel %vm1551, %v1535, 0
      %v1616 = vsel %vm1551, %v1536, 0
      %v1619 = vsel %vm1551, %v1537, 0
      %v1622 = vsel %vm1551, %v1538, 0
      %v1625 = vsel %vm1551, %v1539, 0
      %v1628 = vsel %vm1551, %v1540, 0
      %v1631 = vsel %vm1551, %v1541, 0
      %v1634 = vsel %vm1551, %v1542, 0
      %v1637 = vsel %vm1551, %v1543, 0
      %v1640 = vsel %vm1551, %v1544, 0
      %v1643 = vsel %vm1551, %v1545, 0
      %v1646 = vsel %vm1551, %v1546, 0
      %vm1648 = vcmask 1042432
      %v1650 = vsel %vm1648, %v1550, 0
      %1652 = vmatpush.msra.mxu0 0.0
      %1653 = vmatpush.msra.mxu0 0.0
      %1654 = vmatpush.msra.mxu0 0.0
      %1655 = vmatpush.msra.mxu0 0.0
      %1656 = vmatpush.msra.mxu0 0.0
      %1657 = vmatpush.msra.mxu0 0.0
      %1658 = vmatpush.msra.mxu0 0.0
      %1659 = vmatpush.msra.mxu0 0.0
      %1660 = vmatpush.msra.mxu0 0.0
      %1661 = vmatpush.msra.mxu0 0.0
      %1662 = vmatpush.msra.mxu0 0.0
      %1663 = vmatpush.msra.mxu0 0.0
      %1664 = vmatpush.msra.mxu0 %v1650
      %1665 = vmatpush.msra.mxu0 %v1549
      %1666 = vmatpush.msra.mxu0 %v1548
      %1667 = vmatpush.msra.mxu0 %v1547
      %1668 = vmatmul.f32.gmra.mxu0 %v1553
      %v1669 = vpop.f32.mrf.mxu0
      %v1670 = vadd.f32 0.0, %v1669
      %1671 = vmatmul.f32.gmra.mxu0 %v1556
      %v1672 = vpop.f32.mrf.mxu0
      %v1673 = vadd.f32 0.0, %v1672
      %1674 = vmatmul.f32.gmra.mxu0 %v1559
      %v1675 = vpop.f32.mrf.mxu0
      %v1676 = vadd.f32 0.0, %v1675
      %1677 = vmatmul.f32.gmra.mxu0 %v1562
      %v1678 = vpop.f32.mrf.mxu0
      %v1679 = vadd.f32 0.0, %v1678
      %1680 = vmatmul.f32.gmra.mxu0 %v1565
      %v1681 = vpop.f32.mrf.mxu0
      %v1682 = vadd.f32 0.0, %v1681
      %1683 = vmatmul.f32.gmra.mxu0 %v1568
      %v1684 = vpop.f32.mrf.mxu0
      %v1685 = vadd.f32 0.0, %v1684
      %1686 = vmatmul.f32.gmra.mxu0 %v1571
      %v1687 = vpop.f32.mrf.mxu0
      %v1688 = vadd.f32 0.0, %v1687
      %1689 = vmatmul.f32.gmra.mxu0 %v1574
      %v1690 = vpop.f32.mrf.mxu0
      %v1691 = vadd.f32 0.0, %v1690
      %1692 = vmatmul.f32.gmra.mxu0 %v1577
      %v1693 = vpop.f32.mrf.mxu0
      %v1694 = vadd.f32 0.0, %v1693
      %1695 = vmatmul.f32.gmra.mxu0 %v1580
      %v1696 = vpop.f32.mrf.mxu0
      %v1697 = vadd.f32 0.0, %v1696
      %1698 = vmatmul.f32.gmra.mxu0 %v1583
      %v1699 = vpop.f32.mrf.mxu0
      %v1700 = vadd.f32 0.0, %v1699
      %1701 = vmatmul.f32.gmra.mxu0 %v1586
      %v1702 = vpop.f32.mrf.mxu0
      %v1703 = vadd.f32 0.0, %v1702
      %1704 = vmatmul.f32.gmra.mxu0 %v1589
      %v1705 = vpop.f32.mrf.mxu0
      %v1706 = vadd.f32 0.0, %v1705
      %1707 = vmatmul.f32.gmra.mxu0 %v1592
      %v1708 = vpop.f32.mrf.mxu0
      %v1709 = vadd.f32 0.0, %v1708
      %1710 = vmatmul.f32.gmra.mxu0 %v1595
      %v1711 = vpop.f32.mrf.mxu0
      %v1712 = vadd.f32 0.0, %v1711
      %1713 = vmatmul.f32.gmra.mxu0 %v1598
      %v1714 = vpop.f32.mrf.mxu0
      %v1715 = vadd.f32 0.0, %v1714
      %1716 = vmatmul.f32.gmra.mxu0 %v1601
      %v1717 = vpop.f32.mrf.mxu0
      %v1718 = vadd.f32 0.0, %v1717
      %1719 = vmatmul.f32.gmra.mxu0 %v1604
      %v1720 = vpop.f32.mrf.mxu0
      %v1721 = vadd.f32 0.0, %v1720
      %1722 = vmatmul.f32.gmra.mxu0 %v1607
      %v1723 = vpop.f32.mrf.mxu0
      %v1724 = vadd.f32 0.0, %v1723
      %1725 = vmatmul.f32.gmra.mxu0 %v1610
      %v1726 = vpop.f32.mrf.mxu0
      %v1727 = vadd.f32 0.0, %v1726
      %1728 = vmatmul.f32.gmra.mxu0 %v1613
      %v1729 = vpop.f32.mrf.mxu0
      %v1730 = vadd.f32 0.0, %v1729
      %1731 = vmatmul.f32.gmra.mxu0 %v1616
      %v1732 = vpop.f32.mrf.mxu0
      %v1733 = vadd.f32 0.0, %v1732
      %1734 = vmatmul.f32.gmra.mxu0 %v1619
      %v1735 = vpop.f32.mrf.mxu0
      %v1736 = vadd.f32 0.0, %v1735
      %1737 = vmatmul.f32.gmra.mxu0 %v1622
      %v1738 = vpop.f32.mrf.mxu0
      %v1739 = vadd.f32 0.0, %v1738
      %1740 = vmatmul.f32.gmra.mxu0 %v1625
      %v1741 = vpop.f32.mrf.mxu0
      %v1742 = vadd.f32 0.0, %v1741
      %1743 = vmatmul.f32.gmra.mxu0 %v1628
      %v1744 = vpop.f32.mrf.mxu0
      %v1745 = vadd.f32 0.0, %v1744
      %1746 = vmatmul.f32.gmra.mxu0 %v1631
      %v1747 = vpop.f32.mrf.mxu0
      %v1748 = vadd.f32 0.0, %v1747
      %1749 = vmatmul.f32.gmra.mxu0 %v1634
      %v1750 = vpop.f32.mrf.mxu0
      %v1751 = vadd.f32 0.0, %v1750
      %1752 = vmatmul.f32.gmra.mxu0 %v1637
      %v1753 = vpop.f32.mrf.mxu0
      %v1754 = vadd.f32 0.0, %v1753
      %1755 = vmatmul.f32.gmra.mxu0 %v1640
      %v1756 = vpop.f32.mrf.mxu0
      %v1757 = vadd.f32 0.0, %v1756
      %1758 = vmatmul.f32.gmra.mxu0 %v1643
      %v1759 = vpop.f32.mrf.mxu0
      %v1760 = vadd.f32 0.0, %v1759
      %1761 = vmatmul.f32.gmra.mxu0 %v1646
      %v1762 = vpop.f32.mrf.mxu0
      %v1763 = vadd.f32 0.0, %v1762
      %1764 = vdwg.mxu0
      %v1797 = vrot.slane %v1670, 2
      %v1798 = vrot.slane %v1670, 4
      %v1799 = vrot.slane %v1670, 6
      %v1800 = vrot.slane %v1673, 2
      %v1801 = vrot.slane %v1673, 4
      %v1802 = vrot.slane %v1673, 6
      %v1803 = vrot.slane %v1676, 2
      %v1804 = vrot.slane %v1676, 4
      %v1805 = vrot.slane %v1676, 6
      %v1806 = vrot.slane %v1679, 2
      %v1807 = vrot.slane %v1679, 4
      %v1808 = vrot.slane %v1679, 6
      %v1809 = vrot.slane %v1682, 2
      %v1810 = vrot.slane %v1682, 4
      %v1811 = vrot.slane %v1682, 6
      %v1812 = vrot.slane %v1685, 2
      %v1813 = vrot.slane %v1685, 4
      %v1814 = vrot.slane %v1685, 6
      %v1815 = vrot.slane %v1688, 2
      %v1816 = vrot.slane %v1688, 4
      %v1817 = vrot.slane %v1688, 6
      %v1818 = vrot.slane %v1691, 2
      %v1819 = vrot.slane %v1691, 4
      %v1820 = vrot.slane %v1691, 6
      %v1821 = vrot.slane %v1694, 2
      %v1822 = vrot.slane %v1694, 4
      %v1823 = vrot.slane %v1694, 6
      %v1824 = vrot.slane %v1697, 2
      %v1825 = vrot.slane %v1697, 4
      %v1826 = vrot.slane %v1697, 6
      %v1827 = vrot.slane %v1700, 2
      %v1828 = vrot.slane %v1700, 4
      %v1829 = vrot.slane %v1700, 6
      %v1830 = vrot.slane %v1703, 2
      %v1831 = vrot.slane %v1703, 4
      %v1832 = vrot.slane %v1703, 6
      %v1833 = vrot.slane %v1706, 2
      %v1834 = vrot.slane %v1706, 4
      %v1835 = vrot.slane %v1706, 6
      %v1836 = vrot.slane %v1709, 2
      %v1837 = vrot.slane %v1709, 4
      %v1838 = vrot.slane %v1709, 6
      %v1839 = vrot.slane %v1712, 2
      %v1840 = vrot.slane %v1712, 4
      %v1841 = vrot.slane %v1712, 6
      %v1842 = vrot.slane %v1715, 2
      %v1843 = vrot.slane %v1715, 4
      %v1844 = vrot.slane %v1715, 6
      %v1845 = vrot.slane %v1718, 2
      %v1846 = vrot.slane %v1718, 4
      %v1847 = vrot.slane %v1718, 6
      %v1848 = vrot.slane %v1721, 2
      %v1849 = vrot.slane %v1721, 4
      %v1850 = vrot.slane %v1721, 6
      %v1851 = vrot.slane %v1724, 2
      %v1852 = vrot.slane %v1724, 4
      %v1853 = vrot.slane %v1724, 6
      %v1854 = vrot.slane %v1727, 2
      %v1855 = vrot.slane %v1727, 4
      %v1856 = vrot.slane %v1727, 6
      %v1857 = vrot.slane %v1730, 2
      %v1858 = vrot.slane %v1730, 4
      %v1859 = vrot.slane %v1730, 6
      %v1860 = vrot.slane %v1733, 2
      %v1861 = vrot.slane %v1733, 4
      %v1862 = vrot.slane %v1733, 6
      %v1863 = vrot.slane %v1736, 2
      %v1864 = vrot.slane %v1736, 4
      %v1865 = vrot.slane %v1736, 6
      %v1866 = vrot.slane %v1739, 2
      %v1867 = vrot.slane %v1739, 4
      %v1868 = vrot.slane %v1739, 6
      %v1869 = vrot.slane %v1742, 2
      %v1870 = vrot.slane %v1742, 4
      %v1871 = vrot.slane %v1742, 6
      %v1872 = vrot.slane %v1745, 2
      %v1873 = vrot.slane %v1745, 4
      %v1874 = vrot.slane %v1745, 6
      %v1875 = vrot.slane %v1748, 2
      %v1876 = vrot.slane %v1748, 4
      %v1877 = vrot.slane %v1748, 6
      %v1878 = vrot.slane %v1751, 2
      %v1879 = vrot.slane %v1751, 4
      %v1880 = vrot.slane %v1751, 6
      %v1881 = vrot.slane %v1754, 2
      %v1882 = vrot.slane %v1754, 4
      %v1883 = vrot.slane %v1754, 6
      %v1884 = vrot.slane %v1757, 2
      %v1885 = vrot.slane %v1757, 4
      %v1886 = vrot.slane %v1757, 6
      %v1887 = vrot.slane %v1760, 2
      %v1888 = vrot.slane %v1760, 4
      %v1889 = vrot.slane %v1760, 6
      %v1890 = vrot.slane %v1763, 2
      %v1891 = vrot.slane %v1763, 4
      %v1892 = vrot.slane %v1763, 6
      %v1989 = vrot.slane %v1670, 7
      %v1990 = vrot.slane %v1989, 2
      %v1991 = vrot.slane %v1797, 7
      %v1992 = vrot.slane %v1991, 2
      %v1993 = vrot.slane %v1798, 7
      %v1994 = vrot.slane %v1993, 2
      %v1995 = vrot.slane %v1799, 7
      %v1996 = vrot.slane %v1995, 2
      %v1997 = vrot.slane %v1673, 7
      %v1998 = vrot.slane %v1997, 2
      %v1999 = vrot.slane %v1800, 7
      %v2000 = vrot.slane %v1999, 2
      %v2001 = vrot.slane %v1801, 7
      %v2002 = vrot.slane %v2001, 2
      %v2003 = vrot.slane %v1802, 7
      %v2004 = vrot.slane %v2003, 2
      %v2005 = vrot.slane %v1676, 7
      %v2006 = vrot.slane %v2005, 2
      %v2007 = vrot.slane %v1803, 7
      %v2008 = vrot.slane %v2007, 2
      %v2009 = vrot.slane %v1804, 7
      %v2010 = vrot.slane %v2009, 2
      %v2011 = vrot.slane %v1805, 7
      %v2012 = vrot.slane %v2011, 2
      %v2013 = vrot.slane %v1679, 7
      %v2014 = vrot.slane %v2013, 2
      %v2015 = vrot.slane %v1806, 7
      %v2016 = vrot.slane %v2015, 2
      %v2017 = vrot.slane %v1807, 7
      %v2018 = vrot.slane %v2017, 2
      %v2019 = vrot.slane %v1808, 7
      %v2020 = vrot.slane %v2019, 2
      %v2021 = vrot.slane %v1682, 7
      %v2022 = vrot.slane %v2021, 2
      %v2023 = vrot.slane %v1809, 7
      %v2024 = vrot.slane %v2023, 2
      %v2025 = vrot.slane %v1810, 7
      %v2026 = vrot.slane %v2025, 2
      %v2027 = vrot.slane %v1811, 7
      %v2028 = vrot.slane %v2027, 2
      %v2029 = vrot.slane %v1685, 7
      %v2030 = vrot.slane %v2029, 2
      %v2031 = vrot.slane %v1812, 7
      %v2032 = vrot.slane %v2031, 2
      %v2033 = vrot.slane %v1813, 7
      %v2034 = vrot.slane %v2033, 2
      %v2035 = vrot.slane %v1814, 7
      %v2036 = vrot.slane %v2035, 2
      %v2037 = vrot.slane %v1688, 7
      %v2038 = vrot.slane %v2037, 2
      %v2039 = vrot.slane %v1815, 7
      %v2040 = vrot.slane %v2039, 2
      %v2041 = vrot.slane %v1816, 7
      %v2042 = vrot.slane %v2041, 2
      %v2043 = vrot.slane %v1817, 7
      %v2044 = vrot.slane %v2043, 2
      %v2045 = vrot.slane %v1691, 7
      %v2046 = vrot.slane %v2045, 2
      %v2047 = vrot.slane %v1818, 7
      %v2048 = vrot.slane %v2047, 2
      %v2049 = vrot.slane %v1819, 7
      %v2050 = vrot.slane %v2049, 2
      %v2051 = vrot.slane %v1820, 7
      %v2052 = vrot.slane %v2051, 2
      %v2053 = vrot.slane %v1694, 7
      %v2054 = vrot.slane %v2053, 2
      %v2055 = vrot.slane %v1821, 7
      %v2056 = vrot.slane %v2055, 2
      %v2057 = vrot.slane %v1822, 7
      %v2058 = vrot.slane %v2057, 2
      %v2059 = vrot.slane %v1823, 7
      %v2060 = vrot.slane %v2059, 2
      %v2061 = vrot.slane %v1697, 7
      %v2062 = vrot.slane %v2061, 2
      %v2063 = vrot.slane %v1824, 7
      %v2064 = vrot.slane %v2063, 2
      %v2065 = vrot.slane %v1825, 7
      %v2066 = vrot.slane %v2065, 2
      %v2067 = vrot.slane %v1826, 7
      %v2068 = vrot.slane %v2067, 2
      %v2069 = vrot.slane %v1700, 7
      %v2070 = vrot.slane %v2069, 2
      %v2071 = vrot.slane %v1827, 7
      %v2072 = vrot.slane %v2071, 2
      %v2073 = vrot.slane %v1828, 7
      %v2074 = vrot.slane %v2073, 2
      %v2075 = vrot.slane %v1829, 7
      %v2076 = vrot.slane %v2075, 2
      %v2077 = vrot.slane %v1703, 7
      %v2078 = vrot.slane %v2077, 2
      %v2079 = vrot.slane %v1830, 7
      %v2080 = vrot.slane %v2079, 2
      %v2081 = vrot.slane %v1831, 7
      %v2082 = vrot.slane %v2081, 2
      %v2083 = vrot.slane %v1832, 7
      %v2084 = vrot.slane %v2083, 2
      %v2085 = vrot.slane %v1706, 7
      %v2086 = vrot.slane %v2085, 2
      %v2087 = vrot.slane %v1833, 7
      %v2088 = vrot.slane %v2087, 2
      %v2089 = vrot.slane %v1834, 7
      %v2090 = vrot.slane %v2089, 2
      %v2091 = vrot.slane %v1835, 7
      %v2092 = vrot.slane %v2091, 2
      %v2093 = vrot.slane %v1709, 7
      %v2094 = vrot.slane %v2093, 2
      %v2095 = vrot.slane %v1836, 7
      %v2096 = vrot.slane %v2095, 2
      %v2097 = vrot.slane %v1837, 7
      %v2098 = vrot.slane %v2097, 2
      %v2099 = vrot.slane %v1838, 7
      %v2100 = vrot.slane %v2099, 2
      %v2101 = vrot.slane %v1712, 7
      %v2102 = vrot.slane %v2101, 2
      %v2103 = vrot.slane %v1839, 7
      %v2104 = vrot.slane %v2103, 2
      %v2105 = vrot.slane %v1840, 7
      %v2106 = vrot.slane %v2105, 2
      %v2107 = vrot.slane %v1841, 7
      %v2108 = vrot.slane %v2107, 2
      %v2109 = vrot.slane %v1715, 7
      %v2110 = vrot.slane %v2109, 2
      %v2111 = vrot.slane %v1842, 7
      %v2112 = vrot.slane %v2111, 2
      %v2113 = vrot.slane %v1843, 7
      %v2114 = vrot.slane %v2113, 2
      %v2115 = vrot.slane %v1844, 7
      %v2116 = vrot.slane %v2115, 2
      %v2117 = vrot.slane %v1718, 7
      %v2118 = vrot.slane %v2117, 2
      %v2119 = vrot.slane %v1845, 7
      %v2120 = vrot.slane %v2119, 2
      %v2121 = vrot.slane %v1846, 7
      %v2122 = vrot.slane %v2121, 2
      %v2123 = vrot.slane %v1847, 7
      %v2124 = vrot.slane %v2123, 2
      %v2125 = vrot.slane %v1721, 7
      %v2126 = vrot.slane %v2125, 2
      %v2127 = vrot.slane %v1848, 7
      %v2128 = vrot.slane %v2127, 2
      %v2129 = vrot.slane %v1849, 7
      %v2130 = vrot.slane %v2129, 2
      %v2131 = vrot.slane %v1850, 7
      %v2132 = vrot.slane %v2131, 2
      %v2133 = vrot.slane %v1724, 7
      %v2134 = vrot.slane %v2133, 2
      %v2135 = vrot.slane %v1851, 7
      %v2136 = vrot.slane %v2135, 2
      %v2137 = vrot.slane %v1852, 7
      %v2138 = vrot.slane %v2137, 2
      %v2139 = vrot.slane %v1853, 7
      %v2140 = vrot.slane %v2139, 2
      %v2141 = vrot.slane %v1727, 7
      %v2142 = vrot.slane %v2141, 2
      %v2143 = vrot.slane %v1854, 7
      %v2144 = vrot.slane %v2143, 2
      %v2145 = vrot.slane %v1855, 7
      %v2146 = vrot.slane %v2145, 2
      %v2147 = vrot.slane %v1856, 7
      %v2148 = vrot.slane %v2147, 2
      %v2149 = vrot.slane %v1730, 7
      %v2150 = vrot.slane %v2149, 2
      %v2151 = vrot.slane %v1857, 7
      %v2152 = vrot.slane %v2151, 2
      %v2153 = vrot.slane %v1858, 7
      %v2154 = vrot.slane %v2153, 2
      %v2155 = vrot.slane %v1859, 7
      %v2156 = vrot.slane %v2155, 2
      %v2157 = vrot.slane %v1733, 7
      %v2158 = vrot.slane %v2157, 2
      %v2159 = vrot.slane %v1860, 7
      %v2160 = vrot.slane %v2159, 2
      %v2161 = vrot.slane %v1861, 7
      %v2162 = vrot.slane %v2161, 2
      %v2163 = vrot.slane %v1862, 7
      %v2164 = vrot.slane %v2163, 2
      %v2165 = vrot.slane %v1736, 7
      %v2166 = vrot.slane %v2165, 2
      %v2167 = vrot.slane %v1863, 7
      %v2168 = vrot.slane %v2167, 2
      %v2169 = vrot.slane %v1864, 7
      %v2170 = vrot.slane %v2169, 2
      %v2171 = vrot.slane %v1865, 7
      %v2172 = vrot.slane %v2171, 2
      %v2173 = vrot.slane %v1739, 7
      %v2174 = vrot.slane %v2173, 2
      %v2175 = vrot.slane %v1866, 7
      %v2176 = vrot.slane %v2175, 2
      %v2177 = vrot.slane %v1867, 7
      %v2178 = vrot.slane %v2177, 2
      %v2179 = vrot.slane %v1868, 7
      %v2180 = vrot.slane %v2179, 2
      %v2181 = vrot.slane %v1742, 7
      %v2182 = vrot.slane %v2181, 2
      %v2183 = vrot.slane %v1869, 7
      %v2184 = vrot.slane %v2183, 2
      %v2185 = vrot.slane %v1870, 7
      %v2186 = vrot.slane %v2185, 2
      %v2187 = vrot.slane %v1871, 7
      %v2188 = vrot.slane %v2187, 2
      %v2189 = vrot.slane %v1745, 7
      %v2190 = vrot.slane %v2189, 2
      %v2191 = vrot.slane %v1872, 7
      %v2192 = vrot.slane %v2191, 2
      %v2193 = vrot.slane %v1873, 7
      %v2194 = vrot.slane %v2193, 2
      %v2195 = vrot.slane %v1874, 7
      %v2196 = vrot.slane %v2195, 2
      %v2197 = vrot.slane %v1748, 7
      %v2198 = vrot.slane %v2197, 2
      %v2199 = vrot.slane %v1875, 7
      %v2200 = vrot.slane %v2199, 2
      %v2201 = vrot.slane %v1876, 7
      %v2202 = vrot.slane %v2201, 2
      %v2203 = vrot.slane %v1877, 7
      %v2204 = vrot.slane %v2203, 2
      %v2205 = vrot.slane %v1751, 7
      %v2206 = vrot.slane %v2205, 2
      %v2207 = vrot.slane %v1878, 7
      %v2208 = vrot.slane %v2207, 2
      %v2209 = vrot.slane %v1879, 7
      %v2210 = vrot.slane %v2209, 2
      %v2211 = vrot.slane %v1880, 7
      %v2212 = vrot.slane %v2211, 2
      %v2213 = vrot.slane %v1754, 7
      %v2214 = vrot.slane %v2213, 2
      %v2215 = vrot.slane %v1881, 7
      %v2216 = vrot.slane %v2215, 2
      %v2217 = vrot.slane %v1882, 7
      %v2218 = vrot.slane %v2217, 2
      %v2219 = vrot.slane %v1883, 7
      %v2220 = vrot.slane %v2219, 2
      %v2221 = vrot.slane %v1757, 7
      %v2222 = vrot.slane %v2221, 2
      %v2223 = vrot.slane %v1884, 7
      %v2224 = vrot.slane %v2223, 2
      %v2225 = vrot.slane %v1885, 7
      %v2226 = vrot.slane %v2225, 2
      %v2227 = vrot.slane %v1886, 7
      %v2228 = vrot.slane %v2227, 2
      %v2229 = vrot.slane %v1760, 7
      %v2230 = vrot.slane %v2229, 2
      %v2231 = vrot.slane %v1887, 7
      %v2232 = vrot.slane %v2231, 2
      %v2233 = vrot.slane %v1888, 7
      %v2234 = vrot.slane %v2233, 2
      %v2235 = vrot.slane %v1889, 7
      %v2236 = vrot.slane %v2235, 2
      %v2237 = vrot.slane %v1763, 7
      %v2238 = vrot.slane %v2237, 2
      %v2239 = vrot.slane %v1890, 7
      %v2240 = vrot.slane %v2239, 2
      %v2241 = vrot.slane %v1891, 7
      %v2242 = vrot.slane %v2241, 2
      %v2243 = vrot.slane %v1892, 7
      %v2244 = vrot.slane %v2243, 2
      %v2373 = vmax.f32 %v1670, %v1990
      %v2374 = vmax.f32 %v1797, %v1992
      %v2375 = vmax.f32 %v1798, %v1994
      %v2376 = vmax.f32 %v1799, %v1996
      %v2377 = vmax.f32 %v1673, %v1998
      %v2378 = vmax.f32 %v1800, %v2000
      %v2379 = vmax.f32 %v1801, %v2002
      %v2380 = vmax.f32 %v1802, %v2004
      %v2381 = vmax.f32 %v1676, %v2006
      %v2382 = vmax.f32 %v1803, %v2008
      %v2383 = vmax.f32 %v1804, %v2010
      %v2384 = vmax.f32 %v1805, %v2012
      %v2385 = vmax.f32 %v1679, %v2014
      %v2386 = vmax.f32 %v1806, %v2016
      %v2387 = vmax.f32 %v1807, %v2018
      %v2388 = vmax.f32 %v1808, %v2020
      %v2389 = vmax.f32 %v1682, %v2022
      %v2390 = vmax.f32 %v1809, %v2024
      %v2391 = vmax.f32 %v1810, %v2026
      %v2392 = vmax.f32 %v1811, %v2028
      %v2393 = vmax.f32 %v1685, %v2030
      %v2394 = vmax.f32 %v1812, %v2032
      %v2395 = vmax.f32 %v1813, %v2034
      %v2396 = vmax.f32 %v1814, %v2036
      %v2397 = vmax.f32 %v1688, %v2038
      %v2398 = vmax.f32 %v1815, %v2040
      %v2399 = vmax.f32 %v1816, %v2042
      %v2400 = vmax.f32 %v1817, %v2044
      %v2401 = vmax.f32 %v1691, %v2046
      %v2402 = vmax.f32 %v1818, %v2048
      %v2403 = vmax.f32 %v1819, %v2050
      %v2404 = vmax.f32 %v1820, %v2052
      %v2405 = vmax.f32 %v1694, %v2054
      %v2406 = vmax.f32 %v1821, %v2056
      %v2407 = vmax.f32 %v1822, %v2058
      %v2408 = vmax.f32 %v1823, %v2060
      %v2409 = vmax.f32 %v1697, %v2062
      %v2410 = vmax.f32 %v1824, %v2064
      %v2411 = vmax.f32 %v1825, %v2066
      %v2412 = vmax.f32 %v1826, %v2068
      %v2413 = vmax.f32 %v1700, %v2070
      %v2414 = vmax.f32 %v1827, %v2072
      %v2415 = vmax.f32 %v1828, %v2074
      %v2416 = vmax.f32 %v1829, %v2076
      %v2417 = vmax.f32 %v1703, %v2078
      %v2418 = vmax.f32 %v1830, %v2080
      %v2419 = vmax.f32 %v1831, %v2082
      %v2420 = vmax.f32 %v1832, %v2084
      %v2421 = vmax.f32 %v1706, %v2086
      %v2422 = vmax.f32 %v1833, %v2088
      %v2423 = vmax.f32 %v1834, %v2090
      %v2424 = vmax.f32 %v1835, %v2092
      %v2425 = vmax.f32 %v1709, %v2094
      %v2426 = vmax.f32 %v1836, %v2096
      %v2427 = vmax.f32 %v1837, %v2098
      %v2428 = vmax.f32 %v1838, %v2100
      %v2429 = vmax.f32 %v1712, %v2102
      %v2430 = vmax.f32 %v1839, %v2104
      %v2431 = vmax.f32 %v1840, %v2106
      %v2432 = vmax.f32 %v1841, %v2108
      %v2433 = vmax.f32 %v1715, %v2110
      %v2434 = vmax.f32 %v1842, %v2112
      %v2435 = vmax.f32 %v1843, %v2114
      %v2436 = vmax.f32 %v1844, %v2116
      %v2437 = vmax.f32 %v1718, %v2118
      %v2438 = vmax.f32 %v1845, %v2120
      %v2439 = vmax.f32 %v1846, %v2122
      %v2440 = vmax.f32 %v1847, %v2124
      %v2441 = vmax.f32 %v1721, %v2126
      %v2442 = vmax.f32 %v1848, %v2128
      %v2443 = vmax.f32 %v1849, %v2130
      %v2444 = vmax.f32 %v1850, %v2132
      %v2445 = vmax.f32 %v1724, %v2134
      %v2446 = vmax.f32 %v1851, %v2136
      %v2447 = vmax.f32 %v1852, %v2138
      %v2448 = vmax.f32 %v1853, %v2140
      %v2449 = vmax.f32 %v1727, %v2142
      %v2450 = vmax.f32 %v1854, %v2144
      %v2451 = vmax.f32 %v1855, %v2146
      %v2452 = vmax.f32 %v1856, %v2148
      %v2453 = vmax.f32 %v1730, %v2150
      %v2454 = vmax.f32 %v1857, %v2152
      %v2455 = vmax.f32 %v1858, %v2154
      %v2456 = vmax.f32 %v1859, %v2156
      %v2457 = vmax.f32 %v1733, %v2158
      %v2458 = vmax.f32 %v1860, %v2160
      %v2459 = vmax.f32 %v1861, %v2162
      %v2460 = vmax.f32 %v1862, %v2164
      %v2461 = vmax.f32 %v1736, %v2166
      %v2462 = vmax.f32 %v1863, %v2168
      %v2463 = vmax.f32 %v1864, %v2170
      %v2464 = vmax.f32 %v1865, %v2172
      %v2465 = vmax.f32 %v1739, %v2174
      %v2466 = vmax.f32 %v1866, %v2176
      %v2467 = vmax.f32 %v1867, %v2178
      %v2468 = vmax.f32 %v1868, %v2180
      %v2469 = vmax.f32 %v1742, %v2182
      %v2470 = vmax.f32 %v1869, %v2184
      %v2471 = vmax.f32 %v1870, %v2186
      %v2472 = vmax.f32 %v1871, %v2188
      %v2473 = vmax.f32 %v1745, %v2190
      %v2474 = vmax.f32 %v1872, %v2192
      %v2475 = vmax.f32 %v1873, %v2194
      %v2476 = vmax.f32 %v1874, %v2196
      %v2477 = vmax.f32 %v1748, %v2198
      %v2478 = vmax.f32 %v1875, %v2200
      %v2479 = vmax.f32 %v1876, %v2202
      %v2480 = vmax.f32 %v1877, %v2204
      %v2481 = vmax.f32 %v1751, %v2206
      %v2482 = vmax.f32 %v1878, %v2208
      %v2483 = vmax.f32 %v1879, %v2210
      %v2484 = vmax.f32 %v1880, %v2212
      %v2485 = vmax.f32 %v1754, %v2214
      %v2486 = vmax.f32 %v1881, %v2216
      %v2487 = vmax.f32 %v1882, %v2218
      %v2488 = vmax.f32 %v1883, %v2220
      %v2489 = vmax.f32 %v1757, %v2222
      %v2490 = vmax.f32 %v1884, %v2224
      %v2491 = vmax.f32 %v1885, %v2226
      %v2492 = vmax.f32 %v1886, %v2228
      %v2493 = vmax.f32 %v1760, %v2230
      %v2494 = vmax.f32 %v1887, %v2232
      %v2495 = vmax.f32 %v1888, %v2234
      %v2496 = vmax.f32 %v1889, %v2236
      %v2497 = vmax.f32 %v1763, %v2238
      %v2498 = vmax.f32 %v1890, %v2240
      %v2499 = vmax.f32 %v1891, %v2242
      %v2500 = vmax.f32 %v1892, %v2244
      %v2501 = vmax.f32 %v2373, %v2381
      %v2502 = vmax.f32 %v2374, %v2382
      %v2503 = vmax.f32 %v2375, %v2383
      %v2504 = vmax.f32 %v2376, %v2384
      %v2505 = vmax.f32 %v2377, %v2385
      %v2506 = vmax.f32 %v2378, %v2386
      %v2507 = vmax.f32 %v2379, %v2387
      %v2508 = vmax.f32 %v2380, %v2388
      %v2509 = vmax.f32 %v2389, %v2397
      %v2510 = vmax.f32 %v2390, %v2398
      %v2511 = vmax.f32 %v2391, %v2399
      %v2512 = vmax.f32 %v2392, %v2400
      %v2513 = vmax.f32 %v2393, %v2401
      %v2514 = vmax.f32 %v2394, %v2402
      %v2515 = vmax.f32 %v2395, %v2403
      %v2516 = vmax.f32 %v2396, %v2404
      %v2517 = vmax.f32 %v2405, %v2413
      %v2518 = vmax.f32 %v2406, %v2414
      %v2519 = vmax.f32 %v2407, %v2415
      %v2520 = vmax.f32 %v2408, %v2416
      %v2521 = vmax.f32 %v2409, %v2417
      %v2522 = vmax.f32 %v2410, %v2418
      %v2523 = vmax.f32 %v2411, %v2419
      %v2524 = vmax.f32 %v2412, %v2420
      %v2525 = vmax.f32 %v2421, %v2429
      %v2526 = vmax.f32 %v2422, %v2430
      %v2527 = vmax.f32 %v2423, %v2431
      %v2528 = vmax.f32 %v2424, %v2432
      %v2529 = vmax.f32 %v2425, %v2433
      %v2530 = vmax.f32 %v2426, %v2434
      %v2531 = vmax.f32 %v2427, %v2435
      %v2532 = vmax.f32 %v2428, %v2436
      %v2533 = vmax.f32 %v2437, %v2445
      %v2534 = vmax.f32 %v2438, %v2446
      %v2535 = vmax.f32 %v2439, %v2447
      %v2536 = vmax.f32 %v2440, %v2448
      %v2537 = vmax.f32 %v2441, %v2449
      %v2538 = vmax.f32 %v2442, %v2450
      %v2539 = vmax.f32 %v2443, %v2451
      %v2540 = vmax.f32 %v2444, %v2452
      %v2541 = vmax.f32 %v2453, %v2461
      %v2542 = vmax.f32 %v2454, %v2462
      %v2543 = vmax.f32 %v2455, %v2463
      %v2544 = vmax.f32 %v2456, %v2464
      %v2545 = vmax.f32 %v2457, %v2465
      %v2546 = vmax.f32 %v2458, %v2466
      %v2547 = vmax.f32 %v2459, %v2467
      %v2548 = vmax.f32 %v2460, %v2468
      %v2549 = vmax.f32 %v2469, %v2477
      %v2550 = vmax.f32 %v2470, %v2478
      %v2551 = vmax.f32 %v2471, %v2479
      %v2552 = vmax.f32 %v2472, %v2480
      %v2553 = vmax.f32 %v2473, %v2481
      %v2554 = vmax.f32 %v2474, %v2482
      %v2555 = vmax.f32 %v2475, %v2483
      %v2556 = vmax.f32 %v2476, %v2484
      %v2557 = vmax.f32 %v2485, %v2493
      %v2558 = vmax.f32 %v2486, %v2494
      %v2559 = vmax.f32 %v2487, %v2495
      %v2560 = vmax.f32 %v2488, %v2496
      %v2561 = vmax.f32 %v2489, %v2497
      %v2562 = vmax.f32 %v2490, %v2498
      %v2563 = vmax.f32 %v2491, %v2499
      %v2564 = vmax.f32 %v2492, %v2500
      %v2565 = vld [vmem:[%s2] sm:$0x1]
      %v2567 = vperm.slane %v2565, 0
      %v2568 = vrot.slane %v2567, 2
      %v2569 = vrot.slane %v2567, 4
      %v2570 = vrot.slane %v2567, 6
      %v2571 = vrot.slane %v2567, 1
      %v2572 = vrot.slane %v2568, 1
      %v2573 = vrot.slane %v2569, 1
      %v2574 = vrot.slane %v2570, 1
      %v2583 = vadd.f32 %v2501, %v2567
      %v2584 = vadd.f32 %v2502, %v2571
      %v2585 = vadd.f32 %v2503, %v2568
      %v2586 = vadd.f32 %v2504, %v2572
      %v2587 = vadd.f32 %v2505, %v2569
      %v2588 = vadd.f32 %v2506, %v2573
      %v2589 = vadd.f32 %v2507, %v2570
      %v2590 = vadd.f32 %v2508, %v2574
      %v2591 = vadd.f32 %v2509, %v2567
      %v2592 = vadd.f32 %v2510, %v2571
      %v2593 = vadd.f32 %v2511, %v2568
      %v2594 = vadd.f32 %v2512, %v2572
      %v2595 = vadd.f32 %v2513, %v2569
      %v2596 = vadd.f32 %v2514, %v2573
      %v2597 = vadd.f32 %v2515, %v2570
      %v2598 = vadd.f32 %v2516, %v2574
      %v2599 = vadd.f32 %v2517, %v2567
      %v2600 = vadd.f32 %v2518, %v2571
      %v2601 = vadd.f32 %v2519, %v2568
      %v2602 = vadd.f32 %v2520, %v2572
      %v2603 = vadd.f32 %v2521, %v2569
      %v2604 = vadd.f32 %v2522, %v2573
      %v2605 = vadd.f32 %v2523, %v2570
      %v2606 = vadd.f32 %v2524, %v2574
      %v2607 = vadd.f32 %v2525, %v2567
      %v2608 = vadd.f32 %v2526, %v2571
      %v2609 = vadd.f32 %v2527, %v2568
      %v2610 = vadd.f32 %v2528, %v2572
      %v2611 = vadd.f32 %v2529, %v2569
      %v2612 = vadd.f32 %v2530, %v2573
      %v2613 = vadd.f32 %v2531, %v2570
      %v2614 = vadd.f32 %v2532, %v2574
      %v2615 = vadd.f32 %v2533, %v2567
      %v2616 = vadd.f32 %v2534, %v2571
      %v2617 = vadd.f32 %v2535, %v2568
      %v2618 = vadd.f32 %v2536, %v2572
      %v2619 = vadd.f32 %v2537, %v2569
      %v2620 = vadd.f32 %v2538, %v2573
      %v2621 = vadd.f32 %v2539, %v2570
      %v2622 = vadd.f32 %v2540, %v2574
      %v2623 = vadd.f32 %v2541, %v2567
      %v2624 = vadd.f32 %v2542, %v2571
      %v2625 = vadd.f32 %v2543, %v2568
      %v2626 = vadd.f32 %v2544, %v2572
      %v2627 = vadd.f32 %v2545, %v2569
      %v2628 = vadd.f32 %v2546, %v2573
      %v2629 = vadd.f32 %v2547, %v2570
      %v2630 = vadd.f32 %v2548, %v2574
      %v2631 = vadd.f32 %v2549, %v2567
      %v2632 = vadd.f32 %v2550, %v2571
      %v2633 = vadd.f32 %v2551, %v2568
      %v2634 = vadd.f32 %v2552, %v2572
      %v2635 = vadd.f32 %v2553, %v2569
      %v2636 = vadd.f32 %v2554, %v2573
      %v2637 = vadd.f32 %v2555, %v2570
      %v2638 = vadd.f32 %v2556, %v2574
      %v2639 = vadd.f32 %v2557, %v2567
      %v2640 = vadd.f32 %v2558, %v2571
      %v2641 = vadd.f32 %v2559, %v2568
      %v2642 = vadd.f32 %v2560, %v2572
      %v2643 = vadd.f32 %v2561, %v2569
      %v2644 = vadd.f32 %v2562, %v2573
      %v2645 = vadd.f32 %v2563, %v2570
      %v2646 = vadd.f32 %v2564, %v2574
      %v2647 = vmax.f32 %v2583, 0.0
      %v2648 = vmax.f32 %v2584, 0.0
      %v2649 = vmax.f32 %v2585, 0.0
      %v2650 = vmax.f32 %v2586, 0.0
      %v2651 = vmax.f32 %v2587, 0.0
      %v2652 = vmax.f32 %v2588, 0.0
      %v2653 = vmax.f32 %v2589, 0.0
      %v2654 = vmax.f32 %v2590, 0.0
      %v2655 = vmax.f32 %v2591, 0.0
      %v2656 = vmax.f32 %v2592, 0.0
      %v2657 = vmax.f32 %v2593, 0.0
      %v2658 = vmax.f32 %v2594, 0.0
      %v2659 = vmax.f32 %v2595, 0.0
      %v2660 = vmax.f32 %v2596, 0.0
      %v2661 = vmax.f32 %v2597, 0.0
      %v2662 = vmax.f32 %v2598, 0.0
      %v2663 = vmax.f32 %v2599, 0.0
      %v2664 = vmax.f32 %v2600, 0.0
      %v2665 = vmax.f32 %v2601, 0.0
      %v2666 = vmax.f32 %v2602, 0.0
      %v2667 = vmax.f32 %v2603, 0.0
      %v2668 = vmax.f32 %v2604, 0.0
      %v2669 = vmax.f32 %v2605, 0.0
      %v2670 = vmax.f32 %v2606, 0.0
      %v2671 = vmax.f32 %v2607, 0.0
      %v2672 = vmax.f32 %v2608, 0.0
      %v2673 = vmax.f32 %v2609, 0.0
      %v2674 = vmax.f32 %v2610, 0.0
      %v2675 = vmax.f32 %v2611, 0.0
      %v2676 = vmax.f32 %v2612, 0.0
      %v2677 = vmax.f32 %v2613, 0.0
      %v2678 = vmax.f32 %v2614, 0.0
      %v2679 = vmax.f32 %v2615, 0.0
      %v2680 = vmax.f32 %v2616, 0.0
      %v2681 = vmax.f32 %v2617, 0.0
      %v2682 = vmax.f32 %v2618, 0.0
      %v2683 = vmax.f32 %v2619, 0.0
      %v2684 = vmax.f32 %v2620, 0.0
      %v2685 = vmax.f32 %v2621, 0.0
      %v2686 = vmax.f32 %v2622, 0.0
      %v2687 = vmax.f32 %v2623, 0.0
      %v2688 = vmax.f32 %v2624, 0.0
      %v2689 = vmax.f32 %v2625, 0.0
      %v2690 = vmax.f32 %v2626, 0.0
      %v2691 = vmax.f32 %v2627, 0.0
      %v2692 = vmax.f32 %v2628, 0.0
      %v2693 = vmax.f32 %v2629, 0.0
      %v2694 = vmax.f32 %v2630, 0.0
      %v2695 = vmax.f32 %v2631, 0.0
      %v2696 = vmax.f32 %v2632, 0.0
      %v2697 = vmax.f32 %v2633, 0.0
      %v2698 = vmax.f32 %v2634, 0.0
      %v2699 = vmax.f32 %v2635, 0.0
      %v2700 = vmax.f32 %v2636, 0.0
      %v2701 = vmax.f32 %v2637, 0.0
      %v2702 = vmax.f32 %v2638, 0.0
      %v2703 = vmax.f32 %v2639, 0.0
      %v2704 = vmax.f32 %v2640, 0.0
      %v2705 = vmax.f32 %v2641, 0.0
      %v2706 = vmax.f32 %v2642, 0.0
      %v2707 = vmax.f32 %v2643, 0.0
      %v2708 = vmax.f32 %v2644, 0.0
      %v2709 = vmax.f32 %v2645, 0.0
      %v2710 = vmax.f32 %v2646, 0.0
      %v2711 = vld [vmem:[%s3] sm:$0xff]
      %v2712 = vld [vmem:[%s4] sm:$0x1]
      %v2714 = vperm.slane %v2712, 0
      %v2780 = vperm.slane %v2647, 0
      %v2781 = vperm.slane %v2648, 0
      %v2782 = vperm.slane %v2649, 0
      %v2783 = vperm.slane %v2650, 0
      %v2784 = vperm.slane %v2651, 0
      %v2785 = vperm.slane %v2652, 0
      %v2786 = vperm.slane %v2653, 0
      %v2787 = vperm.slane %v2654, 0
      %v2788 = vperm.slane %v2655, 0
      %v2789 = vperm.slane %v2656, 0
      %v2790 = vperm.slane %v2657, 0
      %v2791 = vperm.slane %v2658, 0
      %v2792 = vperm.slane %v2659, 0
      %v2793 = vperm.slane %v2660, 0
      %v2794 = vperm.slane %v2661, 0
      %v2795 = vperm.slane %v2662, 0
      %v2796 = vperm.slane %v2663, 0
      %v2797 = vperm.slane %v2664, 0
      %v2798 = vperm.slane %v2665, 0
      %v2799 = vperm.slane %v2666, 0
      %v2800 = vperm.slane %v2667, 0
      %v2801 = vperm.slane %v2668, 0
      %v2802 = vperm.slane %v2669, 0
      %v2803 = vperm.slane %v2670, 0
      %v2804 = vperm.slane %v2671, 0
      %v2805 = vperm.slane %v2672, 0
      %v2806 = vperm.slane %v2673, 0
      %v2807 = vperm.slane %v2674, 0
      %v2808 = vperm.slane %v2675, 0
      %v2809 = vperm.slane %v2676, 0
      %v2810 = vperm.slane %v2677, 0
      %v2811 = vperm.slane %v2678, 0
      %v2812 = vperm.slane %v2679, 0
      %v2813 = vperm.slane %v2680, 0
      %v2814 = vperm.slane %v2681, 0
      %v2815 = vperm.slane %v2682, 0
      %v2816 = vperm.slane %v2683, 0
      %v2817 = vperm.slane %v2684, 0
      %v2818 = vperm.slane %v2685, 0
      %v2819 = vperm.slane %v2686, 0
      %v2820 = vperm.slane %v2687, 0
      %v2821 = vperm.slane %v2688, 0
      %v2822 = vperm.slane %v2689, 0
      %v2823 = vperm.slane %v2690, 0
      %v2824 = vperm.slane %v2691, 0
      %v2825 = vperm.slane %v2692, 0
      %v2826 = vperm.slane %v2693, 0
      %v2827 = vperm.slane %v2694, 0
      %v2828 = vperm.slane %v2695, 0
      %v2829 = vperm.slane %v2696, 0
      %v2830 = vperm.slane %v2697, 0
      %v2831 = vperm.slane %v2698, 0
      %v2832 = vperm.slane %v2699, 0
      %v2833 = vperm.slane %v2700, 0
      %v2834 = vperm.slane %v2701, 0
      %v2835 = vperm.slane %v2702, 0
      %v2836 = vperm.slane %v2703, 0
      %v2837 = vperm.slane %v2704, 0
      %v2838 = vperm.slane %v2705, 0
      %v2839 = vperm.slane %v2706, 0
      %v2840 = vperm.slane %v2707, 0
      %v2841 = vperm.slane %v2708, 0
      %v2842 = vperm.slane %v2709, 0
      %v2843 = vperm.slane %v2710, 0
      %vm2844 = vcmask 1041409
      %v2845 = vsel %vm2844, %v2781, %v2780
      %vm2846 = vcmask 1042434
      %v2847 = vsel %vm2846, %v2782, %v2845
      %vm2848 = vcmask 1043459
      %v2849 = vsel %vm2848, %v2783, %v2847
      %vm2850 = vcmask 1044484
      %v2851 = vsel %vm2850, %v2784, %v2849
      %vm2852 = vcmask 1045509
      %v2853 = vsel %vm2852, %v2785, %v2851
      %vm2854 = vcmask 1046534
      %v2855 = vsel %vm2854, %v2786, %v2853
      %vm2856 = vcmask 1047559
      %v2857 = vsel %vm2856, %v2787, %v2855
      %v2858 = vsel %vm2844, %v2789, %v2788
      %v2859 = vsel %vm2846, %v2790, %v2858
      %v2860 = vsel %vm2848, %v2791, %v2859
      %v2861 = vsel %vm2850, %v2792, %v2860
      %v2862 = vsel %vm2852, %v2793, %v2861
      %v2863 = vsel %vm2854, %v2794, %v2862
      %v2864 = vsel %vm2856, %v2795, %v2863
      %v2865 = vsel %vm2844, %v2797, %v2796
      %v2866 = vsel %vm2846, %v2798, %v2865
      %v2867 = vsel %vm2848, %v2799, %v2866
      %v2868 = vsel %vm2850, %v2800, %v2867
      %v2869 = vsel %vm2852, %v2801, %v2868
      %v2870 = vsel %vm2854, %v2802, %v2869
      %v2871 = vsel %vm2856, %v2803, %v2870
      %v2872 = vsel %vm2844, %v2805, %v2804
      %v2873 = vsel %vm2846, %v2806, %v2872
      %v2874 = vsel %vm2848, %v2807, %v2873
      %v2875 = vsel %vm2850, %v2808, %v2874
      %v2876 = vsel %vm2852, %v2809, %v2875
      %v2877 = vsel %vm2854, %v2810, %v2876
      %v2878 = vsel %vm2856, %v2811, %v2877
      %v2879 = vsel %vm2844, %v2813, %v2812
      %v2880 = vsel %vm2846, %v2814, %v2879
      %v2881 = vsel %vm2848, %v2815, %v2880
      %v2882 = vsel %vm2850, %v2816, %v2881
      %v2883 = vsel %vm2852, %v2817, %v2882
      %v2884 = vsel %vm2854, %v2818, %v2883
      %v2885 = vsel %vm2856, %v2819, %v2884
      %v2886 = vsel %vm2844, %v2821, %v2820
      %v2887 = vsel %vm2846, %v2822, %v2886
      %v2888 = vsel %vm2848, %v2823, %v2887
      %v2889 = vsel %vm2850, %v2824, %v2888
      %v2890 = vsel %vm2852, %v2825, %v2889
      %v2891 = vsel %vm2854, %v2826, %v2890
      %v2892 = vsel %vm2856, %v2827, %v2891
      %v2893 = vsel %vm2844, %v2829, %v2828
      %v2894 = vsel %vm2846, %v2830, %v2893
      %v2895 = vsel %vm2848, %v2831, %v2894
      %v2896 = vsel %vm2850, %v2832, %v2895
      %v2897 = vsel %vm2852, %v2833, %v2896
      %v2898 = vsel %vm2854, %v2834, %v2897
      %v2899 = vsel %vm2856, %v2835, %v2898
      %v2900 = vsel %vm2844, %v2837, %v2836
      %v2901 = vsel %vm2846, %v2838, %v2900
      %v2902 = vsel %vm2848, %v2839, %v2901
      %v2903 = vsel %vm2850, %v2840, %v2902
      %v2904 = vsel %vm2852, %v2841, %v2903
      %v2905 = vsel %vm2854, %v2842, %v2904
      %v2906 = vsel %vm2856, %v2843, %v2905
      %vm2907 = vcmask 64512
      %v2908 = vsel %vm2907, %v2857, 0
      %v2910 = vsel %vm2907, %v2864, 0
      %v2912 = vsel %vm2907, %v2871, 0
      %v2914 = vsel %vm2907, %v2878, 0
      %v2916 = vsel %vm2907, %v2885, 0
      %v2918 = vsel %vm2907, %v2892, 0
      %v2920 = vsel %vm2907, %v2899, 0
      %v2922 = vsel %vm2907, %v2906, 0
      %2924 = vmatpush.msra.mxu0 0.0
      %2925 = vmatpush.msra.mxu0 0.0
      %2926 = vmatpush.msra.mxu0 0.0
      %2927 = vmatpush.msra.mxu0 0.0
      %2928 = vmatpush.msra.mxu0 0.0
      %2929 = vmatpush.msra.mxu0 0.0
      %2930 = vmatpush.msra.mxu0 0.0
      %2931 = vmatpush.msra.mxu0 0.0
      %2932 = vmatpush.msra.mxu0 0.0
      %2933 = vmatpush.msra.mxu0 0.0
      %2934 = vmatpush.msra.mxu0 0.0
      %2935 = vmatpush.msra.mxu0 0.0
      %2936 = vmatpush.msra.mxu0 0.0
      %2937 = vmatpush.msra.mxu0 0.0
      %2938 = vmatpush.msra.mxu0 0.0
      %2939 = vmatpush.msra.mxu0 %v2711
      %2940 = vmatmul.f32.gmra.mxu0 %v2908
      %v2941 = vpop.f32.mrf.mxu0
      %v2942 = vadd.f32 %v2714, %v2941
      %2943 = vmatmul.f32.gmra.mxu0 %v2910
      %v2944 = vpop.f32.mrf.mxu0
      %v2945 = vadd.f32 %v2714, %v2944
      %2946 = vmatmul.f32.gmra.mxu0 %v2912
      %v2947 = vpop.f32.mrf.mxu0
      %v2948 = vadd.f32 %v2714, %v2947
      %2949 = vmatmul.f32.gmra.mxu0 %v2914
      %v2950 = vpop.f32.mrf.mxu0
      %v2951 = vadd.f32 %v2714, %v2950
      %2952 = vmatmul.f32.gmra.mxu0 %v2916
      %v2953 = vpop.f32.mrf.mxu0
      %v2954 = vadd.f32 %v2714, %v2953
      %2955 = vmatmul.f32.gmra.mxu0 %v2918
      %v2956 = vpop.f32.mrf.mxu0
      %v2957 = vadd.f32 %v2714, %v2956
      %2958 = vmatmul.f32.gmra.mxu0 %v2920
      %v2959 = vpop.f32.mrf.mxu0
      %v2960 = vadd.f32 %v2714, %v2959
      %2961 = vmatmul.f32.gmra.mxu0 %v2922
      %v2962 = vpop.f32.mrf.mxu0
      %v2963 = vadd.f32 %v2714, %v2962
      %2964 = vdwg.mxu0
      %v2965 = vtanh.pop %v2942
      %v2966 = vtanh.pop %v2945
      %v2967 = vtanh.pop %v2948
      %v2968 = vtanh.pop %v2951
      %v2969 = vtanh.pop %v2954
      %v2970 = vtanh.pop %v2957
      %v2971 = vtanh.pop %v2960
      %v2972 = vtanh.pop %v2963
      %vm2973 = vcmask 261120
      %2974 = vst.msk [vmem:[%s224] sm:$0xff] %vm2973, %v2965
      %2975 = vst.msk [vmem:[%s224 + $0x8] sm:$0xff] %vm2973, %v2966
      %2976 = vst.msk [vmem:[%s224 + $0x10] sm:$0xff] %vm2973, %v2967
      %2977 = vst.msk [vmem:[%s224 + $0x18] sm:$0xff] %vm2973, %v2968
      %2978 = vst.msk [vmem:[%s224 + $0x20] sm:$0xff] %vm2973, %v2969
      %2979 = vst.msk [vmem:[%s224 + $0x28] sm:$0xff] %vm2973, %v2970
      %2980 = vst.msk [vmem:[%s224 + $0x30] sm:$0xff] %vm2973, %v2971
      %2981 = vst.msk [vmem:[%s224 + $0x38] sm:$0xff] %vm2973, %v2972
      %p2982 = scmp.lt.s32.totalorder %s16, 1
      %s2983 = scalar_select %p2982, %s16, 1
      %s2984 = smul.addr %s2983, 8
      %s2985 = smul.addr %s2984, 8
      %s2986 = scalar_lea.vmem %s5, %s2985
      // Predicated region
      $region41: #{_lambda_.2} parent=39 // pred_check
        %p2987 = pneg %p144
      $region42: #{_lambda_.2} parent=39 // pred_check_branch
        %2989 = sbr.rel (%p2987) target = $region44
      $region43: #{_lambda_.2} parent=39 // pred_region
        _
      $region44: #{_lambda_.2} parent=39 // pred_fallthru
        _
    $region40: #{_lambda_.2} parent=5 // pred_fallthru
      _
    %p2990 = scmp.le.s32.totalorder 2, %s11
    // Predicated region
    $region45: #{_lambda_.2} parent=5 // pred_check
      %p2991 = pneg %p2990
    $region46: #{_lambda_.2} parent=5 // pred_check_branch
      %2993 = sbr.rel (%p2991) target = $region48
    $region47: #{_lambda_.2} parent=5 // pred_region
      %s2994 = ssub.s32 %s11, 2
      // Predicated region
      $region49: #{_lambda_.2} parent=47 // pred_check
        %p2995 = pneg %p150
      $region50: #{_lambda_.2} parent=47 // pred_check_branch
        %2997 = sbr.rel (%p2995) target = $region52
      $region51: #{_lambda_.2} parent=47 // pred_region
        %p2998 = scmp.lt.s32.totalorder %s17, 1
        %s2999 = scalar_select %p2998, %s17, 1
        %s3000 = smul.addr %s2999, 8
        %s3001 = smul.addr %s3000, 8
        %s3002 = scalar_lea.vmem %s5, %s3001
      $region52: #{_lambda_.2} parent=47 // pred_fallthru
        _
    $region48: #{_lambda_.2} parent=5 // pred_fallthru
      _
  $region6: #{_lambda_.2} parent=0 // loop_footer
    %s15 = sadd.s32 1, %s11
  $region7: #{_lambda_.2} parent=0 // loop_footer_branch
    %10 = sbr.rel target = $region3
  $region8: #{_lambda_.2} parent=0 // loop_exit
    _

</llo_original>
